<compile_context>
chip_gen: v5e
topology: v5e:2x2
jax: 0.10.0
libtpu: 0.0.40
codegen_flags: <defaults>
</compile_context>

<pallas_src>
import jax
import jax.numpy as jnp
import numpy as np
from jax.experimental import pallas as pl
from jax.experimental.pallas import tpu as pltpu

BN_EPS = 1e-5
LANE = 128


def _round_up(x, m):
    return (x + m - 1) // m * m


def _tpu_budget():
    """Generation-aware scoped-VMEM limit and max row tile.
    v5e/v6e: 128 MiB physical VMEM -> larger tiles / budget.
    v7x:      64 MiB physical VMEM -> tighter budget, smaller row tiles."""
    phys = None
    try:
        phys = getattr(pltpu.get_tpu_info(), "vmem_capacity_bytes", None)
    except Exception:
        phys = None
    if phys is None:
        phys = 64 * 1024 * 1024                  # conservative (v7x-sized) default
    if phys >= 128 * 1024 * 1024:                # v5e / v6e
        return 96 * 1024 * 1024, 1024
    return 48 * 1024 * 1024, 512                 # v7x


VMEM_LIMIT_BYTES, MAX_ROW_TILE = _tpu_budget()


def _row_tile(rows):
    return min(MAX_ROW_TILE, _round_up(rows, 8))


def _cparams(*sem):
    return pltpu.CompilerParams(dimension_semantics=tuple(sem),
                                vmem_limit_bytes=VMEM_LIMIT_BYTES)


# ----------------------------------------------------------------------------
# Kernels
# ----------------------------------------------------------------------------
def _conv1x1_stats_kernel(x_ref, w_ref, y_ref, s_ref):
    # bf16 MXU matmul with f32 accumulation + per-tile BN partial sums
    # (row 0 = sum, row 1 = sum of squares, rows 2..7 zero -> 8-sublane tile).
    y = jnp.dot(x_ref[...], w_ref[...], preferred_element_type=jnp.float32)
    y_ref[...] = y.astype(y_ref.dtype)
    c = y.shape[-1]
    ssum = jnp.sum(y, axis=0, keepdims=True)
    ssq = jnp.sum(y * y, axis=0, keepdims=True)
    s_ref[...] = jnp.concatenate(
        [ssum, ssq, jnp.zeros((6, c), jnp.float32)], axis=0).reshape(s_ref.shape)


def _bnrelu_conv3x3_stats_kernel(y_ref, sc_ref, sh_ref, w_ref, o_ref, s_ref):
    # One image per grid step:
    #   prologue : BN affine + ReLU of the *previous* stage (fused, no HBM pass)
    #   pad      : zero border built in VMEM (no materialized HBM pad)
    #   conv     : 9 accumulated bf16 MXU matmuls, M = H*W rows per matmul
    #   epilogue : raw conv output (pre-BN) + 8-sublane BN partial-stat tile
    _, H, W, C = o_ref.shape
    y = y_ref[...].reshape(H, W, C).astype(jnp.float32)
    sc = sc_ref[...].reshape(1, 1, C)
    sh = sh_ref[...].reshape(1, 1, C)
    a = jnp.maximum(y * sc + sh, 0.0).astype(jnp.bfloat16)

    zc = jnp.zeros((H, 1, C), jnp.bfloat16)
    zr = jnp.zeros((1, W + 2, C), jnp.bfloat16)
    a_pad = jnp.concatenate(
        [zr, jnp.concatenate([zc, a, zc], axis=1), zr], axis=0)   # (H+2, W+2, C)

    acc = jnp.zeros((H * W, C), jnp.float32)
    for dy in range(3):
        for dx in range(3):
            # NOTE: the dx shift slices the sublane axis; the relayout copy is
            # VPU/VST filler hidden under the MXU-filling (H*W, C)@(C, C) dots.
            win = a_pad[dy:dy + H, dx:dx + W, :].reshape(H * W, C)
            acc = acc + jnp.dot(win, w_ref[dy, dx],
                                preferred_element_type=jnp.float32)

    o_ref[...] = acc.reshape(1, H, W, C).astype(o_ref.dtype)
    ssum = jnp.sum(acc, axis=0, keepdims=True)
    ssq = jnp.sum(acc * acc, axis=0, keepdims=True)
    s_ref[...] = jnp.concatenate(
        [ssum, ssq, jnp.zeros((6, C), jnp.float32)], axis=0).reshape(s_ref.shape)


def _bn_res_relu_kernel(y_ref, sc_ref, sh_ref, r_ref, o_ref):
    # y*scale + shift + residual -> ReLU (residual read as bf16, f32 math).
    y = y_ref[...].astype(jnp.float32)
    o = y * sc_ref[...] + sh_ref[...] + r_ref[...].astype(jnp.float32)
    o_ref[...] = jnp.maximum(o, 0.0).astype(o_ref.dtype)


# ----------------------------------------------------------------------------
# pallas_call wrappers
# ----------------------------------------------------------------------------
def conv1x1_stats(x2d, w2d):
    """(R,K)bf16 @ (K,C)bf16 -> y (R,C)bf16, summed BN stats (8,C)f32."""
    R, K = x2d.shape
    C = w2d.shape[1]
    tr = _row_tile(R)
    r_pad = _round_up(R, tr)
    if r_pad != R:                         # cdiv grid via zero-row padding
        x2d = jnp.pad(x2d, ((0, r_pad - R), (0, 0)))
    T = r_pad // tr
    y, s = pl.pallas_call(
        _conv1x1_stats_kernel,
        out_shape=(jax.ShapeDtypeStruct((r_pad, C), jnp.bfloat16),
                   jax.ShapeDtypeStruct((T, 8, C), jnp.float32)),
        grid=(T,),
        in_specs=[pl.BlockSpec((tr, K), lambda i: (i, 0)),
                  pl.BlockSpec((K, C), lambda i: (0, 0))],
        out_specs=(pl.BlockSpec((tr, C), lambda i: (i, 0)),
                   pl.BlockSpec((1, 8, C), lambda i: (i, 0, 0))),
        compiler_params=_cparams("parallel"),
    )(x2d, w2d)
    if r_pad != R:
        y = y[:R]
    return y, jnp.sum(s, axis=0)


def bnrelu_conv3x3_stats(y_prev, scale, shift, wk):
    """Fused BN affine + ReLU (previous stage) -> 3x3 conv (pad=1, stride=1).
    y_prev: (N,H,W,C)bf16 raw conv output of the previous stage.
    Returns raw conv output (N,H,W,C)bf16 and summed BN stats (8,C)f32."""
    N, H, W, C = y_prev.shape
    # TODO(synk): for very large images, tile H (with a 2-row halo) so the
    #             per-step f32 accumulator stays ~256-512 rows (v7x guidance).
    # TODO(synk): on v7x with large C, single-buffer the constant weight block
    #             (pipeline_mode=pl.Buffered(1)) to reclaim VMEM headroom.
    y, s = pl.pallas_call(
        _bnrelu_conv3x3_stats_kernel,
        out_shape=(jax.ShapeDtypeStruct((N, H, W, C), jnp.bfloat16),
                   jax.ShapeDtypeStruct((N, 8, C), jnp.float32)),
        grid=(N,),
        in_specs=[pl.BlockSpec((1, H, W, C), lambda n: (n, 0, 0, 0)),
                  pl.BlockSpec((1, C), lambda n: (0, 0)),
                  pl.BlockSpec((1, C), lambda n: (0, 0)),
                  pl.BlockSpec((3, 3, C, C), lambda n: (0, 0, 0, 0))],
        out_specs=(pl.BlockSpec((1, H, W, C), lambda n: (n, 0, 0, 0)),
                   pl.BlockSpec((1, 8, C), lambda n: (n, 0, 0))),
        compiler_params=_cparams("parallel"),
    )(y_prev, scale, shift, wk)
    return y, jnp.sum(s, axis=0)


def bn_res_relu(y2d, scale, shift, res2d, out_dtype=jnp.float32):
    """Row-tiled y*scale + shift + residual -> ReLU."""
    R, C = y2d.shape
    tr = _row_tile(R)
    r_pad = _round_up(R, tr)
    if r_pad != R:
        y2d = jnp.pad(y2d, ((0, r_pad - R), (0, 0)))
        res2d = jnp.pad(res2d, ((0, r_pad - R), (0, 0)))
    T = r_pad // tr
    row_spec = pl.BlockSpec((tr, C), lambda i: (i, 0))
    vec_spec = pl.BlockSpec((1, C), lambda i: (0, 0))
    out = pl.pallas_call(
        _bn_res_relu_kernel,
        out_shape=jax.ShapeDtypeStruct((r_pad, C), out_dtype),
        grid=(T,),
        in_specs=[row_spec, vec_spec, vec_spec, row_spec],
        out_specs=row_spec,
        compiler_params=_cparams("parallel"),
    )(y2d, scale, shift, res2d)
    if r_pad != R:
        out = out[:R]
    return out


# ----------------------------------------------------------------------------
# Glue: padding, weight layout, BN coefficient folding
# ----------------------------------------------------------------------------
def _pad_channels(x, c_to):
    c = x.shape[-1]
    if c == c_to:
        return x
    pad = [(0, 0)] * (x.ndim - 1) + [(0, c_to - c)]
    return jnp.pad(x, pad)


def _prep_w1x1(w, cin_p, cout_p):
    # (C_out, C_in, 1, 1) -> (C_in_p, C_out_p) bf16
    cout, cin = w.shape[0], w.shape[1]
    w2d = jnp.transpose(w[:, :, 0, 0], (1, 0))
    w2d = jnp.pad(w2d, ((0, cin_p - cin), (0, cout_p - cout)))
    return w2d.astype(jnp.bfloat16)


def _prep_w3x3(w, cin_p, cout_p):
    # (C_out, C_in, 3, 3) -> (3, 3, C_in_p, C_out_p) bf16
    cout, cin = w.shape[0], w.shape[1]
    wk = jnp.transpose(w, (2, 3, 1, 0))
    wk = jnp.pad(wk, ((0, 0), (0, 0), (0, cin_p - cin), (0, cout_p - cout)))
    return wk.astype(jnp.bfloat16)


def _bn_coeffs(stat8, n_rows, gamma_p, beta_p, eps=BN_EPS):
    # stat8: (8, C); row 0 = sum(y), row 1 = sum(y^2) over all N*H*W rows.
    mean = stat8[0] / n_rows
    var = jnp.maximum(stat8[1] / n_rows - mean * mean, 0.0)   # clamp cancellation
    scale = gamma_p * jax.lax.rsqrt(var + eps)
    shift = beta_p - mean * scale
    return (scale.reshape(1, -1).astype(jnp.float32),
            shift.reshape(1, -1).astype(jnp.float32))


@jax.jit
def bottleneck_forward(x_nchw, params):
    """Forward pass of Bottleneck (stride=1, downsample=None, non-octconv)."""
    N, Cin, H, W = x_nchw.shape
    planes = params["w1"].shape[0]
    # Identity residual requires inplanes == planes (no downsample).
    assert Cin == planes, "identity residual needs inplanes == planes"
    cin_p = _round_up(Cin, LANE)
    cp = _round_up(planes, LANE)
    R = N * H * W

    x_nhwc = jnp.transpose(x_nchw, (0, 2, 3, 1))                # NCHW -> NHWC
    x_p = _pad_channels(x_nhwc, cin_p)                          # lane-dense channels
    x2d_bf16 = x_p.reshape(R, cin_p).astype(jnp.bfloat16)       # also the residual

    g1 = _pad_channels(params["g1"].astype(jnp.float32), cp)
    b1 = _pad_channels(params["b1"].astype(jnp.float32), cp)
    g2 = _pad_channels(params["g2"].astype(jnp.float32), cp)
    b2 = _pad_channels(params["b2"].astype(jnp.float32), cp)
    g3 = _pad_channels(params["g3"].astype(jnp.float32), cp)
    b3 = _pad_channels(params["b3"].astype(jnp.float32), cp)

    # --- stage 1: conv1 (1x1) + bn1 batch stats ------------------------------
    w1 = _prep_w1x1(params["w1"], cin_p, cp)
    y1, s1 = conv1x1_stats(x2d_bf16, w1)
    sc1, sh1 = _bn_coeffs(s1, R, g1, b1)

    # --- stage 2: fused bn1+relu -> conv2 (3x3, pad=1) + bn2 stats ------------
    w2 = _prep_w3x3(params["w2"], cp, cp)
    y2, s2 = bnrelu_conv3x3_stats(y1.reshape(N, H, W, cp), sc1, sh1, w2)
    sc2, sh2 = _bn_coeffs(s2, R, g2, b2)

    # --- stage 3: fused bn2+relu -> conv3 (3x3, pad=1) + bn3 stats ------------
    w3 = _prep_w3x3(params["w3"], cp, cp)
    y3, s3 = bnrelu_conv3x3_stats(y2, sc2, sh2, w3)
    sc3, sh3 = _bn_coeffs(s3, R, g3, b3)

    # --- final: bn3 affine + identity residual + relu -------------------------
    out2d = bn_res_relu(y3.reshape(R, cp), sc3, sh3, x2d_bf16,
                        out_dtype=jnp.float32)
    out = out2d.reshape(N, H, W, cp)[..., :planes]
    return jnp.transpose(out, (0, 3, 1, 2))                     # back to NCHW


# ----------------------------------------------------------------------------
# Pure-JAX reference (XLA f32 convs), silent correctness check
# ----------------------------------------------------------------------------
def ref_forward(x_nchw, p):
    def conv(x, w, pad):
        return jax.lax.conv_general_dilated(
            x, w, window_strides=(1, 1), padding=pad,
            dimension_numbers=("NCHW", "OIHW", "NCHW"),
            precision=jax.lax.Precision.HIGHEST)

    def bn(y, gamma, beta):
        mean = jnp.mean(y, axis=(0, 2, 3), keepdims=True)
        var = jnp.mean(y * y, axis=(0, 2, 3), keepdims=True) - mean * mean
        g = gamma.reshape(1, -1, 1, 1)
        b = beta.reshape(1, -1, 1, 1)
        return g * (y - mean) * jax.lax.rsqrt(var + BN_EPS) + b

    out = jax.nn.relu(bn(conv(x_nchw, p["w1"], [(0, 0), (0, 0)]), p["g1"], p["b1"]))
    out = jax.nn.relu(bn(conv(out, p["w2"], [(1, 1), (1, 1)]), p["g2"], p["b2"]))
    out = bn(conv(out, p["w3"], [(1, 1), (1, 1)]), p["g3"], p["b3"])
    out = out + x_nchw
    return jax.nn.relu(out)


# ----------------------------------------------------------------------------
if __name__ == "__main__":
    key = jax.random.PRNGKey(0)
    keys = jax.random.split(key, 11)

    # Small shapes: inplanes == planes so the identity residual add is valid
    # (conv3 of the plain branch emits `planes` channels, downsample=None).
    N, Cin, H, W = 2, 8, 16, 16
    planes = 8

    x = jax.random.normal(keys[0], (N, Cin, H, W), jnp.float32)

    params = {
        "w1": jax.random.normal(keys[1], (planes, Cin, 1, 1), jnp.float32)
              * (1.0 / np.sqrt(Cin)),
        "w2": jax.random.normal(keys[2], (planes, planes, 3, 3), jnp.float32)
              * (1.0 / np.sqrt(9 * planes)),
        "w3": jax.random.normal(keys[3], (planes, planes, 3, 3), jnp.float32)
              * (1.0 / np.sqrt(9 * planes)),
        "g1": 1.0 + 0.1 * jax.random.normal(keys[4], (planes,), jnp.float32),
        "b1": 0.05 * jax.random.normal(keys[5], (planes,), jnp.float32),
        "g2": 1.0 + 0.1 * jax.random.normal(keys[6], (planes,), jnp.float32),
        "b2": 0.05 * jax.random.normal(keys[7], (planes,), jnp.float32),
        "g3": 1.0 + 0.1 * jax.random.normal(keys[8], (planes,), jnp.float32),
        "b3": 0.05 * jax.random.normal(keys[9], (planes,), jnp.float32),
    }

    out = bottleneck_forward(x, params)
    out = jax.block_until_ready(out)

    # Reference is pure f32; the kernel path feeds bf16 to the MXU (per perf
    # guidance), so use a tolerance that absorbs the bf16 rounding of 3 stages.
    ref = ref_forward(x, params)
    np.testing.assert_allclose(np.asarray(out), np.asarray(ref),
                               rtol=1e-1, atol=1.5e-1)

    print("KERNEL_OK")
</pallas_src>

<mosaic_0001>
module attributes {stable_mosaic.version = 11 : i64} {
  func.func @_conv1x1_stats_kernel(%arg0: i32, %arg1: memref<512x128xbf16, #tpu.memory_space<vmem>>, %arg2: memref<128x128xbf16, #tpu.memory_space<vmem>>, %arg3: memref<512x128xbf16, #tpu.memory_space<vmem>>, %arg4: memref<1x8x128xf32, #tpu.memory_space<vmem>>) attributes {dimension_semantics = [#tpu.dimension_semantics<parallel>], iteration_bounds = array<i64: 1>, scalar_prefetch = 0 : i64, scratch_operands = 0 : i64, tpu.core_type = #tpu.core_type<tc>, window_params = [{transform_indices = @transform_0, window_bounds = array<i64: 512, 128>}, {pipeline_mode = #tpu.pipeline_mode<synchronous>, transform_indices = @transform_1, window_bounds = array<i64: 128, 128>}, {transform_indices = @transform_2, window_bounds = array<i64: 512, 128>}, {transform_indices = @transform_3, window_bounds = array<i64: 1, 8, 128>}]} {
    %c0 = arith.constant 0 : index
    %c0_0 = arith.constant 0 : index
    %0 = vector.load %arg1[%c0, %c0_0] : memref<512x128xbf16, #tpu.memory_space<vmem>>, vector<512x128xbf16>
    %c0_1 = arith.constant 0 : index
    %c0_2 = arith.constant 0 : index
    %1 = vector.load %arg2[%c0_1, %c0_2] : memref<128x128xbf16, #tpu.memory_space<vmem>>, vector<128x128xbf16>
    %cst = arith.constant dense<0.000000e+00> : vector<512x128xf32>
    %2 = tpu.matmul %0, %1, %cst {dimension_numbers = #tpu.dot_dimension_numbers<[1], [0], [0], [1], [0, 0, 1, 1], [], []>} : vector<512x128xbf16>, vector<128x128xbf16>, vector<512x128xf32> -> vector<512x128xf32>
    %3 = arith.truncf %2 : vector<512x128xf32> to vector<512x128xbf16>
    %c0_3 = arith.constant 0 : index
    %c0_4 = arith.constant 0 : index
    %4 = vector.load %arg3[%c0_3, %c0_4] : memref<512x128xbf16, #tpu.memory_space<vmem>>, vector<512x128xbf16>
    tpu.vector_store %arg3[%c0_3, %c0_4], %3 {strides = array<i32>} : memref<512x128xbf16, #tpu.memory_space<vmem>>, vector<512x128xbf16>,
    %cst_5 = arith.constant dense<0.000000e+00> : vector<128xf32>
    %5 = vector.multi_reduction <add>, %2, %cst_5 [0] : vector<512x128xf32> to vector<128xf32>
    %6 = vector.shape_cast %5 : vector<128xf32> to vector<1x128xf32>
    %7 = arith.mulf %2, %2 : vector<512x128xf32>
    %cst_6 = arith.constant dense<0.000000e+00> : vector<128xf32>
    %8 = vector.multi_reduction <add>, %7, %cst_6 [0] : vector<512x128xf32> to vector<128xf32>
    %9 = vector.shape_cast %8 : vector<128xf32> to vector<1x128xf32>
    %cst_7 = arith.constant 0.000000e+00 : f32
    %10 = vector.broadcast %cst_7 : f32 to vector<6x128xf32>
    %11 = tpu.concatenate %6, %9, %10 in 0 : vector<1x128xf32>, vector<1x128xf32>, vector<6x128xf32> -> vector<8x128xf32>
    %12 = vector.shape_cast %11 : vector<8x128xf32> to vector<1x8x128xf32>
    %c0_8 = arith.constant 0 : index
    %c0_9 = arith.constant 0 : index
    %c0_10 = arith.constant 0 : index
    %13 = vector.load %arg4[%c0_8, %c0_9, %c0_10] : memref<1x8x128xf32, #tpu.memory_space<vmem>>, vector<1x8x128xf32>
    tpu.vector_store %arg4[%c0_8, %c0_9, %c0_10], %12 {strides = array<i32>} : memref<1x8x128xf32, #tpu.memory_space<vmem>>, vector<1x8x128xf32>,
    return
  }
  func.func @transform_0(%arg0: i32) -> (i32, i32) {
    %c0_i32 = arith.constant 0 : i32
    %c0_i32_0 = arith.constant 0 : i32
    return %arg0, %c0_i32 : i32, i32
  }
  func.func @transform_1(%arg0: i32) -> (i32, i32) {
    %c0_i32 = arith.constant 0 : i32
    %c0_i32_0 = arith.constant 0 : i32
    %c0_i32_1 = arith.constant 0 : i32
    return %c0_i32, %c0_i32_0 : i32, i32
  }
  func.func @transform_2(%arg0: i32) -> (i32, i32) {
    %c0_i32 = arith.constant 0 : i32
    %c0_i32_0 = arith.constant 0 : i32
    return %arg0, %c0_i32 : i32, i32
  }
  func.func @transform_3(%arg0: i32) -> (i32, i32, i32) {
    %c0_i32 = arith.constant 0 : i32
    %c0_i32_0 = arith.constant 0 : i32
    %c0_i32_1 = arith.constant 0 : i32
    return %arg0, %c0_i32, %c0_i32_0 : i32, i32, i32
  }
}

module attributes {stable_mosaic.version = 11 : i64} {
  func.func @_bnrelu_conv3x3_stats_kernel(%arg0: i32, %arg1: memref<1x16x16x128xbf16, #tpu.memory_space<vmem>>, %arg2: memref<1x128xf32, #tpu.memory_space<vmem>>, %arg3: memref<1x128xf32, #tpu.memory_space<vmem>>, %arg4: memref<3x3x128x128xbf16, #tpu.memory_space<vmem>>, %arg5: memref<1x16x16x128xbf16, #tpu.memory_space<vmem>>, %arg6: memref<1x8x128xf32, #tpu.memory_space<vmem>>) attributes {dimension_semantics = [#tpu.dimension_semantics<parallel>], iteration_bounds = array<i64: 2>, scalar_prefetch = 0 : i64, scratch_operands = 0 : i64, tpu.core_type = #tpu.core_type<tc>, window_params = [{transform_indices = @transform_0, window_bounds = array<i64: 1, 16, 16, 128>}, {pipeline_mode = #tpu.pipeline_mode<synchronous>, transform_indices = @transform_1, window_bounds = array<i64: 1, 128>}, {pipeline_mode = #tpu.pipeline_mode<synchronous>, transform_indices = @transform_2, window_bounds = array<i64: 1, 128>}, {pipeline_mode = #tpu.pipeline_mode<synchronous>, transform_indices = @transform_3, window_bounds = array<i64: 3, 3, 128, 128>}, {transform_indices = @transform_4, window_bounds = array<i64: 1, 16, 16, 128>}, {transform_indices = @transform_5, window_bounds = array<i64: 1, 8, 128>}]} {
    %c0 = arith.constant 0 : index
    %c0_0 = arith.constant 0 : index
    %c0_1 = arith.constant 0 : index
    %c0_2 = arith.constant 0 : index
    %0 = vector.load %arg1[%c0, %c0_0, %c0_1, %c0_2] : memref<1x16x16x128xbf16, #tpu.memory_space<vmem>>, vector<1x16x16x128xbf16>
    %1 = vector.shape_cast %0 : vector<1x16x16x128xbf16> to vector<16x16x128xbf16>
    %2 = arith.extf %1 : vector<16x16x128xbf16> to vector<16x16x128xf32>
    %c0_3 = arith.constant 0 : index
    %c0_4 = arith.constant 0 : index
    %3 = vector.load %arg2[%c0_3, %c0_4] : memref<1x128xf32, #tpu.memory_space<vmem>>, vector<1x128xf32>
    %4 = vector.shape_cast %3 : vector<1x128xf32> to vector<1x1x128xf32>
    %c0_5 = arith.constant 0 : index
    %c0_6 = arith.constant 0 : index
    %5 = vector.load %arg3[%c0_5, %c0_6] : memref<1x128xf32, #tpu.memory_space<vmem>>, vector<1x128xf32>
    %6 = vector.shape_cast %5 : vector<1x128xf32> to vector<1x1x128xf32>
    %7 = vector.broadcast %4 : vector<1x1x128xf32> to vector<16x16x128xf32>
    %8 = arith.mulf %2, %7 : vector<16x16x128xf32>
    %9 = vector.broadcast %6 : vector<1x1x128xf32> to vector<16x16x128xf32>
    %10 = arith.addf %8, %9 : vector<16x16x128xf32>
    %cst = arith.constant 0.000000e+00 : f32
    %11 = vector.broadcast %cst : f32 to vector<16x16x128xf32>
    %12 = arith.maximumf %10, %11 : vector<16x16x128xf32>
    %13 = arith.truncf %12 : vector<16x16x128xf32> to vector<16x16x128xbf16>
    %cst_7 = arith.constant 0.000000e+00 : bf16
    %14 = vector.broadcast %cst_7 : bf16 to vector<16x1x128xbf16>
    %cst_8 = arith.constant 0.000000e+00 : bf16
    %15 = vector.broadcast %cst_8 : bf16 to vector<1x18x128xbf16>
    %16 = tpu.concatenate %14, %13, %14 in 1 : vector<16x1x128xbf16>, vector<16x16x128xbf16>, vector<16x1x128xbf16> -> vector<16x18x128xbf16>
    %17 = tpu.concatenate %15, %16, %15 in 0 : vector<1x18x128xbf16>, vector<16x18x128xbf16>, vector<1x18x128xbf16> -> vector<18x18x128xbf16>
    %cst_9 = arith.constant 0.000000e+00 : f32
    %18 = vector.broadcast %cst_9 : f32 to vector<256x128xf32>
    %19 = vector.extract_strided_slice %17 {offsets = [0, 0, 0], sizes = [16, 16, 128], strides = [1, 1, 1]} : vector<18x18x128xbf16> to vector<16x16x128xbf16>
    %20 = vector.shape_cast %19 : vector<16x16x128xbf16> to vector<256x128xbf16>
    %c0_10 = arith.constant 0 : index
    %c0_11 = arith.constant 0 : index
    %c0_12 = arith.constant 0 : index
    %c0_13 = arith.constant 0 : index
    %21 = vector.load %arg4[%c0_10, %c0_11, %c0_12, %c0_13] : memref<3x3x128x128xbf16, #tpu.memory_space<vmem>>, vector<1x1x128x128xbf16>
    %22 = vector.shape_cast %21 : vector<1x1x128x128xbf16> to vector<128x128xbf16>
    %cst_14 = arith.constant dense<0.000000e+00> : vector<256x128xf32>
    %23 = tpu.matmul %20, %22, %cst_14 {dimension_numbers = #tpu.dot_dimension_numbers<[1], [0], [0], [1], [0, 0, 1, 1], [], []>} : vector<256x128xbf16>, vector<128x128xbf16>, vector<256x128xf32> -> vector<256x128xf32>
    %24 = arith.addf %18, %23 : vector<256x128xf32>
    %25 = vector.extract_strided_slice %17 {offsets = [0, 1, 0], sizes = [16, 16, 128], strides = [1, 1, 1]} : vector<18x18x128xbf16> to vector<16x16x128xbf16>
    %26 = vector.shape_cast %25 : vector<16x16x128xbf16> to vector<256x128xbf16>
    %c0_15 = arith.constant 0 : index
    %c1 = arith.constant 1 : index
    %c0_16 = arith.constant 0 : index
    %c0_17 = arith.constant 0 : index
    %27 = vector.load %arg4[%c0_15, %c1, %c0_16, %c0_17] : memref<3x3x128x128xbf16, #tpu.memory_space<vmem>>, vector<1x1x128x128xbf16>
    %28 = vector.shape_cast %27 : vector<1x1x128x128xbf16> to vector<128x128xbf16>
    %cst_18 = arith.constant dense<0.000000e+00> : vector<256x128xf32>
    %29 = tpu.matmul %26, %28, %cst_18 {dimension_numbers = #tpu.dot_dimension_numbers<[1], [0], [0], [1], [0, 0, 1, 1], [], []>} : vector<256x128xbf16>, vector<128x128xbf16>, vector<256x128xf32> -> vector<256x128xf32>
    %30 = arith.addf %24, %29 : vector<256x128xf32>
    %31 = vector.extract_strided_slice %17 {offsets = [0, 2, 0], sizes = [16, 16, 128], strides = [1, 1, 1]} : vector<18x18x128xbf16> to vector<16x16x128xbf16>
    %32 = vector.shape_cast %31 : vector<16x16x128xbf16> to vector<256x128xbf16>
    %c0_19 = arith.constant 0 : index
    %c2 = arith.constant 2 : index
    %c0_20 = arith.constant 0 : index
    %c0_21 = arith.constant 0 : index
    %33 = vector.load %arg4[%c0_19, %c2, %c0_20, %c0_21] : memref<3x3x128x128xbf16, #tpu.memory_space<vmem>>, vector<1x1x128x128xbf16>
    %34 = vector.shape_cast %33 : vector<1x1x128x128xbf16> to vector<128x128xbf16>
    %cst_22 = arith.constant dense<0.000000e+00> : vector<256x128xf32>
    %35 = tpu.matmul %32, %34, %cst_22 {dimension_numbers = #tpu.dot_dimension_numbers<[1], [0], [0], [1], [0, 0, 1, 1], [], []>} : vector<256x128xbf16>, vector<128x128xbf16>, vector<256x128xf32> -> vector<256x128xf32>
    %36 = arith.addf %30, %35 : vector<256x128xf32>
    %37 = vector.extract_strided_slice %17 {offsets = [1, 0, 0], sizes = [16, 16, 128], strides = [1, 1, 1]} : vector<18x18x128xbf16> to vector<16x16x128xbf16>
    %38 = vector.shape_cast %37 : vector<16x16x128xbf16> to vector<256x128xbf16>
    %c1_23 = arith.constant 1 : index
    %c0_24 = arith.constant 0 : index
    %c0_25 = arith.constant 0 : index
    %c0_26 = arith.constant 0 : index
    %39 = vector.load %arg4[%c1_23, %c0_24, %c0_25, %c0_26] : memref<3x3x128x128xbf16, #tpu.memory_space<vmem>>, vector<1x1x128x128xbf16>
    %40 = vector.shape_cast %39 : vector<1x1x128x128xbf16> to vector<128x128xbf16>
    %cst_27 = arith.constant dense<0.000000e+00> : vector<256x128xf32>
    %41 = tpu.matmul %38, %40, %cst_27 {dimension_numbers = #tpu.dot_dimension_numbers<[1], [0], [0], [1], [0, 0, 1, 1], [], []>} : vector<256x128xbf16>, vector<128x128xbf16>, vector<256x128xf32> -> vector<256x128xf32>
    %42 = arith.addf %36, %41 : vector<256x128xf32>
    %43 = vector.extract_strided_slice %17 {offsets = [1, 1, 0], sizes = [16, 16, 128], strides = [1, 1, 1]} : vector<18x18x128xbf16> to vector<16x16x128xbf16>
    %44 = vector.shape_cast %43 : vector<16x16x128xbf16> to vector<256x128xbf16>
    %c1_28 = arith.constant 1 : index
    %c1_29 = arith.constant 1 : index
    %c0_30 = arith.constant 0 : index
    %c0_31 = arith.constant 0 : index
    %45 = vector.load %arg4[%c1_28, %c1_29, %c0_30, %c0_31] : memref<3x3x128x128xbf16, #tpu.memory_space<vmem>>, vector<1x1x128x128xbf16>
    %46 = vector.shape_cast %45 : vector<1x1x128x128xbf16> to vector<128x128xbf16>
    %cst_32 = arith.constant dense<0.000000e+00> : vector<256x128xf32>
    %47 = tpu.matmul %44, %46, %cst_32 {dimension_numbers = #tpu.dot_dimension_numbers<[1], [0], [0], [1], [0, 0, 1, 1], [], []>} : vector<256x128xbf16>, vector<128x128xbf16>, vector<256x128xf32> -> vector<256x128xf32>
    %48 = arith.addf %42, %47 : vector<256x128xf32>
    %49 = vector.extract_strided_slice %17 {offsets = [1, 2, 0], sizes = [16, 16, 128], strides = [1, 1, 1]} : vector<18x18x128xbf16> to vector<16x16x128xbf16>
    %50 = vector.shape_cast %49 : vector<16x16x128xbf16> to vector<256x128xbf16>
    %c1_33 = arith.constant 1 : index
    %c2_34 = arith.constant 2 : index
    %c0_35 = arith.constant 0 : index
    %c0_36 = arith.constant 0 : index
    %51 = vector.load %arg4[%c1_33, %c2_34, %c0_35, %c0_36] : memref<3x3x128x128xbf16, #tpu.memory_space<vmem>>, vector<1x1x128x128xbf16>
    %52 = vector.shape_cast %51 : vector<1x1x128x128xbf16> to vector<128x128xbf16>
    %cst_37 = arith.constant dense<0.000000e+00> : vector<256x128xf32>
    %53 = tpu.matmul %50, %52, %cst_37 {dimension_numbers = #tpu.dot_dimension_numbers<[1], [0], [0], [1], [0, 0, 1, 1], [], []>} : vector<256x128xbf16>, vector<128x128xbf16>, vector<256x128xf32> -> vector<256x128xf32>
    %54 = arith.addf %48, %53 : vector<256x128xf32>
    %55 = vector.extract_strided_slice %17 {offsets = [2, 0, 0], sizes = [16, 16, 128], strides = [1, 1, 1]} : vector<18x18x128xbf16> to vector<16x16x128xbf16>
    %56 = vector.shape_cast %55 : vector<16x16x128xbf16> to vector<256x128xbf16>
    %c2_38 = arith.constant 2 : index
    %c0_39 = arith.constant 0 : index
    %c0_40 = arith.constant 0 : index
    %c0_41 = arith.constant 0 : index
    %57 = vector.load %arg4[%c2_38, %c0_39, %c0_40, %c0_41] : memref<3x3x128x128xbf16, #tpu.memory_space<vmem>>, vector<1x1x128x128xbf16>
    %58 = vector.shape_cast %57 : vector<1x1x128x128xbf16> to vector<128x128xbf16>
    %cst_42 = arith.constant dense<0.000000e+00> : vector<256x128xf32>
    %59 = tpu.matmul %56, %58, %cst_42 {dimension_numbers = #tpu.dot_dimension_numbers<[1], [0], [0], [1], [0, 0, 1, 1], [], []>} : vector<256x128xbf16>, vector<128x128xbf16>, vector<256x128xf32> -> vector<256x128xf32>
    %60 = arith.addf %54, %59 : vector<256x128xf32>
    %61 = vector.extract_strided_slice %17 {offsets = [2, 1, 0], sizes = [16, 16, 128], strides = [1, 1, 1]} : vector<18x18x128xbf16> to vector<16x16x128xbf16>
    %62 = vector.shape_cast %61 : vector<16x16x128xbf16> to vector<256x128xbf16>
    %c2_43 = arith.constant 2 : index
    %c1_44 = arith.constant 1 : index
    %c0_45 = arith.constant 0 : index
    %c0_46 = arith.constant 0 : index
    %63 = vector.load %arg4[%c2_43, %c1_44, %c0_45, %c0_46] : memref<3x3x128x128xbf16, #tpu.memory_space<vmem>>, vector<1x1x128x128xbf16>
    %64 = vector.shape_cast %63 : vector<1x1x128x128xbf16> to vector<128x128xbf16>
    %cst_47 = arith.constant dense<0.000000e+00> : vector<256x128xf32>
    %65 = tpu.matmul %62, %64, %cst_47 {dimension_numbers = #tpu.dot_dimension_numbers<[1], [0], [0], [1], [0, 0, 1, 1], [], []>} : vector<256x128xbf16>, vector<128x128xbf16>, vector<256x128xf32> -> vector<256x128xf32>
    %66 = arith.addf %60, %65 : vector<256x128xf32>
    %67 = vector.extract_strided_slice %17 {offsets = [2, 2, 0], sizes = [16, 16, 128], strides = [1, 1, 1]} : vector<18x18x128xbf16> to vector<16x16x128xbf16>
    %68 = vector.shape_cast %67 : vector<16x16x128xbf16> to vector<256x128xbf16>
    %c2_48 = arith.constant 2 : index
    %c2_49 = arith.constant 2 : index
    %c0_50 = arith.constant 0 : index
    %c0_51 = arith.constant 0 : index
    %69 = vector.load %arg4[%c2_48, %c2_49, %c0_50, %c0_51] : memref<3x3x128x128xbf16, #tpu.memory_space<vmem>>, vector<1x1x128x128xbf16>
    %70 = vector.shape_cast %69 : vector<1x1x128x128xbf16> to vector<128x128xbf16>
    %cst_52 = arith.constant dense<0.000000e+00> : vector<256x128xf32>
    %71 = tpu.matmul %68, %70, %cst_52 {dimension_numbers = #tpu.dot_dimension_numbers<[1], [0], [0], [1], [0, 0, 1, 1], [], []>} : vector<256x128xbf16>, vector<128x128xbf16>, vector<256x128xf32> -> vector<256x128xf32>
    %72 = arith.addf %66, %71 : vector<256x128xf32>
    %73 = vector.shape_cast %72 : vector<256x128xf32> to vector<1x16x16x128xf32>
    %74 = arith.truncf %73 : vector<1x16x16x128xf32> to vector<1x16x16x128xbf16>
    %c0_53 = arith.constant 0 : index
    %c0_54 = arith.constant 0 : index
    %c0_55 = arith.constant 0 : index
    %c0_56 = arith.constant 0 : index
    %75 = vector.load %arg5[%c0_53, %c0_54, %c0_55, %c0_56] : memref<1x16x16x128xbf16, #tpu.memory_space<vmem>>, vector<1x16x16x128xbf16>
    tpu.vector_store %arg5[%c0_53, %c0_54, %c0_55, %c0_56], %74 {strides = array<i32>} : memref<1x16x16x128xbf16, #tpu.memory_space<vmem>>, vector<1x16x16x128xbf16>,
    %cst_57 = arith.constant dense<0.000000e+00> : vector<128xf32>
    %76 = vector.multi_reduction <add>, %72, %cst_57 [0] : vector<256x128xf32> to vector<128xf32>
    %77 = vector.shape_cast %76 : vector<128xf32> to vector<1x128xf32>
    %78 = arith.mulf %72, %72 : vector<256x128xf32>
    %cst_58 = arith.constant dense<0.000000e+00> : vector<128xf32>
    %79 = vector.multi_reduction <add>, %78, %cst_58 [0] : vector<256x128xf32> to vector<128xf32>
    %80 = vector.shape_cast %79 : vector<128xf32> to vector<1x128xf32>
    %cst_59 = arith.constant 0.000000e+00 : f32
    %81 = vector.broadcast %cst_59 : f32 to vector<6x128xf32>
    %82 = tpu.concatenate %77, %80, %81 in 0 : vector<1x128xf32>, vector<1x128xf32>, vector<6x128xf32> -> vector<8x128xf32>
    %83 = vector.shape_cast %82 : vector<8x128xf32> to vector<1x8x128xf32>
    %c0_60 = arith.constant 0 : index
    %c0_61 = arith.constant 0 : index
    %c0_62 = arith.constant 0 : index
    %84 = vector.load %arg6[%c0_60, %c0_61, %c0_62] : memref<1x8x128xf32, #tpu.memory_space<vmem>>, vector<1x8x128xf32>
    tpu.vector_store %arg6[%c0_60, %c0_61, %c0_62], %83 {strides = array<i32>} : memref<1x8x128xf32, #tpu.memory_space<vmem>>, vector<1x8x128xf32>,
    return
  }
  func.func @transform_0(%arg0: i32) -> (i32, i32, i32, i32) {
    %c0_i32 = arith.constant 0 : i32
    %c0_i32_0 = arith.constant 0 : i32
    %c0_i32_1 = arith.constant 0 : i32
    %c0_i32_2 = arith.constant 0 : i32
    return %arg0, %c0_i32, %c0_i32_0, %c0_i32_1 : i32, i32, i32, i32
  }
  func.func @transform_1(%arg0: i32) -> (i32, i32) {
    %c0_i32 = arith.constant 0 : i32
    %c0_i32_0 = arith.constant 0 : i32
    %c0_i32_1 = arith.constant 0 : i32
    return %c0_i32, %c0_i32_0 : i32, i32
  }
  func.func @transform_2(%arg0: i32) -> (i32, i32) {
    %c0_i32 = arith.constant 0 : i32
    %c0_i32_0 = arith.constant 0 : i32
    %c0_i32_1 = arith.constant 0 : i32
    return %c0_i32, %c0_i32_0 : i32, i32
  }
  func.func @transform_3(%arg0: i32) -> (i32, i32, i32, i32) {
    %c0_i32 = arith.constant 0 : i32
    %c0_i32_0 = arith.constant 0 : i32
    %c0_i32_1 = arith.constant 0 : i32
    %c0_i32_2 = arith.constant 0 : i32
    %c0_i32_3 = arith.constant 0 : i32
    return %c0_i32, %c0_i32_0, %c0_i32_1, %c0_i32_2 : i32, i32, i32, i32
  }
  func.func @transform_4(%arg0: i32) -> (i32, i32, i32, i32) {
    %c0_i32 = arith.constant 0 : i32
    %c0_i32_0 = arith.constant 0 : i32
    %c0_i32_1 = arith.constant 0 : i32
    %c0_i32_2 = arith.constant 0 : i32
    return %arg0, %c0_i32, %c0_i32_0, %c0_i32_1 : i32, i32, i32, i32
  }
  func.func @transform_5(%arg0: i32) -> (i32, i32, i32) {
    %c0_i32 = arith.constant 0 : i32
    %c0_i32_0 = arith.constant 0 : i32
    %c0_i32_1 = arith.constant 0 : i32
    return %arg0, %c0_i32, %c0_i32_0 : i32, i32, i32
  }
}

module attributes {stable_mosaic.version = 11 : i64} {
  func.func @_bn_res_relu_kernel(%arg0: i32, %arg1: memref<512x128xbf16, #tpu.memory_space<vmem>>, %arg2: memref<1x128xf32, #tpu.memory_space<vmem>>, %arg3: memref<1x128xf32, #tpu.memory_space<vmem>>, %arg4: memref<512x128xbf16, #tpu.memory_space<vmem>>, %arg5: memref<512x128xf32, #tpu.memory_space<vmem>>) attributes {dimension_semantics = [#tpu.dimension_semantics<parallel>], iteration_bounds = array<i64: 1>, scalar_prefetch = 0 : i64, scratch_operands = 0 : i64, tpu.core_type = #tpu.core_type<tc>, window_params = [{transform_indices = @transform_0, window_bounds = array<i64: 512, 128>}, {pipeline_mode = #tpu.pipeline_mode<synchronous>, transform_indices = @transform_1, window_bounds = array<i64: 1, 128>}, {pipeline_mode = #tpu.pipeline_mode<synchronous>, transform_indices = @transform_2, window_bounds = array<i64: 1, 128>}, {transform_indices = @transform_3, window_bounds = array<i64: 512, 128>}, {transform_indices = @transform_4, window_bounds = array<i64: 512, 128>}]} {
    %c0 = arith.constant 0 : index
    %c0_0 = arith.constant 0 : index
    %0 = vector.load %arg1[%c0, %c0_0] : memref<512x128xbf16, #tpu.memory_space<vmem>>, vector<512x128xbf16>
    %1 = arith.extf %0 : vector<512x128xbf16> to vector<512x128xf32>
    %c0_1 = arith.constant 0 : index
    %c0_2 = arith.constant 0 : index
    %2 = vector.load %arg2[%c0_1, %c0_2] : memref<1x128xf32, #tpu.memory_space<vmem>>, vector<1x128xf32>
    %3 = vector.broadcast %2 : vector<1x128xf32> to vector<512x128xf32>
    %4 = arith.mulf %1, %3 : vector<512x128xf32>
    %c0_3 = arith.constant 0 : index
    %c0_4 = arith.constant 0 : index
    %5 = vector.load %arg3[%c0_3, %c0_4] : memref<1x128xf32, #tpu.memory_space<vmem>>, vector<1x128xf32>
    %6 = vector.broadcast %5 : vector<1x128xf32> to vector<512x128xf32>
    %7 = arith.addf %4, %6 : vector<512x128xf32>
    %c0_5 = arith.constant 0 : index
    %c0_6 = arith.constant 0 : index
    %8 = vector.load %arg4[%c0_5, %c0_6] : memref<512x128xbf16, #tpu.memory_space<vmem>>, vector<512x128xbf16>
    %9 = arith.extf %8 : vector<512x128xbf16> to vector<512x128xf32>
    %10 = arith.addf %7, %9 : vector<512x128xf32>
    %cst = arith.constant 0.000000e+00 : f32
    %11 = vector.broadcast %cst : f32 to vector<512x128xf32>
    %12 = arith.maximumf %10, %11 : vector<512x128xf32>
    %c0_7 = arith.constant 0 : index
    %c0_8 = arith.constant 0 : index
    %13 = vector.load %arg5[%c0_7, %c0_8] : memref<512x128xf32, #tpu.memory_space<vmem>>, vector<512x128xf32>
    tpu.vector_store %arg5[%c0_7, %c0_8], %12 {strides = array<i32>} : memref<512x128xf32, #tpu.memory_space<vmem>>, vector<512x128xf32>,
    return
  }
  func.func @transform_0(%arg0: i32) -> (i32, i32) {
    %c0_i32 = arith.constant 0 : i32
    %c0_i32_0 = arith.constant 0 : i32
    return %arg0, %c0_i32 : i32, i32
  }
  func.func @transform_1(%arg0: i32) -> (i32, i32) {
    %c0_i32 = arith.constant 0 : i32
    %c0_i32_0 = arith.constant 0 : i32
    %c0_i32_1 = arith.constant 0 : i32
    return %c0_i32, %c0_i32_0 : i32, i32
  }
  func.func @transform_2(%arg0: i32) -> (i32, i32) {
    %c0_i32 = arith.constant 0 : i32
    %c0_i32_0 = arith.constant 0 : i32
    %c0_i32_1 = arith.constant 0 : i32
    return %c0_i32, %c0_i32_0 : i32, i32
  }
  func.func @transform_3(%arg0: i32) -> (i32, i32) {
    %c0_i32 = arith.constant 0 : i32
    %c0_i32_0 = arith.constant 0 : i32
    return %arg0, %c0_i32 : i32, i32
  }
  func.func @transform_4(%arg0: i32) -> (i32, i32) {
    %c0_i32 = arith.constant 0 : i32
    %c0_i32_0 = arith.constant 0 : i32
    return %arg0, %c0_i32 : i32, i32
  }
}

</mosaic_0001>

<llo_original>
// kernel: bottleneck_forward.7
$region0: #{bottleneck_forward.7}
  #allocation0 [shape = 'u32[]', space=smem, size = 0x4, offset = 0x4, fixed_abs, tag = 'smem constant byte address 0x4 - core index']
  #allocation1 [shape = 'u32[72,128]{1,0:T(1,128)}', space=vmem, size = 0x9000, scoped, tag = 'internal scratch']
  %s0 = inlined_call_operand.vmem [shape: bf16[512,128], index: 0, kind: input, shape index: {}]
  %s1 = inlined_call_operand.vmem [shape: f32[1,128], index: 1, kind: input, shape index: {}]
  %s2 = inlined_call_operand.vmem [shape: f32[1,128], index: 2, kind: input, shape index: {}]
  %s3 = inlined_call_operand.vmem [shape: bf16[512,128], index: 3, kind: input, shape index: {}]
  %s4 = inlined_call_operand.vmem [shape: f32[512,128], index: 4, kind: output, shape index: {}]
  %s5 = sld [smem:[#allocation0]]
  $region26: #{bottleneck_forward.7} parent=0
    _
  %s7 = ssub.s32 1, %s5
  %s8 = scalar_select 0, %s7, %s5
  // Predicated region
  $region2: #{bottleneck_forward.7} parent=0 // pred_check
    _
  $region3: #{bottleneck_forward.7} parent=0 // pred_check_branch
    %10 = sbr.rel (0) target = $region5
  $region4: #{bottleneck_forward.7} parent=0 // pred_region
    _
  $region5: #{bottleneck_forward.7} parent=0 // pred_fallthru
    _
  // Predicated region
  $region6: #{bottleneck_forward.7} parent=0 // pred_check
    _
  $region7: #{bottleneck_forward.7} parent=0 // pred_check_branch
    %12 = sbr.rel (0) target = $region9
  $region8: #{bottleneck_forward.7} parent=0 // pred_region
    _
  $region9: #{bottleneck_forward.7} parent=0 // pred_fallthru
    _
  // Predicated region
  $region10: #{bottleneck_forward.7} parent=0 // pred_check
    _
  $region11: #{bottleneck_forward.7} parent=0 // pred_check_branch
    %14 = sbr.rel (0) target = $region13
  $region12: #{bottleneck_forward.7} parent=0 // pred_region
    _
  $region13: #{bottleneck_forward.7} parent=0 // pred_fallthru
    _
  // Predicated region
  $region14: #{bottleneck_forward.7} parent=0 // pred_check
    _
  $region15: #{bottleneck_forward.7} parent=0 // pred_check_branch
    %16 = sbr.rel (0) target = $region17
  $region16: #{bottleneck_forward.7} parent=0 // pred_region
    _
  $region17: #{bottleneck_forward.7} parent=0 // pred_fallthru
    _
  %v17 = vld [vmem:[%s0] sm:$0xf]
  %v18 = vld [vmem:[%s0 + $0x4] sm:$0xf]
  %v19 = vld [vmem:[%s0 + $0x8] sm:$0xf]
  %v20 = vld [vmem:[%s0 + $0xc] sm:$0xf]
  %v21 = vld [vmem:[%s0 + $0x10] sm:$0xf]
  %v22 = vld [vmem:[%s0 + $0x14] sm:$0xf]
  %v23 = vld [vmem:[%s0 + $0x18] sm:$0xf]
  %v24 = vld [vmem:[%s0 + $0x1c] sm:$0xf]
  %v25 = vld [vmem:[%s0 + $0x20] sm:$0xf]
  %v26 = vld [vmem:[%s0 + $0x24] sm:$0xf]
  %v27 = vld [vmem:[%s0 + $0x28] sm:$0xf]
  %v28 = vld [vmem:[%s0 + $0x2c] sm:$0xf]
  %v29 = vld [vmem:[%s0 + $0x30] sm:$0xf]
  %v30 = vld [vmem:[%s0 + $0x34] sm:$0xf]
  %v31 = vld [vmem:[%s0 + $0x38] sm:$0xf]
  %v32 = vld [vmem:[%s0 + $0x3c] sm:$0xf]
  %v33 = vld [vmem:[%s0 + $0x40] sm:$0xf]
  %v34 = vld [vmem:[%s0 + $0x44] sm:$0xf]
  %v35 = vld [vmem:[%s0 + $0x48] sm:$0xf]
  %v36 = vld [vmem:[%s0 + $0x4c] sm:$0xf]
  %v37 = vld [vmem:[%s0 + $0x50] sm:$0xf]
  %v38 = vld [vmem:[%s0 + $0x54] sm:$0xf]
  %v39 = vld [vmem:[%s0 + $0x58] sm:$0xf]
  %v40 = vld [vmem:[%s0 + $0x5c] sm:$0xf]
  %v41 = vld [vmem:[%s0 + $0x60] sm:$0xf]
  %v42 = vld [vmem:[%s0 + $0x64] sm:$0xf]
  %v43 = vld [vmem:[%s0 + $0x68] sm:$0xf]
  %v44 = vld [vmem:[%s0 + $0x6c] sm:$0xf]
  %v45 = vld [vmem:[%s0 + $0x70] sm:$0xf]
  %v46 = vld [vmem:[%s0 + $0x74] sm:$0xf]
  %v47 = vld [vmem:[%s0 + $0x78] sm:$0xf]
  %v48 = vld [vmem:[%s0 + $0x7c] sm:$0xf]
  %v49 = vld [vmem:[%s0 + $0x80] sm:$0xf]
  %v50 = vld [vmem:[%s0 + $0x84] sm:$0xf]
  %v51 = vld [vmem:[%s0 + $0x88] sm:$0xf]
  %v52 = vld [vmem:[%s0 + $0x8c] sm:$0xf]
  %v53 = vld [vmem:[%s0 + $0x90] sm:$0xf]
  %v54 = vld [vmem:[%s0 + $0x94] sm:$0xf]
  %v55 = vld [vmem:[%s0 + $0x98] sm:$0xf]
  %v56 = vld [vmem:[%s0 + $0x9c] sm:$0xf]
  %v57 = vld [vmem:[%s0 + $0xa0] sm:$0xf]
  %v58 = vld [vmem:[%s0 + $0xa4] sm:$0xf]
  %v59 = vld [vmem:[%s0 + $0xa8] sm:$0xf]
  %v60 = vld [vmem:[%s0 + $0xac] sm:$0xf]
  %v61 = vld [vmem:[%s0 + $0xb0] sm:$0xf]
  %v62 = vld [vmem:[%s0 + $0xb4] sm:$0xf]
  %v63 = vld [vmem:[%s0 + $0xb8] sm:$0xf]
  %v64 = vld [vmem:[%s0 + $0xbc] sm:$0xf]
  %v65 = vld [vmem:[%s0 + $0xc0] sm:$0xf]
  %v66 = vld [vmem:[%s0 + $0xc4] sm:$0xf]
  %v67 = vld [vmem:[%s0 + $0xc8] sm:$0xf]
  %v68 = vld [vmem:[%s0 + $0xcc] sm:$0xf]
  %v69 = vld [vmem:[%s0 + $0xd0] sm:$0xf]
  %v70 = vld [vmem:[%s0 + $0xd4] sm:$0xf]
  %v71 = vld [vmem:[%s0 + $0xd8] sm:$0xf]
  %v72 = vld [vmem:[%s0 + $0xdc] sm:$0xf]
  %v73 = vld [vmem:[%s0 + $0xe0] sm:$0xf]
  %v74 = vld [vmem:[%s0 + $0xe4] sm:$0xf]
  %v75 = vld [vmem:[%s0 + $0xe8] sm:$0xf]
  %v76 = vld [vmem:[%s0 + $0xec] sm:$0xf]
  %v77 = vld [vmem:[%s0 + $0xf0] sm:$0xf]
  %v78 = vld [vmem:[%s0 + $0xf4] sm:$0xf]
  %v79 = vld [vmem:[%s0 + $0xf8] sm:$0xf]
  %v80 = vld [vmem:[%s0 + $0xfc] sm:$0xf]
  %v81 = vunpack.c.l.bf16 %v17
  %v82 = vunpack.c.l.bf16 %v18
  %v83 = vunpack.c.l.bf16 %v19
  %v84 = vunpack.c.l.bf16 %v20
  %v85 = vunpack.c.l.bf16 %v21
  %v86 = vunpack.c.l.bf16 %v22
  %v87 = vunpack.c.l.bf16 %v23
  %v88 = vunpack.c.l.bf16 %v24
  %v89 = vunpack.c.l.bf16 %v25
  %v90 = vunpack.c.l.bf16 %v26
  %v91 = vunpack.c.l.bf16 %v27
  %v92 = vunpack.c.l.bf16 %v28
  %v93 = vunpack.c.l.bf16 %v29
  %v94 = vunpack.c.l.bf16 %v30
  %v95 = vunpack.c.l.bf16 %v31
  %v96 = vunpack.c.l.bf16 %v32
  %v97 = vunpack.c.l.bf16 %v33
  %v98 = vunpack.c.l.bf16 %v34
  %v99 = vunpack.c.l.bf16 %v35
  %v100 = vunpack.c.l.bf16 %v36
  %v101 = vunpack.c.l.bf16 %v37
  %v102 = vunpack.c.l.bf16 %v38
  %v103 = vunpack.c.l.bf16 %v39
  %v104 = vunpack.c.l.bf16 %v40
  %v105 = vunpack.c.l.bf16 %v41
  %v106 = vunpack.c.l.bf16 %v42
  %v107 = vunpack.c.l.bf16 %v43
  %v108 = vunpack.c.l.bf16 %v44
  %v109 = vunpack.c.l.bf16 %v45
  %v110 = vunpack.c.l.bf16 %v46
  %v111 = vunpack.c.l.bf16 %v47
  %v112 = vunpack.c.l.bf16 %v48
  %v113 = vunpack.c.l.bf16 %v49
  %v114 = vunpack.c.l.bf16 %v50
  %v115 = vunpack.c.l.bf16 %v51
  %v116 = vunpack.c.l.bf16 %v52
  %v117 = vunpack.c.l.bf16 %v53
  %v118 = vunpack.c.l.bf16 %v54
  %v119 = vunpack.c.l.bf16 %v55
  %v120 = vunpack.c.l.bf16 %v56
  %v121 = vunpack.c.l.bf16 %v57
  %v122 = vunpack.c.l.bf16 %v58
  %v123 = vunpack.c.l.bf16 %v59
  %v124 = vunpack.c.l.bf16 %v60
  %v125 = vunpack.c.l.bf16 %v61
  %v126 = vunpack.c.l.bf16 %v62
  %v127 = vunpack.c.l.bf16 %v63
  %v128 = vunpack.c.l.bf16 %v64
  %v129 = vunpack.c.l.bf16 %v65
  %v130 = vunpack.c.l.bf16 %v66
  %v131 = vunpack.c.l.bf16 %v67
  %v132 = vunpack.c.l.bf16 %v68
  %v133 = vunpack.c.l.bf16 %v69
  %v134 = vunpack.c.l.bf16 %v70
  %v135 = vunpack.c.l.bf16 %v71
  %v136 = vunpack.c.l.bf16 %v72
  %v137 = vunpack.c.l.bf16 %v73
  %v138 = vunpack.c.l.bf16 %v74
  %v139 = vunpack.c.l.bf16 %v75
  %v140 = vunpack.c.l.bf16 %v76
  %v141 = vunpack.c.l.bf16 %v77
  %v142 = vunpack.c.l.bf16 %v78
  %v143 = vunpack.c.l.bf16 %v79
  %v144 = vunpack.c.l.bf16 %v80
  %v145 = vld [vmem:[%s1] sm:$0x1]
  %v147 = vperm.slane %v145, 0
  %v149 = vmul.f32 %v81, %v147
  %v150 = vmul.f32 %v82, %v147
  %v151 = vmul.f32 %v83, %v147
  %v152 = vmul.f32 %v84, %v147
  %v153 = vmul.f32 %v85, %v147
  %v154 = vmul.f32 %v86, %v147
  %v155 = vmul.f32 %v87, %v147
  %v156 = vmul.f32 %v88, %v147
  %v157 = vmul.f32 %v89, %v147
  %v158 = vmul.f32 %v90, %v147
  %v159 = vmul.f32 %v91, %v147
  %v160 = vmul.f32 %v92, %v147
  %v161 = vmul.f32 %v93, %v147
  %v162 = vmul.f32 %v94, %v147
  %v163 = vmul.f32 %v95, %v147
  %v164 = vmul.f32 %v96, %v147
  %v165 = vmul.f32 %v97, %v147
  %v166 = vmul.f32 %v98, %v147
  %v167 = vmul.f32 %v99, %v147
  %v168 = vmul.f32 %v100, %v147
  %v169 = vmul.f32 %v101, %v147
  %v170 = vmul.f32 %v102, %v147
  %v171 = vmul.f32 %v103, %v147
  %v172 = vmul.f32 %v104, %v147
  %v173 = vmul.f32 %v105, %v147
  %v174 = vmul.f32 %v106, %v147
  %v175 = vmul.f32 %v107, %v147
  %v176 = vmul.f32 %v108, %v147
  %v177 = vmul.f32 %v109, %v147
  %v178 = vmul.f32 %v110, %v147
  %v179 = vmul.f32 %v111, %v147
  %v180 = vmul.f32 %v112, %v147
  %v181 = vmul.f32 %v113, %v147
  %v182 = vmul.f32 %v114, %v147
  %v183 = vmul.f32 %v115, %v147
  %v184 = vmul.f32 %v116, %v147
  %v185 = vmul.f32 %v117, %v147
  %v186 = vmul.f32 %v118, %v147
  %v187 = vmul.f32 %v119, %v147
  %v188 = vmul.f32 %v120, %v147
  %v189 = vmul.f32 %v121, %v147
  %v190 = vmul.f32 %v122, %v147
  %v191 = vmul.f32 %v123, %v147
  %v192 = vmul.f32 %v124, %v147
  %v193 = vmul.f32 %v125, %v147
  %v194 = vmul.f32 %v126, %v147
  %v195 = vmul.f32 %v127, %v147
  %v196 = vmul.f32 %v128, %v147
  %v197 = vmul.f32 %v129, %v147
  %v198 = vmul.f32 %v130, %v147
  %v199 = vmul.f32 %v131, %v147
  %v200 = vmul.f32 %v132, %v147
  %v201 = vmul.f32 %v133, %v147
  %v202 = vmul.f32 %v134, %v147
  %v203 = vmul.f32 %v135, %v147
  %v204 = vmul.f32 %v136, %v147
  %v205 = vmul.f32 %v137, %v147
  %v206 = vmul.f32 %v138, %v147
  %v207 = vmul.f32 %v139, %v147
  %v208 = vmul.f32 %v140, %v147
  %v209 = vmul.f32 %v141, %v147
  %v210 = vmul.f32 %v142, %v147
  %v211 = vmul.f32 %v143, %v147
  %v212 = vmul.f32 %v144, %v147
  %v213 = vld [vmem:[%s2] sm:$0x1]
  %v215 = vperm.slane %v213, 0
  %v217 = vadd.f32 %v149, %v215
  %v218 = vadd.f32 %v150, %v215
  %v219 = vadd.f32 %v151, %v215
  %v220 = vadd.f32 %v152, %v215
  %v221 = vadd.f32 %v153, %v215
  %v222 = vadd.f32 %v154, %v215
  %v223 = vadd.f32 %v155, %v215
  %v224 = vadd.f32 %v156, %v215
  %v225 = vadd.f32 %v157, %v215
  %v226 = vadd.f32 %v158, %v215
  %v227 = vadd.f32 %v159, %v215
  %v228 = vadd.f32 %v160, %v215
  %v229 = vadd.f32 %v161, %v215
  %v230 = vadd.f32 %v162, %v215
  %v231 = vadd.f32 %v163, %v215
  %v232 = vadd.f32 %v164, %v215
  %v233 = vadd.f32 %v165, %v215
  %v234 = vadd.f32 %v166, %v215
  %v235 = vadd.f32 %v167, %v215
  %v236 = vadd.f32 %v168, %v215
  %v237 = vadd.f32 %v169, %v215
  %v238 = vadd.f32 %v170, %v215
  %v239 = vadd.f32 %v171, %v215
  %v240 = vadd.f32 %v172, %v215
  %v241 = vadd.f32 %v173, %v215
  %v242 = vadd.f32 %v174, %v215
  %v243 = vadd.f32 %v175, %v215
  %v244 = vadd.f32 %v176, %v215
  %v245 = vadd.f32 %v177, %v215
  %v246 = vadd.f32 %v178, %v215
  %v247 = vadd.f32 %v179, %v215
  %v248 = vadd.f32 %v180, %v215
  %v249 = vadd.f32 %v181, %v215
  %v250 = vadd.f32 %v182, %v215
  %v251 = vadd.f32 %v183, %v215
  %v252 = vadd.f32 %v184, %v215
  %v253 = vadd.f32 %v185, %v215
  %v254 = vadd.f32 %v186, %v215
  %v255 = vadd.f32 %v187, %v215
  %v256 = vadd.f32 %v188, %v215
  %v257 = vadd.f32 %v189, %v215
  %v258 = vadd.f32 %v190, %v215
  %v259 = vadd.f32 %v191, %v215
  %v260 = vadd.f32 %v192, %v215
  %v261 = vadd.f32 %v193, %v215
  %v262 = vadd.f32 %v194, %v215
  %v263 = vadd.f32 %v195, %v215
  %v264 = vadd.f32 %v196, %v215
  %v265 = vadd.f32 %v197, %v215
  %v266 = vadd.f32 %v198, %v215
  %v267 = vadd.f32 %v199, %v215
  %v268 = vadd.f32 %v200, %v215
  %v269 = vadd.f32 %v201, %v215
  %v270 = vadd.f32 %v202, %v215
  %v271 = vadd.f32 %v203, %v215
  %v272 = vadd.f32 %v204, %v215
  %v273 = vadd.f32 %v205, %v215
  %v274 = vadd.f32 %v206, %v215
  %v275 = vadd.f32 %v207, %v215
  %v276 = vadd.f32 %v208, %v215
  %v277 = vadd.f32 %v209, %v215
  %v278 = vadd.f32 %v210, %v215
  %v279 = vadd.f32 %v211, %v215
  %v280 = vadd.f32 %v212, %v215
  %v281 = vld [vmem:[%s3] sm:$0xf]
  %v282 = vld [vmem:[%s3 + $0x4] sm:$0xf]
  %v283 = vld [vmem:[%s3 + $0x8] sm:$0xf]
  %v284 = vld [vmem:[%s3 + $0xc] sm:$0xf]
  %v285 = vld [vmem:[%s3 + $0x10] sm:$0xf]
  %v286 = vld [vmem:[%s3 + $0x14] sm:$0xf]
  %v287 = vld [vmem:[%s3 + $0x18] sm:$0xf]
  %v288 = vld [vmem:[%s3 + $0x1c] sm:$0xf]
  %v289 = vld [vmem:[%s3 + $0x20] sm:$0xf]
  %v290 = vld [vmem:[%s3 + $0x24] sm:$0xf]
  %v291 = vld [vmem:[%s3 + $0x28] sm:$0xf]
  %v292 = vld [vmem:[%s3 + $0x2c] sm:$0xf]
  %v293 = vld [vmem:[%s3 + $0x30] sm:$0xf]
  %v294 = vld [vmem:[%s3 + $0x34] sm:$0xf]
  %v295 = vld [vmem:[%s3 + $0x38] sm:$0xf]
  %v296 = vld [vmem:[%s3 + $0x3c] sm:$0xf]
  %v297 = vld [vmem:[%s3 + $0x40] sm:$0xf]
  %v298 = vld [vmem:[%s3 + $0x44] sm:$0xf]
  %v299 = vld [vmem:[%s3 + $0x48] sm:$0xf]
  %v300 = vld [vmem:[%s3 + $0x4c] sm:$0xf]
  %v301 = vld [vmem:[%s3 + $0x50] sm:$0xf]
  %v302 = vld [vmem:[%s3 + $0x54] sm:$0xf]
  %v303 = vld [vmem:[%s3 + $0x58] sm:$0xf]
  %v304 = vld [vmem:[%s3 + $0x5c] sm:$0xf]
  %v305 = vld [vmem:[%s3 + $0x60] sm:$0xf]
  %v306 = vld [vmem:[%s3 + $0x64] sm:$0xf]
  %v307 = vld [vmem:[%s3 + $0x68] sm:$0xf]
  %v308 = vld [vmem:[%s3 + $0x6c] sm:$0xf]
  %v309 = vld [vmem:[%s3 + $0x70] sm:$0xf]
  %v310 = vld [vmem:[%s3 + $0x74] sm:$0xf]
  %v311 = vld [vmem:[%s3 + $0x78] sm:$0xf]
  %v312 = vld [vmem:[%s3 + $0x7c] sm:$0xf]
  %v313 = vld [vmem:[%s3 + $0x80] sm:$0xf]
  %v314 = vld [vmem:[%s3 + $0x84] sm:$0xf]
  %v315 = vld [vmem:[%s3 + $0x88] sm:$0xf]
  %v316 = vld [vmem:[%s3 + $0x8c] sm:$0xf]
  %v317 = vld [vmem:[%s3 + $0x90] sm:$0xf]
  %v318 = vld [vmem:[%s3 + $0x94] sm:$0xf]
  %v319 = vld [vmem:[%s3 + $0x98] sm:$0xf]
  %v320 = vld [vmem:[%s3 + $0x9c] sm:$0xf]
  %v321 = vld [vmem:[%s3 + $0xa0] sm:$0xf]
  %v322 = vld [vmem:[%s3 + $0xa4] sm:$0xf]
  %v323 = vld [vmem:[%s3 + $0xa8] sm:$0xf]
  %v324 = vld [vmem:[%s3 + $0xac] sm:$0xf]
  %v325 = vld [vmem:[%s3 + $0xb0] sm:$0xf]
  %v326 = vld [vmem:[%s3 + $0xb4] sm:$0xf]
  %v327 = vld [vmem:[%s3 + $0xb8] sm:$0xf]
  %v328 = vld [vmem:[%s3 + $0xbc] sm:$0xf]
  %v329 = vld [vmem:[%s3 + $0xc0] sm:$0xf]
  %v330 = vld [vmem:[%s3 + $0xc4] sm:$0xf]
  %v331 = vld [vmem:[%s3 + $0xc8] sm:$0xf]
  %v332 = vld [vmem:[%s3 + $0xcc] sm:$0xf]
  %v333 = vld [vmem:[%s3 + $0xd0] sm:$0xf]
  %v334 = vld [vmem:[%s3 + $0xd4] sm:$0xf]
  %v335 = vld [vmem:[%s3 + $0xd8] sm:$0xf]
  %v336 = vld [vmem:[%s3 + $0xdc] sm:$0xf]
  %v337 = vld [vmem:[%s3 + $0xe0] sm:$0xf]
  %v338 = vld [vmem:[%s3 + $0xe4] sm:$0xf]
  %v339 = vld [vmem:[%s3 + $0xe8] sm:$0xf]
  %v340 = vld [vmem:[%s3 + $0xec] sm:$0xf]
  %v341 = vld [vmem:[%s3 + $0xf0] sm:$0xf]
  %v342 = vld [vmem:[%s3 + $0xf4] sm:$0xf]
  %v343 = vld [vmem:[%s3 + $0xf8] sm:$0xf]
  %v344 = vld [vmem:[%s3 + $0xfc] sm:$0xf]
  %v345 = vunpack.c.l.bf16 %v281
  %v346 = vunpack.c.l.bf16 %v282
  %v347 = vunpack.c.l.bf16 %v283
  %v348 = vunpack.c.l.bf16 %v284
  %v349 = vunpack.c.l.bf16 %v285
  %v350 = vunpack.c.l.bf16 %v286
  %v351 = vunpack.c.l.bf16 %v287
  %v352 = vunpack.c.l.bf16 %v288
  %v353 = vunpack.c.l.bf16 %v289
  %v354 = vunpack.c.l.bf16 %v290
  %v355 = vunpack.c.l.bf16 %v291
  %v356 = vunpack.c.l.bf16 %v292
  %v357 = vunpack.c.l.bf16 %v293
  %v358 = vunpack.c.l.bf16 %v294
  %v359 = vunpack.c.l.bf16 %v295
  %v360 = vunpack.c.l.bf16 %v296
  %v361 = vunpack.c.l.bf16 %v297
  %v362 = vunpack.c.l.bf16 %v298
  %v363 = vunpack.c.l.bf16 %v299
  %v364 = vunpack.c.l.bf16 %v300
  %v365 = vunpack.c.l.bf16 %v301
  %v366 = vunpack.c.l.bf16 %v302
  %v367 = vunpack.c.l.bf16 %v303
  %v368 = vunpack.c.l.bf16 %v304
  %v369 = vunpack.c.l.bf16 %v305
  %v370 = vunpack.c.l.bf16 %v306
  %v371 = vunpack.c.l.bf16 %v307
  %v372 = vunpack.c.l.bf16 %v308
  %v373 = vunpack.c.l.bf16 %v309
  %v374 = vunpack.c.l.bf16 %v310
  %v375 = vunpack.c.l.bf16 %v311
  %v376 = vunpack.c.l.bf16 %v312
  %v377 = vunpack.c.l.bf16 %v313
  %v378 = vunpack.c.l.bf16 %v314
  %v379 = vunpack.c.l.bf16 %v315
  %v380 = vunpack.c.l.bf16 %v316
  %v381 = vunpack.c.l.bf16 %v317
  %v382 = vunpack.c.l.bf16 %v318
  %v383 = vunpack.c.l.bf16 %v319
  %v384 = vunpack.c.l.bf16 %v320
  %v385 = vunpack.c.l.bf16 %v321
  %v386 = vunpack.c.l.bf16 %v322
  %v387 = vunpack.c.l.bf16 %v323
  %v388 = vunpack.c.l.bf16 %v324
  %v389 = vunpack.c.l.bf16 %v325
  %v390 = vunpack.c.l.bf16 %v326
  %v391 = vunpack.c.l.bf16 %v327
  %v392 = vunpack.c.l.bf16 %v328
  %v393 = vunpack.c.l.bf16 %v329
  %v394 = vunpack.c.l.bf16 %v330
  %v395 = vunpack.c.l.bf16 %v331
  %v396 = vunpack.c.l.bf16 %v332
  %v397 = vunpack.c.l.bf16 %v333
  %v398 = vunpack.c.l.bf16 %v334
  %v399 = vunpack.c.l.bf16 %v335
  %v400 = vunpack.c.l.bf16 %v336
  %v401 = vunpack.c.l.bf16 %v337
  %v402 = vunpack.c.l.bf16 %v338
  %v403 = vunpack.c.l.bf16 %v339
  %v404 = vunpack.c.l.bf16 %v340
  %v405 = vunpack.c.l.bf16 %v341
  %v406 = vunpack.c.l.bf16 %v342
  %v407 = vunpack.c.l.bf16 %v343
  %v408 = vunpack.c.l.bf16 %v344
  %v409 = vadd.f32 %v217, %v345
  %v410 = vadd.f32 %v218, %v346
  %v411 = vadd.f32 %v219, %v347
  %v412 = vadd.f32 %v220, %v348
  %v413 = vadd.f32 %v221, %v349
  %v414 = vadd.f32 %v222, %v350
  %v415 = vadd.f32 %v223, %v351
  %v416 = vadd.f32 %v224, %v352
  %v417 = vadd.f32 %v225, %v353
  %v418 = vadd.f32 %v226, %v354
  %v419 = vadd.f32 %v227, %v355
  %v420 = vadd.f32 %v228, %v356
  %v421 = vadd.f32 %v229, %v357
  %v422 = vadd.f32 %v230, %v358
  %v423 = vadd.f32 %v231, %v359
  %v424 = vadd.f32 %v232, %v360
  %v425 = vadd.f32 %v233, %v361
  %v426 = vadd.f32 %v234, %v362
  %v427 = vadd.f32 %v235, %v363
  %v428 = vadd.f32 %v236, %v364
  %v429 = vadd.f32 %v237, %v365
  %v430 = vadd.f32 %v238, %v366
  %v431 = vadd.f32 %v239, %v367
  %v432 = vadd.f32 %v240, %v368
  %v433 = vadd.f32 %v241, %v369
  %v434 = vadd.f32 %v242, %v370
  %v435 = vadd.f32 %v243, %v371
  %v436 = vadd.f32 %v244, %v372
  %v437 = vadd.f32 %v245, %v373
  %v438 = vadd.f32 %v246, %v374
  %v439 = vadd.f32 %v247, %v375
  %v440 = vadd.f32 %v248, %v376
  %v441 = vadd.f32 %v249, %v377
  %v442 = vadd.f32 %v250, %v378
  %v443 = vadd.f32 %v251, %v379
  %v444 = vadd.f32 %v252, %v380
  %v445 = vadd.f32 %v253, %v381
  %v446 = vadd.f32 %v254, %v382
  %v447 = vadd.f32 %v255, %v383
  %v448 = vadd.f32 %v256, %v384
  %v449 = vadd.f32 %v257, %v385
  %v450 = vadd.f32 %v258, %v386
  %v451 = vadd.f32 %v259, %v387
  %v452 = vadd.f32 %v260, %v388
  %v453 = vadd.f32 %v261, %v389
  %v454 = vadd.f32 %v262, %v390
  %v455 = vadd.f32 %v263, %v391
  %v456 = vadd.f32 %v264, %v392
  %v457 = vadd.f32 %v265, %v393
  %v458 = vadd.f32 %v266, %v394
  %v459 = vadd.f32 %v267, %v395
  %v460 = vadd.f32 %v268, %v396
  %v461 = vadd.f32 %v269, %v397
  %v462 = vadd.f32 %v270, %v398
  %v463 = vadd.f32 %v271, %v399
  %v464 = vadd.f32 %v272, %v400
  %v465 = vadd.f32 %v273, %v401
  %v466 = vadd.f32 %v274, %v402
  %v467 = vadd.f32 %v275, %v403
  %v468 = vadd.f32 %v276, %v404
  %v469 = vadd.f32 %v277, %v405
  %v470 = vadd.f32 %v278, %v406
  %v471 = vadd.f32 %v279, %v407
  %v472 = vadd.f32 %v280, %v408
  %v473 = vmax.f32 %v409, 0.0
  %v474 = vmax.f32 %v410, 0.0
  %v475 = vmax.f32 %v411, 0.0
  %v476 = vmax.f32 %v412, 0.0
  %v477 = vmax.f32 %v413, 0.0
  %v478 = vmax.f32 %v414, 0.0
  %v479 = vmax.f32 %v415, 0.0
  %v480 = vmax.f32 %v416, 0.0
  %v481 = vmax.f32 %v417, 0.0
  %v482 = vmax.f32 %v418, 0.0
  %v483 = vmax.f32 %v419, 0.0
  %v484 = vmax.f32 %v420, 0.0
  %v485 = vmax.f32 %v421, 0.0
  %v486 = vmax.f32 %v422, 0.0
  %v487 = vmax.f32 %v423, 0.0
  %v488 = vmax.f32 %v424, 0.0
  %v489 = vmax.f32 %v425, 0.0
  %v490 = vmax.f32 %v426, 0.0
  %v491 = vmax.f32 %v427, 0.0
  %v492 = vmax.f32 %v428, 0.0
  %v493 = vmax.f32 %v429, 0.0
  %v494 = vmax.f32 %v430, 0.0
  %v495 = vmax.f32 %v431, 0.0
  %v496 = vmax.f32 %v432, 0.0
  %v497 = vmax.f32 %v433, 0.0
  %v498 = vmax.f32 %v434, 0.0
  %v499 = vmax.f32 %v435, 0.0
  %v500 = vmax.f32 %v436, 0.0
  %v501 = vmax.f32 %v437, 0.0
  %v502 = vmax.f32 %v438, 0.0
  %v503 = vmax.f32 %v439, 0.0
  %v504 = vmax.f32 %v440, 0.0
  %v505 = vmax.f32 %v441, 0.0
  %v506 = vmax.f32 %v442, 0.0
  %v507 = vmax.f32 %v443, 0.0
  %v508 = vmax.f32 %v444, 0.0
  %v509 = vmax.f32 %v445, 0.0
  %v510 = vmax.f32 %v446, 0.0
  %v511 = vmax.f32 %v447, 0.0
  %v512 = vmax.f32 %v448, 0.0
  %v513 = vmax.f32 %v449, 0.0
  %v514 = vmax.f32 %v450, 0.0
  %v515 = vmax.f32 %v451, 0.0
  %v516 = vmax.f32 %v452, 0.0
  %v517 = vmax.f32 %v453, 0.0
  %v518 = vmax.f32 %v454, 0.0
  %v519 = vmax.f32 %v455, 0.0
  %v520 = vmax.f32 %v456, 0.0
  %v521 = vmax.f32 %v457, 0.0
  %v522 = vmax.f32 %v458, 0.0
  %v523 = vmax.f32 %v459, 0.0
  %v524 = vmax.f32 %v460, 0.0
  %v525 = vmax.f32 %v461, 0.0
  %v526 = vmax.f32 %v462, 0.0
  %v527 = vmax.f32 %v463, 0.0
  %v528 = vmax.f32 %v464, 0.0
  %v529 = vmax.f32 %v465, 0.0
  %v530 = vmax.f32 %v466, 0.0
  %v531 = vmax.f32 %v467, 0.0
  %v532 = vmax.f32 %v468, 0.0
  %v533 = vmax.f32 %v469, 0.0
  %v534 = vmax.f32 %v470, 0.0
  %v535 = vmax.f32 %v471, 0.0
  %v536 = vmax.f32 %v472, 0.0
  %537 = vst [vmem:[%s4] sm:$0xff] %v473
  %538 = vst [vmem:[%s4 + $0x8] sm:$0xff] %v474
  %539 = vst [vmem:[%s4 + $0x10] sm:$0xff] %v475
  %540 = vst [vmem:[%s4 + $0x18] sm:$0xff] %v476
  %541 = vst [vmem:[%s4 + $0x20] sm:$0xff] %v477
  %542 = vst [vmem:[%s4 + $0x28] sm:$0xff] %v478
  %543 = vst [vmem:[%s4 + $0x30] sm:$0xff] %v479
  %544 = vst [vmem:[%s4 + $0x38] sm:$0xff] %v480
  %545 = vst [vmem:[%s4 + $0x40] sm:$0xff] %v481
  %546 = vst [vmem:[%s4 + $0x48] sm:$0xff] %v482
  %547 = vst [vmem:[%s4 + $0x50] sm:$0xff] %v483
  %548 = vst [vmem:[%s4 + $0x58] sm:$0xff] %v484
  %549 = vst [vmem:[%s4 + $0x60] sm:$0xff] %v485
  %550 = vst [vmem:[%s4 + $0x68] sm:$0xff] %v486
  %551 = vst [vmem:[%s4 + $0x70] sm:$0xff] %v487
  %552 = vst [vmem:[%s4 + $0x78] sm:$0xff] %v488
  %553 = vst [vmem:[%s4 + $0x80] sm:$0xff] %v489
  %554 = vst [vmem:[%s4 + $0x88] sm:$0xff] %v490
  %555 = vst [vmem:[%s4 + $0x90] sm:$0xff] %v491
  %556 = vst [vmem:[%s4 + $0x98] sm:$0xff] %v492
  %557 = vst [vmem:[%s4 + $0xa0] sm:$0xff] %v493
  %558 = vst [vmem:[%s4 + $0xa8] sm:$0xff] %v494
  %559 = vst [vmem:[%s4 + $0xb0] sm:$0xff] %v495
  %560 = vst [vmem:[%s4 + $0xb8] sm:$0xff] %v496
  %561 = vst [vmem:[%s4 + $0xc0] sm:$0xff] %v497
  %562 = vst [vmem:[%s4 + $0xc8] sm:$0xff] %v498
  %563 = vst [vmem:[%s4 + $0xd0] sm:$0xff] %v499
  %564 = vst [vmem:[%s4 + $0xd8] sm:$0xff] %v500
  %565 = vst [vmem:[%s4 + $0xe0] sm:$0xff] %v501
  %566 = vst [vmem:[%s4 + $0xe8] sm:$0xff] %v502
  %567 = vst [vmem:[%s4 + $0xf0] sm:$0xff] %v503
  %568 = vst [vmem:[%s4 + $0xf8] sm:$0xff] %v504
  %569 = vst [vmem:[%s4 + $0x100] sm:$0xff] %v505
  %570 = vst [vmem:[%s4 + $0x108] sm:$0xff] %v506
  %571 = vst [vmem:[%s4 + $0x110] sm:$0xff] %v507
  %572 = vst [vmem:[%s4 + $0x118] sm:$0xff] %v508
  %573 = vst [vmem:[%s4 + $0x120] sm:$0xff] %v509
  %574 = vst [vmem:[%s4 + $0x128] sm:$0xff] %v510
  %575 = vst [vmem:[%s4 + $0x130] sm:$0xff] %v511
  %576 = vst [vmem:[%s4 + $0x138] sm:$0xff] %v512
  %577 = vst [vmem:[%s4 + $0x140] sm:$0xff] %v513
  %578 = vst [vmem:[%s4 + $0x148] sm:$0xff] %v514
  %579 = vst [vmem:[%s4 + $0x150] sm:$0xff] %v515
  %580 = vst [vmem:[%s4 + $0x158] sm:$0xff] %v516
  %581 = vst [vmem:[%s4 + $0x160] sm:$0xff] %v517
  %582 = vst [vmem:[%s4 + $0x168] sm:$0xff] %v518
  %583 = vst [vmem:[%s4 + $0x170] sm:$0xff] %v519
  %584 = vst [vmem:[%s4 + $0x178] sm:$0xff] %v520
  %585 = vst [vmem:[%s4 + $0x180] sm:$0xff] %v521
  %586 = vst [vmem:[%s4 + $0x188] sm:$0xff] %v522
  %587 = vst [vmem:[%s4 + $0x190] sm:$0xff] %v523
  %588 = vst [vmem:[%s4 + $0x198] sm:$0xff] %v524
  %589 = vst [vmem:[%s4 + $0x1a0] sm:$0xff] %v525
  %590 = vst [vmem:[%s4 + $0x1a8] sm:$0xff] %v526
  %591 = vst [vmem:[%s4 + $0x1b0] sm:$0xff] %v527
  %592 = vst [vmem:[%s4 + $0x1b8] sm:$0xff] %v528
  %593 = vst [vmem:[%s4 + $0x1c0] sm:$0xff] %v529
  %594 = vst [vmem:[%s4 + $0x1c8] sm:$0xff] %v530
  %595 = vst [vmem:[%s4 + $0x1d0] sm:$0xff] %v531
  %596 = vst [vmem:[%s4 + $0x1d8] sm:$0xff] %v532
  %597 = vst [vmem:[%s4 + $0x1e0] sm:$0xff] %v533
  %598 = vst [vmem:[%s4 + $0x1e8] sm:$0xff] %v534
  %599 = vst [vmem:[%s4 + $0x1f0] sm:$0xff] %v535
  %600 = vst [vmem:[%s4 + $0x1f8] sm:$0xff] %v536
  // Predicated region
  $region18: #{bottleneck_forward.7} parent=0 // pred_check
    _
  $region19: #{bottleneck_forward.7} parent=0 // pred_check_branch
    %602 = sbr.rel (0) target = $region21
  $region20: #{bottleneck_forward.7} parent=0 // pred_region
    _
  $region21: #{bottleneck_forward.7} parent=0 // pred_fallthru
    _
  // Predicated region
  $region22: #{bottleneck_forward.7} parent=0 // pred_check
    _
  $region23: #{bottleneck_forward.7} parent=0 // pred_check_branch
    %604 = sbr.rel (0) target = $region25
  $region24: #{bottleneck_forward.7} parent=0 // pred_region
    _
  $region25: #{bottleneck_forward.7} parent=0 // pred_fallthru
    _

// kernel: bottleneck_forward.4
$region0: #{bottleneck_forward.4}
  #allocation0 [shape = 'u32[]', space=smem, size = 0x4, offset = 0x4, fixed_abs, tag = 'smem constant byte address 0x4 - core index']
  #allocation1 [shape = 'u32[72,128]{1,0:T(1,128)}', space=vmem, size = 0x9000, scoped, tag = 'internal scratch']
  %s0 = inlined_call_operand.vmem [shape: bf16[512,128], index: 0, kind: input, shape index: {}]
  %s1 = inlined_call_operand.vmem [shape: bf16[128,128], index: 1, kind: input, shape index: {}]
  %s2 = inlined_call_operand.vmem [shape: bf16[512,128], index: 2, kind: output, shape index: {0}]
  %s3 = inlined_call_operand.vmem [shape: f32[1,8,128], index: 3, kind: output, shape index: {1}]
  %4 = xla_tuple %s2, %s3
  %s5 = sld [smem:[#allocation0]]
  $region26: #{bottleneck_forward.4} parent=0
    _
  %s7 = ssub.s32 1, %s5
  %s8 = scalar_select 0, %s7, %s5
  // Predicated region
  $region2: #{bottleneck_forward.4} parent=0 // pred_check
    _
  $region3: #{bottleneck_forward.4} parent=0 // pred_check_branch
    %10 = sbr.rel (0) target = $region5
  $region4: #{bottleneck_forward.4} parent=0 // pred_region
    _
  $region5: #{bottleneck_forward.4} parent=0 // pred_fallthru
    _
  // Predicated region
  $region6: #{bottleneck_forward.4} parent=0 // pred_check
    _
  $region7: #{bottleneck_forward.4} parent=0 // pred_check_branch
    %12 = sbr.rel (0) target = $region9
  $region8: #{bottleneck_forward.4} parent=0 // pred_region
    _
  $region9: #{bottleneck_forward.4} parent=0 // pred_fallthru
    _
  %v13 = vld [vmem:[%s0] sm:$0xf]
  %v14 = vld [vmem:[%s0 + $0x4] sm:$0xf]
  %v15 = vld [vmem:[%s0 + $0x8] sm:$0xf]
  %v16 = vld [vmem:[%s0 + $0xc] sm:$0xf]
  %v17 = vld [vmem:[%s0 + $0x10] sm:$0xf]
  %v18 = vld [vmem:[%s0 + $0x14] sm:$0xf]
  %v19 = vld [vmem:[%s0 + $0x18] sm:$0xf]
  %v20 = vld [vmem:[%s0 + $0x1c] sm:$0xf]
  %v21 = vld [vmem:[%s0 + $0x20] sm:$0xf]
  %v22 = vld [vmem:[%s0 + $0x24] sm:$0xf]
  %v23 = vld [vmem:[%s0 + $0x28] sm:$0xf]
  %v24 = vld [vmem:[%s0 + $0x2c] sm:$0xf]
  %v25 = vld [vmem:[%s0 + $0x30] sm:$0xf]
  %v26 = vld [vmem:[%s0 + $0x34] sm:$0xf]
  %v27 = vld [vmem:[%s0 + $0x38] sm:$0xf]
  %v28 = vld [vmem:[%s0 + $0x3c] sm:$0xf]
  %v29 = vld [vmem:[%s0 + $0x40] sm:$0xf]
  %v30 = vld [vmem:[%s0 + $0x44] sm:$0xf]
  %v31 = vld [vmem:[%s0 + $0x48] sm:$0xf]
  %v32 = vld [vmem:[%s0 + $0x4c] sm:$0xf]
  %v33 = vld [vmem:[%s0 + $0x50] sm:$0xf]
  %v34 = vld [vmem:[%s0 + $0x54] sm:$0xf]
  %v35 = vld [vmem:[%s0 + $0x58] sm:$0xf]
  %v36 = vld [vmem:[%s0 + $0x5c] sm:$0xf]
  %v37 = vld [vmem:[%s0 + $0x60] sm:$0xf]
  %v38 = vld [vmem:[%s0 + $0x64] sm:$0xf]
  %v39 = vld [vmem:[%s0 + $0x68] sm:$0xf]
  %v40 = vld [vmem:[%s0 + $0x6c] sm:$0xf]
  %v41 = vld [vmem:[%s0 + $0x70] sm:$0xf]
  %v42 = vld [vmem:[%s0 + $0x74] sm:$0xf]
  %v43 = vld [vmem:[%s0 + $0x78] sm:$0xf]
  %v44 = vld [vmem:[%s0 + $0x7c] sm:$0xf]
  %v45 = vld [vmem:[%s0 + $0x80] sm:$0xf]
  %v46 = vld [vmem:[%s0 + $0x84] sm:$0xf]
  %v47 = vld [vmem:[%s0 + $0x88] sm:$0xf]
  %v48 = vld [vmem:[%s0 + $0x8c] sm:$0xf]
  %v49 = vld [vmem:[%s0 + $0x90] sm:$0xf]
  %v50 = vld [vmem:[%s0 + $0x94] sm:$0xf]
  %v51 = vld [vmem:[%s0 + $0x98] sm:$0xf]
  %v52 = vld [vmem:[%s0 + $0x9c] sm:$0xf]
  %v53 = vld [vmem:[%s0 + $0xa0] sm:$0xf]
  %v54 = vld [vmem:[%s0 + $0xa4] sm:$0xf]
  %v55 = vld [vmem:[%s0 + $0xa8] sm:$0xf]
  %v56 = vld [vmem:[%s0 + $0xac] sm:$0xf]
  %v57 = vld [vmem:[%s0 + $0xb0] sm:$0xf]
  %v58 = vld [vmem:[%s0 + $0xb4] sm:$0xf]
  %v59 = vld [vmem:[%s0 + $0xb8] sm:$0xf]
  %v60 = vld [vmem:[%s0 + $0xbc] sm:$0xf]
  %v61 = vld [vmem:[%s0 + $0xc0] sm:$0xf]
  %v62 = vld [vmem:[%s0 + $0xc4] sm:$0xf]
  %v63 = vld [vmem:[%s0 + $0xc8] sm:$0xf]
  %v64 = vld [vmem:[%s0 + $0xcc] sm:$0xf]
  %v65 = vld [vmem:[%s0 + $0xd0] sm:$0xf]
  %v66 = vld [vmem:[%s0 + $0xd4] sm:$0xf]
  %v67 = vld [vmem:[%s0 + $0xd8] sm:$0xf]
  %v68 = vld [vmem:[%s0 + $0xdc] sm:$0xf]
  %v69 = vld [vmem:[%s0 + $0xe0] sm:$0xf]
  %v70 = vld [vmem:[%s0 + $0xe4] sm:$0xf]
  %v71 = vld [vmem:[%s0 + $0xe8] sm:$0xf]
  %v72 = vld [vmem:[%s0 + $0xec] sm:$0xf]
  %v73 = vld [vmem:[%s0 + $0xf0] sm:$0xf]
  %v74 = vld [vmem:[%s0 + $0xf4] sm:$0xf]
  %v75 = vld [vmem:[%s0 + $0xf8] sm:$0xf]
  %v76 = vld [vmem:[%s0 + $0xfc] sm:$0xf]
  %v77 = vld [vmem:[%s1] sm:$0xf]
  %v78 = vld [vmem:[%s1 + $0x4] sm:$0xf]
  %v79 = vld [vmem:[%s1 + $0x8] sm:$0xf]
  %v80 = vld [vmem:[%s1 + $0xc] sm:$0xf]
  %v81 = vld [vmem:[%s1 + $0x10] sm:$0xf]
  %v82 = vld [vmem:[%s1 + $0x14] sm:$0xf]
  %v83 = vld [vmem:[%s1 + $0x18] sm:$0xf]
  %v84 = vld [vmem:[%s1 + $0x1c] sm:$0xf]
  %v85 = vld [vmem:[%s1 + $0x20] sm:$0xf]
  %v86 = vld [vmem:[%s1 + $0x24] sm:$0xf]
  %v87 = vld [vmem:[%s1 + $0x28] sm:$0xf]
  %v88 = vld [vmem:[%s1 + $0x2c] sm:$0xf]
  %v89 = vld [vmem:[%s1 + $0x30] sm:$0xf]
  %v90 = vld [vmem:[%s1 + $0x34] sm:$0xf]
  %v91 = vld [vmem:[%s1 + $0x38] sm:$0xf]
  %v92 = vld [vmem:[%s1 + $0x3c] sm:$0xf]
  %v157 = vunpack.c.l.b16 %v13
  %v158 = vunpack.c.l.b16 %v14
  %v159 = vunpack.c.l.b16 %v15
  %v160 = vunpack.c.l.b16 %v16
  %v161 = vunpack.c.l.b16 %v17
  %v162 = vunpack.c.l.b16 %v18
  %v163 = vunpack.c.l.b16 %v19
  %v164 = vunpack.c.l.b16 %v20
  %v165 = vunpack.c.l.b16 %v21
  %v166 = vunpack.c.l.b16 %v22
  %v167 = vunpack.c.l.b16 %v23
  %v168 = vunpack.c.l.b16 %v24
  %v169 = vunpack.c.l.b16 %v25
  %v170 = vunpack.c.l.b16 %v26
  %v171 = vunpack.c.l.b16 %v27
  %v172 = vunpack.c.l.b16 %v28
  %v173 = vunpack.c.l.b16 %v29
  %v174 = vunpack.c.l.b16 %v30
  %v175 = vunpack.c.l.b16 %v31
  %v176 = vunpack.c.l.b16 %v32
  %v177 = vunpack.c.l.b16 %v33
  %v178 = vunpack.c.l.b16 %v34
  %v179 = vunpack.c.l.b16 %v35
  %v180 = vunpack.c.l.b16 %v36
  %v181 = vunpack.c.l.b16 %v37
  %v182 = vunpack.c.l.b16 %v38
  %v183 = vunpack.c.l.b16 %v39
  %v184 = vunpack.c.l.b16 %v40
  %v185 = vunpack.c.l.b16 %v41
  %v186 = vunpack.c.l.b16 %v42
  %v187 = vunpack.c.l.b16 %v43
  %v188 = vunpack.c.l.b16 %v44
  %v189 = vunpack.c.l.b16 %v45
  %v190 = vunpack.c.l.b16 %v46
  %v191 = vunpack.c.l.b16 %v47
  %v192 = vunpack.c.l.b16 %v48
  %v193 = vunpack.c.l.b16 %v49
  %v194 = vunpack.c.l.b16 %v50
  %v195 = vunpack.c.l.b16 %v51
  %v196 = vunpack.c.l.b16 %v52
  %v197 = vunpack.c.l.b16 %v53
  %v198 = vunpack.c.l.b16 %v54
  %v199 = vunpack.c.l.b16 %v55
  %v200 = vunpack.c.l.b16 %v56
  %v201 = vunpack.c.l.b16 %v57
  %v202 = vunpack.c.l.b16 %v58
  %v203 = vunpack.c.l.b16 %v59
  %v204 = vunpack.c.l.b16 %v60
  %v205 = vunpack.c.l.b16 %v61
  %v206 = vunpack.c.l.b16 %v62
  %v207 = vunpack.c.l.b16 %v63
  %v208 = vunpack.c.l.b16 %v64
  %v209 = vunpack.c.l.b16 %v65
  %v210 = vunpack.c.l.b16 %v66
  %v211 = vunpack.c.l.b16 %v67
  %v212 = vunpack.c.l.b16 %v68
  %v213 = vunpack.c.l.b16 %v69
  %v214 = vunpack.c.l.b16 %v70
  %v215 = vunpack.c.l.b16 %v71
  %v216 = vunpack.c.l.b16 %v72
  %v217 = vunpack.c.l.b16 %v73
  %v218 = vunpack.c.l.b16 %v74
  %v219 = vunpack.c.l.b16 %v75
  %v220 = vunpack.c.l.b16 %v76
  %v221 = vpack.c.b16 %v158, %v157
  %v222 = vpack.c.b16 %v160, %v159
  %v223 = vpack.c.b16 %v162, %v161
  %v224 = vpack.c.b16 %v164, %v163
  %v225 = vpack.c.b16 %v166, %v165
  %v226 = vpack.c.b16 %v168, %v167
  %v227 = vpack.c.b16 %v170, %v169
  %v228 = vpack.c.b16 %v172, %v171
  %v229 = vpack.c.b16 %v174, %v173
  %v230 = vpack.c.b16 %v176, %v175
  %v231 = vpack.c.b16 %v178, %v177
  %v232 = vpack.c.b16 %v180, %v179
  %v233 = vpack.c.b16 %v182, %v181
  %v234 = vpack.c.b16 %v184, %v183
  %v235 = vpack.c.b16 %v186, %v185
  %v236 = vpack.c.b16 %v188, %v187
  %v237 = vpack.c.b16 %v190, %v189
  %v238 = vpack.c.b16 %v192, %v191
  %v239 = vpack.c.b16 %v194, %v193
  %v240 = vpack.c.b16 %v196, %v195
  %v241 = vpack.c.b16 %v198, %v197
  %v242 = vpack.c.b16 %v200, %v199
  %v243 = vpack.c.b16 %v202, %v201
  %v244 = vpack.c.b16 %v204, %v203
  %v245 = vpack.c.b16 %v206, %v205
  %v246 = vpack.c.b16 %v208, %v207
  %v247 = vpack.c.b16 %v210, %v209
  %v248 = vpack.c.b16 %v212, %v211
  %v249 = vpack.c.b16 %v214, %v213
  %v250 = vpack.c.b16 %v216, %v215
  %v251 = vpack.c.b16 %v218, %v217
  %v252 = vpack.c.b16 %v220, %v219
  %v301 = vunpack.c.l.b16 %v77
  %v302 = vunpack.c.l.b16 %v78
  %v303 = vunpack.c.l.b16 %v79
  %v304 = vunpack.c.l.b16 %v80
  %v305 = vunpack.c.l.b16 %v81
  %v306 = vunpack.c.l.b16 %v82
  %v307 = vunpack.c.l.b16 %v83
  %v308 = vunpack.c.l.b16 %v84
  %v309 = vunpack.c.l.b16 %v85
  %v310 = vunpack.c.l.b16 %v86
  %v311 = vunpack.c.l.b16 %v87
  %v312 = vunpack.c.l.b16 %v88
  %v313 = vunpack.c.l.b16 %v89
  %v314 = vunpack.c.l.b16 %v90
  %v315 = vunpack.c.l.b16 %v91
  %v316 = vunpack.c.l.b16 %v92
  %v317 = vpack.c.b16 %v302, %v301
  %v318 = vpack.c.b16 %v304, %v303
  %v319 = vpack.c.b16 %v306, %v305
  %v320 = vpack.c.b16 %v308, %v307
  %v321 = vpack.c.b16 %v310, %v309
  %v322 = vpack.c.b16 %v312, %v311
  %v323 = vpack.c.b16 %v314, %v313
  %v324 = vpack.c.b16 %v316, %v315
  %333 = vmatpush.bf16.msra.mxu0 %v324
  %334 = vmatpush.bf16.msra.mxu0 %v323
  %335 = vmatpush.bf16.msra.mxu0 %v322
  %336 = vmatpush.bf16.msra.mxu0 %v321
  %337 = vmatpush.bf16.msra.mxu0 %v320
  %338 = vmatpush.bf16.msra.mxu0 %v319
  %339 = vmatpush.bf16.msra.mxu0 %v318
  %340 = vmatpush.bf16.msra.mxu0 %v317
  %341 = vmatmul.bf16.gmra.mxu0 %v221
  %v342 = vpop.f32.mrf.mxu0
  %v343 = vadd.f32 0.0, %v342
  %v344 = vpop.f32.mrf.mxu0
  %v345 = vadd.f32 0.0, %v344
  %346 = vmatmul.bf16.gmra.mxu0 %v222
  %v347 = vpop.f32.mrf.mxu0
  %v348 = vadd.f32 0.0, %v347
  %v349 = vpop.f32.mrf.mxu0
  %v350 = vadd.f32 0.0, %v349
  %351 = vmatmul.bf16.gmra.mxu0 %v223
  %v352 = vpop.f32.mrf.mxu0
  %v353 = vadd.f32 0.0, %v352
  %v354 = vpop.f32.mrf.mxu0
  %v355 = vadd.f32 0.0, %v354
  %356 = vmatmul.bf16.gmra.mxu0 %v224
  %v357 = vpop.f32.mrf.mxu0
  %v358 = vadd.f32 0.0, %v357
  %v359 = vpop.f32.mrf.mxu0
  %v360 = vadd.f32 0.0, %v359
  %361 = vmatmul.bf16.gmra.mxu0 %v225
  %v362 = vpop.f32.mrf.mxu0
  %v363 = vadd.f32 0.0, %v362
  %v364 = vpop.f32.mrf.mxu0
  %v365 = vadd.f32 0.0, %v364
  %366 = vmatmul.bf16.gmra.mxu0 %v226
  %v367 = vpop.f32.mrf.mxu0
  %v368 = vadd.f32 0.0, %v367
  %v369 = vpop.f32.mrf.mxu0
  %v370 = vadd.f32 0.0, %v369
  %371 = vmatmul.bf16.gmra.mxu0 %v227
  %v372 = vpop.f32.mrf.mxu0
  %v373 = vadd.f32 0.0, %v372
  %v374 = vpop.f32.mrf.mxu0
  %v375 = vadd.f32 0.0, %v374
  %376 = vmatmul.bf16.gmra.mxu0 %v228
  %v377 = vpop.f32.mrf.mxu0
  %v378 = vadd.f32 0.0, %v377
  %v379 = vpop.f32.mrf.mxu0
  %v380 = vadd.f32 0.0, %v379
  %381 = vmatmul.bf16.gmra.mxu0 %v229
  %v382 = vpop.f32.mrf.mxu0
  %v383 = vadd.f32 0.0, %v382
  %v384 = vpop.f32.mrf.mxu0
  %v385 = vadd.f32 0.0, %v384
  %386 = vmatmul.bf16.gmra.mxu0 %v230
  %v387 = vpop.f32.mrf.mxu0
  %v388 = vadd.f32 0.0, %v387
  %v389 = vpop.f32.mrf.mxu0
  %v390 = vadd.f32 0.0, %v389
  %391 = vmatmul.bf16.gmra.mxu0 %v231
  %v392 = vpop.f32.mrf.mxu0
  %v393 = vadd.f32 0.0, %v392
  %v394 = vpop.f32.mrf.mxu0
  %v395 = vadd.f32 0.0, %v394
  %396 = vmatmul.bf16.gmra.mxu0 %v232
  %v397 = vpop.f32.mrf.mxu0
  %v398 = vadd.f32 0.0, %v397
  %v399 = vpop.f32.mrf.mxu0
  %v400 = vadd.f32 0.0, %v399
  %401 = vmatmul.bf16.gmra.mxu0 %v233
  %v402 = vpop.f32.mrf.mxu0
  %v403 = vadd.f32 0.0, %v402
  %v404 = vpop.f32.mrf.mxu0
  %v405 = vadd.f32 0.0, %v404
  %406 = vmatmul.bf16.gmra.mxu0 %v234
  %v407 = vpop.f32.mrf.mxu0
  %v408 = vadd.f32 0.0, %v407
  %v409 = vpop.f32.mrf.mxu0
  %v410 = vadd.f32 0.0, %v409
  %411 = vmatmul.bf16.gmra.mxu0 %v235
  %v412 = vpop.f32.mrf.mxu0
  %v413 = vadd.f32 0.0, %v412
  %v414 = vpop.f32.mrf.mxu0
  %v415 = vadd.f32 0.0, %v414
  %416 = vmatmul.bf16.gmra.mxu0 %v236
  %v417 = vpop.f32.mrf.mxu0
  %v418 = vadd.f32 0.0, %v417
  %v419 = vpop.f32.mrf.mxu0
  %v420 = vadd.f32 0.0, %v419
  %421 = vmatmul.bf16.gmra.mxu0 %v237
  %v422 = vpop.f32.mrf.mxu0
  %v423 = vadd.f32 0.0, %v422
  %v424 = vpop.f32.mrf.mxu0
  %v425 = vadd.f32 0.0, %v424
  %426 = vmatmul.bf16.gmra.mxu0 %v238
  %v427 = vpop.f32.mrf.mxu0
  %v428 = vadd.f32 0.0, %v427
  %v429 = vpop.f32.mrf.mxu0
  %v430 = vadd.f32 0.0, %v429
  %431 = vmatmul.bf16.gmra.mxu0 %v239
  %v432 = vpop.f32.mrf.mxu0
  %v433 = vadd.f32 0.0, %v432
  %v434 = vpop.f32.mrf.mxu0
  %v435 = vadd.f32 0.0, %v434
  %436 = vmatmul.bf16.gmra.mxu0 %v240
  %v437 = vpop.f32.mrf.mxu0
  %v438 = vadd.f32 0.0, %v437
  %v439 = vpop.f32.mrf.mxu0
  %v440 = vadd.f32 0.0, %v439
  %441 = vmatmul.bf16.gmra.mxu0 %v241
  %v442 = vpop.f32.mrf.mxu0
  %v443 = vadd.f32 0.0, %v442
  %v444 = vpop.f32.mrf.mxu0
  %v445 = vadd.f32 0.0, %v444
  %446 = vmatmul.bf16.gmra.mxu0 %v242
  %v447 = vpop.f32.mrf.mxu0
  %v448 = vadd.f32 0.0, %v447
  %v449 = vpop.f32.mrf.mxu0
  %v450 = vadd.f32 0.0, %v449
  %451 = vmatmul.bf16.gmra.mxu0 %v243
  %v452 = vpop.f32.mrf.mxu0
  %v453 = vadd.f32 0.0, %v452
  %v454 = vpop.f32.mrf.mxu0
  %v455 = vadd.f32 0.0, %v454
  %456 = vmatmul.bf16.gmra.mxu0 %v244
  %v457 = vpop.f32.mrf.mxu0
  %v458 = vadd.f32 0.0, %v457
  %v459 = vpop.f32.mrf.mxu0
  %v460 = vadd.f32 0.0, %v459
  %461 = vmatmul.bf16.gmra.mxu0 %v245
  %v462 = vpop.f32.mrf.mxu0
  %v463 = vadd.f32 0.0, %v462
  %v464 = vpop.f32.mrf.mxu0
  %v465 = vadd.f32 0.0, %v464
  %466 = vmatmul.bf16.gmra.mxu0 %v246
  %v467 = vpop.f32.mrf.mxu0
  %v468 = vadd.f32 0.0, %v467
  %v469 = vpop.f32.mrf.mxu0
  %v470 = vadd.f32 0.0, %v469
  %471 = vmatmul.bf16.gmra.mxu0 %v247
  %v472 = vpop.f32.mrf.mxu0
  %v473 = vadd.f32 0.0, %v472
  %v474 = vpop.f32.mrf.mxu0
  %v475 = vadd.f32 0.0, %v474
  %476 = vmatmul.bf16.gmra.mxu0 %v248
  %v477 = vpop.f32.mrf.mxu0
  %v478 = vadd.f32 0.0, %v477
  %v479 = vpop.f32.mrf.mxu0
  %v480 = vadd.f32 0.0, %v479
  %481 = vmatmul.bf16.gmra.mxu0 %v249
  %v482 = vpop.f32.mrf.mxu0
  %v483 = vadd.f32 0.0, %v482
  %v484 = vpop.f32.mrf.mxu0
  %v485 = vadd.f32 0.0, %v484
  %486 = vmatmul.bf16.gmra.mxu0 %v250
  %v487 = vpop.f32.mrf.mxu0
  %v488 = vadd.f32 0.0, %v487
  %v489 = vpop.f32.mrf.mxu0
  %v490 = vadd.f32 0.0, %v489
  %491 = vmatmul.bf16.gmra.mxu0 %v251
  %v492 = vpop.f32.mrf.mxu0
  %v493 = vadd.f32 0.0, %v492
  %v494 = vpop.f32.mrf.mxu0
  %v495 = vadd.f32 0.0, %v494
  %496 = vmatmul.bf16.gmra.mxu0 %v252
  %v497 = vpop.f32.mrf.mxu0
  %v498 = vadd.f32 0.0, %v497
  %v499 = vpop.f32.mrf.mxu0
  %v500 = vadd.f32 0.0, %v499
  %501 = vdwg.mxu0
  %v502 = vpack.c.bf16 %v343, %v343
  %v503 = vpack.c.bf16 %v345, %v345
  %v504 = vpack.c.bf16 %v348, %v348
  %v505 = vpack.c.bf16 %v350, %v350
  %v506 = vpack.c.bf16 %v353, %v353
  %v507 = vpack.c.bf16 %v355, %v355
  %v508 = vpack.c.bf16 %v358, %v358
  %v509 = vpack.c.bf16 %v360, %v360
  %v510 = vpack.c.bf16 %v363, %v363
  %v511 = vpack.c.bf16 %v365, %v365
  %v512 = vpack.c.bf16 %v368, %v368
  %v513 = vpack.c.bf16 %v370, %v370
  %v514 = vpack.c.bf16 %v373, %v373
  %v515 = vpack.c.bf16 %v375, %v375
  %v516 = vpack.c.bf16 %v378, %v378
  %v517 = vpack.c.bf16 %v380, %v380
  %v518 = vpack.c.bf16 %v383, %v383
  %v519 = vpack.c.bf16 %v385, %v385
  %v520 = vpack.c.bf16 %v388, %v388
  %v521 = vpack.c.bf16 %v390, %v390
  %v522 = vpack.c.bf16 %v393, %v393
  %v523 = vpack.c.bf16 %v395, %v395
  %v524 = vpack.c.bf16 %v398, %v398
  %v525 = vpack.c.bf16 %v400, %v400
  %v526 = vpack.c.bf16 %v403, %v403
  %v527 = vpack.c.bf16 %v405, %v405
  %v528 = vpack.c.bf16 %v408, %v408
  %v529 = vpack.c.bf16 %v410, %v410
  %v530 = vpack.c.bf16 %v413, %v413
  %v531 = vpack.c.bf16 %v415, %v415
  %v532 = vpack.c.bf16 %v418, %v418
  %v533 = vpack.c.bf16 %v420, %v420
  %v534 = vpack.c.bf16 %v423, %v423
  %v535 = vpack.c.bf16 %v425, %v425
  %v536 = vpack.c.bf16 %v428, %v428
  %v537 = vpack.c.bf16 %v430, %v430
  %v538 = vpack.c.bf16 %v433, %v433
  %v539 = vpack.c.bf16 %v435, %v435
  %v540 = vpack.c.bf16 %v438, %v438
  %v541 = vpack.c.bf16 %v440, %v440
  %v542 = vpack.c.bf16 %v443, %v443
  %v543 = vpack.c.bf16 %v445, %v445
  %v544 = vpack.c.bf16 %v448, %v448
  %v545 = vpack.c.bf16 %v450, %v450
  %v546 = vpack.c.bf16 %v453, %v453
  %v547 = vpack.c.bf16 %v455, %v455
  %v548 = vpack.c.bf16 %v458, %v458
  %v549 = vpack.c.bf16 %v460, %v460
  %v550 = vpack.c.bf16 %v463, %v463
  %v551 = vpack.c.bf16 %v465, %v465
  %v552 = vpack.c.bf16 %v468, %v468
  %v553 = vpack.c.bf16 %v470, %v470
  %v554 = vpack.c.bf16 %v473, %v473
  %v555 = vpack.c.bf16 %v475, %v475
  %v556 = vpack.c.bf16 %v478, %v478
  %v557 = vpack.c.bf16 %v480, %v480
  %v558 = vpack.c.bf16 %v483, %v483
  %v559 = vpack.c.bf16 %v485, %v485
  %v560 = vpack.c.bf16 %v488, %v488
  %v561 = vpack.c.bf16 %v490, %v490
  %v562 = vpack.c.bf16 %v493, %v493
  %v563 = vpack.c.bf16 %v495, %v495
  %v564 = vpack.c.bf16 %v498, %v498
  %v565 = vpack.c.bf16 %v500, %v500
  %566 = vst [vmem:[%s2] sm:$0xf] %v502
  %567 = vst [vmem:[%s2 + $0x4] sm:$0xf] %v503
  %568 = vst [vmem:[%s2 + $0x8] sm:$0xf] %v504
  %569 = vst [vmem:[%s2 + $0xc] sm:$0xf] %v505
  %570 = vst [vmem:[%s2 + $0x10] sm:$0xf] %v506
  %571 = vst [vmem:[%s2 + $0x14] sm:$0xf] %v507
  %572 = vst [vmem:[%s2 + $0x18] sm:$0xf] %v508
  %573 = vst [vmem:[%s2 + $0x1c] sm:$0xf] %v509
  %574 = vst [vmem:[%s2 + $0x20] sm:$0xf] %v510
  %575 = vst [vmem:[%s2 + $0x24] sm:$0xf] %v511
  %576 = vst [vmem:[%s2 + $0x28] sm:$0xf] %v512
  %577 = vst [vmem:[%s2 + $0x2c] sm:$0xf] %v513
  %578 = vst [vmem:[%s2 + $0x30] sm:$0xf] %v514
  %579 = vst [vmem:[%s2 + $0x34] sm:$0xf] %v515
  %580 = vst [vmem:[%s2 + $0x38] sm:$0xf] %v516
  %581 = vst [vmem:[%s2 + $0x3c] sm:$0xf] %v517
  %582 = vst [vmem:[%s2 + $0x40] sm:$0xf] %v518
  %583 = vst [vmem:[%s2 + $0x44] sm:$0xf] %v519
  %584 = vst [vmem:[%s2 + $0x48] sm:$0xf] %v520
  %585 = vst [vmem:[%s2 + $0x4c] sm:$0xf] %v521
  %586 = vst [vmem:[%s2 + $0x50] sm:$0xf] %v522
  %587 = vst [vmem:[%s2 + $0x54] sm:$0xf] %v523
  %588 = vst [vmem:[%s2 + $0x58] sm:$0xf] %v524
  %589 = vst [vmem:[%s2 + $0x5c] sm:$0xf] %v525
  %590 = vst [vmem:[%s2 + $0x60] sm:$0xf] %v526
  %591 = vst [vmem:[%s2 + $0x64] sm:$0xf] %v527
  %592 = vst [vmem:[%s2 + $0x68] sm:$0xf] %v528
  %593 = vst [vmem:[%s2 + $0x6c] sm:$0xf] %v529
  %594 = vst [vmem:[%s2 + $0x70] sm:$0xf] %v530
  %595 = vst [vmem:[%s2 + $0x74] sm:$0xf] %v531
  %596 = vst [vmem:[%s2 + $0x78] sm:$0xf] %v532
  %597 = vst [vmem:[%s2 + $0x7c] sm:$0xf] %v533
  %598 = vst [vmem:[%s2 + $0x80] sm:$0xf] %v534
  %599 = vst [vmem:[%s2 + $0x84] sm:$0xf] %v535
  %600 = vst [vmem:[%s2 + $0x88] sm:$0xf] %v536
  %601 = vst [vmem:[%s2 + $0x8c] sm:$0xf] %v537
  %602 = vst [vmem:[%s2 + $0x90] sm:$0xf] %v538
  %603 = vst [vmem:[%s2 + $0x94] sm:$0xf] %v539
  %604 = vst [vmem:[%s2 + $0x98] sm:$0xf] %v540
  %605 = vst [vmem:[%s2 + $0x9c] sm:$0xf] %v541
  %606 = vst [vmem:[%s2 + $0xa0] sm:$0xf] %v542
  %607 = vst [vmem:[%s2 + $0xa4] sm:$0xf] %v543
  %608 = vst [vmem:[%s2 + $0xa8] sm:$0xf] %v544
  %609 = vst [vmem:[%s2 + $0xac] sm:$0xf] %v545
  %610 = vst [vmem:[%s2 + $0xb0] sm:$0xf] %v546
  %611 = vst [vmem:[%s2 + $0xb4] sm:$0xf] %v547
  %612 = vst [vmem:[%s2 + $0xb8] sm:$0xf] %v548
  %613 = vst [vmem:[%s2 + $0xbc] sm:$0xf] %v549
  %614 = vst [vmem:[%s2 + $0xc0] sm:$0xf] %v550
  %615 = vst [vmem:[%s2 + $0xc4] sm:$0xf] %v551
  %616 = vst [vmem:[%s2 + $0xc8] sm:$0xf] %v552
  %617 = vst [vmem:[%s2 + $0xcc] sm:$0xf] %v553
  %618 = vst [vmem:[%s2 + $0xd0] sm:$0xf] %v554
  %619 = vst [vmem:[%s2 + $0xd4] sm:$0xf] %v555
  %620 = vst [vmem:[%s2 + $0xd8] sm:$0xf] %v556
  %621 = vst [vmem:[%s2 + $0xdc] sm:$0xf] %v557
  %622 = vst [vmem:[%s2 + $0xe0] sm:$0xf] %v558
  %623 = vst [vmem:[%s2 + $0xe4] sm:$0xf] %v559
  %624 = vst [vmem:[%s2 + $0xe8] sm:$0xf] %v560
  %625 = vst [vmem:[%s2 + $0xec] sm:$0xf] %v561
  %626 = vst [vmem:[%s2 + $0xf0] sm:$0xf] %v562
  %627 = vst [vmem:[%s2 + $0xf4] sm:$0xf] %v563
  %628 = vst [vmem:[%s2 + $0xf8] sm:$0xf] %v564
  %629 = vst [vmem:[%s2 + $0xfc] sm:$0xf] %v565
  %v630 = vadd.f32 %v343, %v345
  %v631 = vadd.f32 %v630, %v348
  %v632 = vadd.f32 %v631, %v350
  %v633 = vadd.f32 %v632, %v353
  %v634 = vadd.f32 %v633, %v355
  %v635 = vadd.f32 %v634, %v358
  %v636 = vadd.f32 %v635, %v360
  %v637 = vadd.f32 %v636, %v363
  %v638 = vadd.f32 %v637, %v365
  %v639 = vadd.f32 %v638, %v368
  %v640 = vadd.f32 %v639, %v370
  %v641 = vadd.f32 %v640, %v373
  %v642 = vadd.f32 %v641, %v375
  %v643 = vadd.f32 %v642, %v378
  %v644 = vadd.f32 %v643, %v380
  %v645 = vadd.f32 %v644, %v383
  %v646 = vadd.f32 %v645, %v385
  %v647 = vadd.f32 %v646, %v388
  %v648 = vadd.f32 %v647, %v390
  %v649 = vadd.f32 %v648, %v393
  %v650 = vadd.f32 %v649, %v395
  %v651 = vadd.f32 %v650, %v398
  %v652 = vadd.f32 %v651, %v400
  %v653 = vadd.f32 %v652, %v403
  %v654 = vadd.f32 %v653, %v405
  %v655 = vadd.f32 %v654, %v408
  %v656 = vadd.f32 %v655, %v410
  %v657 = vadd.f32 %v656, %v413
  %v658 = vadd.f32 %v657, %v415
  %v659 = vadd.f32 %v658, %v418
  %v660 = vadd.f32 %v659, %v420
  %v661 = vadd.f32 %v660, %v423
  %v662 = vadd.f32 %v661, %v425
  %v663 = vadd.f32 %v662, %v428
  %v664 = vadd.f32 %v663, %v430
  %v665 = vadd.f32 %v664, %v433
  %v666 = vadd.f32 %v665, %v435
  %v667 = vadd.f32 %v666, %v438
  %v668 = vadd.f32 %v667, %v440
  %v669 = vadd.f32 %v668, %v443
  %v670 = vadd.f32 %v669, %v445
  %v671 = vadd.f32 %v670, %v448
  %v672 = vadd.f32 %v671, %v450
  %v673 = vadd.f32 %v672, %v453
  %v674 = vadd.f32 %v673, %v455
  %v675 = vadd.f32 %v674, %v458
  %v676 = vadd.f32 %v675, %v460
  %v677 = vadd.f32 %v676, %v463
  %v678 = vadd.f32 %v677, %v465
  %v679 = vadd.f32 %v678, %v468
  %v680 = vadd.f32 %v679, %v470
  %v681 = vadd.f32 %v680, %v473
  %v682 = vadd.f32 %v681, %v475
  %v683 = vadd.f32 %v682, %v478
  %v684 = vadd.f32 %v683, %v480
  %v685 = vadd.f32 %v684, %v483
  %v686 = vadd.f32 %v685, %v485
  %v687 = vadd.f32 %v686, %v488
  %v688 = vadd.f32 %v687, %v490
  %v689 = vadd.f32 %v688, %v493
  %v690 = vadd.f32 %v689, %v495
  %v691 = vadd.f32 %v690, %v498
  %v692 = vadd.f32 %v691, %v500
  %v693 = vrot.slane %v692, 4
  %v694 = vadd.f32 %v692, %v693
  %v695 = vrot.slane %v694, 2
  %v696 = vadd.f32 %v694, %v695
  %v697 = vrot.slane %v696, 1
  %v698 = vadd.f32 %v696, %v697
  %v699 = vmul.f32 %v343, %v343
  %v700 = vmul.f32 %v345, %v345
  %v701 = vmul.f32 %v348, %v348
  %v702 = vmul.f32 %v350, %v350
  %v703 = vmul.f32 %v353, %v353
  %v704 = vmul.f32 %v355, %v355
  %v705 = vmul.f32 %v358, %v358
  %v706 = vmul.f32 %v360, %v360
  %v707 = vmul.f32 %v363, %v363
  %v708 = vmul.f32 %v365, %v365
  %v709 = vmul.f32 %v368, %v368
  %v710 = vmul.f32 %v370, %v370
  %v711 = vmul.f32 %v373, %v373
  %v712 = vmul.f32 %v375, %v375
  %v713 = vmul.f32 %v378, %v378
  %v714 = vmul.f32 %v380, %v380
  %v715 = vmul.f32 %v383, %v383
  %v716 = vmul.f32 %v385, %v385
  %v717 = vmul.f32 %v388, %v388
  %v718 = vmul.f32 %v390, %v390
  %v719 = vmul.f32 %v393, %v393
  %v720 = vmul.f32 %v395, %v395
  %v721 = vmul.f32 %v398, %v398
  %v722 = vmul.f32 %v400, %v400
  %v723 = vmul.f32 %v403, %v403
  %v724 = vmul.f32 %v405, %v405
  %v725 = vmul.f32 %v408, %v408
  %v726 = vmul.f32 %v410, %v410
  %v727 = vmul.f32 %v413, %v413
  %v728 = vmul.f32 %v415, %v415
  %v729 = vmul.f32 %v418, %v418
  %v730 = vmul.f32 %v420, %v420
  %v731 = vmul.f32 %v423, %v423
  %v732 = vmul.f32 %v425, %v425
  %v733 = vmul.f32 %v428, %v428
  %v734 = vmul.f32 %v430, %v430
  %v735 = vmul.f32 %v433, %v433
  %v736 = vmul.f32 %v435, %v435
  %v737 = vmul.f32 %v438, %v438
  %v738 = vmul.f32 %v440, %v440
  %v739 = vmul.f32 %v443, %v443
  %v740 = vmul.f32 %v445, %v445
  %v741 = vmul.f32 %v448, %v448
  %v742 = vmul.f32 %v450, %v450
  %v743 = vmul.f32 %v453, %v453
  %v744 = vmul.f32 %v455, %v455
  %v745 = vmul.f32 %v458, %v458
  %v746 = vmul.f32 %v460, %v460
  %v747 = vmul.f32 %v463, %v463
  %v748 = vmul.f32 %v465, %v465
  %v749 = vmul.f32 %v468, %v468
  %v750 = vmul.f32 %v470, %v470
  %v751 = vmul.f32 %v473, %v473
  %v752 = vmul.f32 %v475, %v475
  %v753 = vmul.f32 %v478, %v478
  %v754 = vmul.f32 %v480, %v480
  %v755 = vmul.f32 %v483, %v483
  %v756 = vmul.f32 %v485, %v485
  %v757 = vmul.f32 %v488, %v488
  %v758 = vmul.f32 %v490, %v490
  %v759 = vmul.f32 %v493, %v493
  %v760 = vmul.f32 %v495, %v495
  %v761 = vmul.f32 %v498, %v498
  %v762 = vmul.f32 %v500, %v500
  %v763 = vadd.f32 %v699, %v700
  %v764 = vadd.f32 %v763, %v701
  %v765 = vadd.f32 %v764, %v702
  %v766 = vadd.f32 %v765, %v703
  %v767 = vadd.f32 %v766, %v704
  %v768 = vadd.f32 %v767, %v705
  %v769 = vadd.f32 %v768, %v706
  %v770 = vadd.f32 %v769, %v707
  %v771 = vadd.f32 %v770, %v708
  %v772 = vadd.f32 %v771, %v709
  %v773 = vadd.f32 %v772, %v710
  %v774 = vadd.f32 %v773, %v711
  %v775 = vadd.f32 %v774, %v712
  %v776 = vadd.f32 %v775, %v713
  %v777 = vadd.f32 %v776, %v714
  %v778 = vadd.f32 %v777, %v715
  %v779 = vadd.f32 %v778, %v716
  %v780 = vadd.f32 %v779, %v717
  %v781 = vadd.f32 %v780, %v718
  %v782 = vadd.f32 %v781, %v719
  %v783 = vadd.f32 %v782, %v720
  %v784 = vadd.f32 %v783, %v721
  %v785 = vadd.f32 %v784, %v722
  %v786 = vadd.f32 %v785, %v723
  %v787 = vadd.f32 %v786, %v724
  %v788 = vadd.f32 %v787, %v725
  %v789 = vadd.f32 %v788, %v726
  %v790 = vadd.f32 %v789, %v727
  %v791 = vadd.f32 %v790, %v728
  %v792 = vadd.f32 %v791, %v729
  %v793 = vadd.f32 %v792, %v730
  %v794 = vadd.f32 %v793, %v731
  %v795 = vadd.f32 %v794, %v732
  %v796 = vadd.f32 %v795, %v733
  %v797 = vadd.f32 %v796, %v734
  %v798 = vadd.f32 %v797, %v735
  %v799 = vadd.f32 %v798, %v736
  %v800 = vadd.f32 %v799, %v737
  %v801 = vadd.f32 %v800, %v738
  %v802 = vadd.f32 %v801, %v739
  %v803 = vadd.f32 %v802, %v740
  %v804 = vadd.f32 %v803, %v741
  %v805 = vadd.f32 %v804, %v742
  %v806 = vadd.f32 %v805, %v743
  %v807 = vadd.f32 %v806, %v744
  %v808 = vadd.f32 %v807, %v745
  %v809 = vadd.f32 %v808, %v746
  %v810 = vadd.f32 %v809, %v747
  %v811 = vadd.f32 %v810, %v748
  %v812 = vadd.f32 %v811, %v749
  %v813 = vadd.f32 %v812, %v750
  %v814 = vadd.f32 %v813, %v751
  %v815 = vadd.f32 %v814, %v752
  %v816 = vadd.f32 %v815, %v753
  %v817 = vadd.f32 %v816, %v754
  %v818 = vadd.f32 %v817, %v755
  %v819 = vadd.f32 %v818, %v756
  %v820 = vadd.f32 %v819, %v757
  %v821 = vadd.f32 %v820, %v758
  %v822 = vadd.f32 %v821, %v759
  %v823 = vadd.f32 %v822, %v760
  %v824 = vadd.f32 %v823, %v761
  %v825 = vadd.f32 %v824, %v762
  %v826 = vrot.slane %v825, 4
  %v827 = vadd.f32 %v825, %v826
  %v828 = vrot.slane %v827, 2
  %v829 = vadd.f32 %v827, %v828
  %v830 = vrot.slane %v829, 1
  %v831 = vadd.f32 %v829, %v830
  %vm832 = vcmask 1040384
  %v833 = vsel %vm832, %v698, %v831
  %vm834 = vcmask 1041408
  %v835 = vsel %vm834, %v833, 0.0
  %836 = vst [vmem:[%s3] sm:$0xff] %v835
  // Predicated region
  $region10: #{bottleneck_forward.4} parent=0 // pred_check
    _
  $region11: #{bottleneck_forward.4} parent=0 // pred_check_branch
    %838 = sbr.rel (0) target = $region13
  $region12: #{bottleneck_forward.4} parent=0 // pred_region
    _
  $region13: #{bottleneck_forward.4} parent=0 // pred_fallthru
    _
  // Predicated region
  $region14: #{bottleneck_forward.4} parent=0 // pred_check
    _
  $region15: #{bottleneck_forward.4} parent=0 // pred_check_branch
    %840 = sbr.rel (0) target = $region17
  $region16: #{bottleneck_forward.4} parent=0 // pred_region
    _
  $region17: #{bottleneck_forward.4} parent=0 // pred_fallthru
    _
  // Predicated region
  $region18: #{bottleneck_forward.4} parent=0 // pred_check
    _
  $region19: #{bottleneck_forward.4} parent=0 // pred_check_branch
    %842 = sbr.rel (0) target = $region21
  $region20: #{bottleneck_forward.4} parent=0 // pred_region
    _
  $region21: #{bottleneck_forward.4} parent=0 // pred_fallthru
    _
  // Predicated region
  $region22: #{bottleneck_forward.4} parent=0 // pred_check
    _
  $region23: #{bottleneck_forward.4} parent=0 // pred_check_branch
    %844 = sbr.rel (0) target = $region25
  $region24: #{bottleneck_forward.4} parent=0 // pred_region
    _
  $region25: #{bottleneck_forward.4} parent=0 // pred_fallthru
    _

// kernel: bottleneck_forward.5
$region0: #{bottleneck_forward.5}
  #allocation0 [shape = 'u32[]', space=smem, size = 0x4, offset = 0x4, fixed_abs, tag = 'smem constant byte address 0x4 - core index']
  #allocation1 [shape = 'u32[72,128]{1,0:T(1,128)}', space=vmem, size = 0x9000, scoped, tag = 'internal scratch']
  %s0 = inlined_call_operand.vmem [shape: bf16[2,16,16,128], index: 0, kind: input, shape index: {}]
  %s1 = inlined_call_operand.vmem [shape: f32[1,128], index: 1, kind: input, shape index: {}]
  %s2 = inlined_call_operand.vmem [shape: f32[1,128], index: 2, kind: input, shape index: {}]
  %s3 = inlined_call_operand.vmem [shape: bf16[3,3,128,128], index: 3, kind: input, shape index: {}]
  %s4 = inlined_call_operand.vmem [shape: bf16[2,16,16,128], index: 4, kind: output, shape index: {0}]
  %s5 = inlined_call_operand.vmem [shape: f32[2,8,128], index: 5, kind: output, shape index: {1}]
  %6 = xla_tuple %s4, %s5
  %s7 = sld [smem:[#allocation0]]
  $region57: #{bottleneck_forward.5} parent=0
    _
  %s9 = ssub.s32 1, %s7
  %s10 = scalar_select 0, %s9, %s7
  loop: start=0, step=1, limit=4
  $region2: #{bottleneck_forward.5} parent=0 // loop_pre_header
    _
  $region3: #{bottleneck_forward.5} parent=0 // loop_header
    %s12 = sphi 0, %s16
    %p13 = scmp.ge.s32.totalorder %s12, 4
    %s22 = sphi 0, %s24
    %s25 = sphi 0, %s22
    %s26 = sphi 0, %s25
    %s42 = sphi 0, %s26
    %s46 = sphi 0, %s46
    %s48 = sphi 0, %s46
    %s49 = sphi 0, %s48
    %s63 = sphi 0, %s49
    %s67 = sphi 0, %s67
    %s69 = sphi 0, %s67
    %s70 = sphi 0, %s69
    %s84 = sphi 0, %s70
    %s88 = sphi 0, %s88
    %s90 = sphi 0, %s88
    %s91 = sphi 0, %s90
    %s105 = sphi 0, %s91
    %s111 = sphi 0, %s113
    %s114 = sphi 0, %s111
    %s115 = sphi 0, %s114
    %s131 = sphi 0, %s115
    %s137 = sphi 0, %s139
    %s140 = sphi 0, %s137
    %s141 = sphi 0, %s140
    %s157 = sphi 0, %s141
  $region4: #{bottleneck_forward.5} parent=0 // loop_header_branch
    %15 = sbr.rel (%p13) target = $region8
  $region5: #{bottleneck_forward.5} parent=0 // loop_body
    %s17 = ssub.s32 %s12, 1
    %s18 = ssub.s32 %s12, 2
    %s19 = sadd.s32 %s12, 1
    %s20 = ssub.s32 %s12, %s19
    %p21 = scmp.eq.s32.totalorder %s20, 0
    %s23 = sadd.s32 %s22, 1
    %s24 = scalar_select %p21, %s22, %s23
    %p27 = pneg %p21
    %p28 = scmp.eq.s32.totalorder %s12, 1
    %p29 = por %p27, %p28
    %p30 = scmp.ne.s32.totalorder %s22, %s25
    %p31 = scmp.eq.s32.totalorder %s12, 0
    %p32 = por %p30, %p31
    %p33 = scmp.ne.s32.totalorder %s22, %s25
    %p34 = scmp.eq.s32.totalorder %s17, 1
    %p35 = por %p33, %p34
    %p36 = scmp.ne.s32.totalorder %s25, %s26
    %p37 = scmp.eq.s32.totalorder %s17, 0
    %p38 = por %p36, %p37
    %p39 = scmp.ne.s32.totalorder %s25, %s26
    %p40 = scmp.eq.s32.totalorder %s18, 1
    %p41 = por %p39, %p40
    %p43 = scmp.ne.s32.totalorder %s26, %s42
    %p44 = scmp.eq.s32.totalorder %s18, 0
    %p45 = por %p43, %p44
    %s47 = sadd.s32 %s46, 1
    %p50 = scmp.eq.s32.totalorder %s12, 1
    %p51 = scmp.ne.s32.totalorder %s46, %s48
    %p52 = scmp.eq.s32.totalorder %s12, 0
    %p53 = por %p51, %p52
    %p54 = scmp.ne.s32.totalorder %s46, %s48
    %p55 = scmp.eq.s32.totalorder %s17, 1
    %p56 = por %p54, %p55
    %p57 = scmp.ne.s32.totalorder %s48, %s49
    %p58 = scmp.eq.s32.totalorder %s17, 0
    %p59 = por %p57, %p58
    %p60 = scmp.ne.s32.totalorder %s48, %s49
    %p61 = scmp.eq.s32.totalorder %s18, 1
    %p62 = por %p60, %p61
    %p64 = scmp.ne.s32.totalorder %s49, %s63
    %p65 = scmp.eq.s32.totalorder %s18, 0
    %p66 = por %p64, %p65
    %s68 = sadd.s32 %s67, 1
    %p71 = scmp.eq.s32.totalorder %s12, 1
    %p72 = scmp.ne.s32.totalorder %s67, %s69
    %p73 = scmp.eq.s32.totalorder %s12, 0
    %p74 = por %p72, %p73
    %p75 = scmp.ne.s32.totalorder %s67, %s69
    %p76 = scmp.eq.s32.totalorder %s17, 1
    %p77 = por %p75, %p76
    %p78 = scmp.ne.s32.totalorder %s69, %s70
    %p79 = scmp.eq.s32.totalorder %s17, 0
    %p80 = por %p78, %p79
    %p81 = scmp.ne.s32.totalorder %s69, %s70
    %p82 = scmp.eq.s32.totalorder %s18, 1
    %p83 = por %p81, %p82
    %p85 = scmp.ne.s32.totalorder %s70, %s84
    %p86 = scmp.eq.s32.totalorder %s18, 0
    %p87 = por %p85, %p86
    %s89 = sadd.s32 %s88, 1
    %p92 = scmp.eq.s32.totalorder %s12, 1
    %p93 = scmp.ne.s32.totalorder %s88, %s90
    %p94 = scmp.eq.s32.totalorder %s12, 0
    %p95 = por %p93, %p94
    %p96 = scmp.ne.s32.totalorder %s88, %s90
    %p97 = scmp.eq.s32.totalorder %s17, 1
    %p98 = por %p96, %p97
    %p99 = scmp.ne.s32.totalorder %s90, %s91
    %p100 = scmp.eq.s32.totalorder %s17, 0
    %p101 = por %p99, %p100
    %p102 = scmp.ne.s32.totalorder %s90, %s91
    %p103 = scmp.eq.s32.totalorder %s18, 1
    %p104 = por %p102, %p103
    %p106 = scmp.ne.s32.totalorder %s91, %s105
    %p107 = scmp.eq.s32.totalorder %s18, 0
    %p108 = por %p106, %p107
    %s109 = ssub.s32 %s12, %s19
    %p110 = scmp.eq.s32.totalorder %s109, 0
    %s112 = sadd.s32 %s111, 1
    %s113 = scalar_select %p110, %s111, %s112
    %p116 = pneg %p110
    %p117 = scmp.eq.s32.totalorder %s12, 1
    %p118 = por %p116, %p117
    %p119 = scmp.ne.s32.totalorder %s111, %s114
    %p120 = scmp.eq.s32.totalorder %s12, 0
    %p121 = por %p119, %p120
    %p122 = scmp.ne.s32.totalorder %s111, %s114
    %p123 = scmp.eq.s32.totalorder %s17, 1
    %p124 = por %p122, %p123
    %p125 = scmp.ne.s32.totalorder %s114, %s115
    %p126 = scmp.eq.s32.totalorder %s17, 0
    %p127 = por %p125, %p126
    %p128 = scmp.ne.s32.totalorder %s114, %s115
    %p129 = scmp.eq.s32.totalorder %s18, 1
    %p130 = por %p128, %p129
    %p132 = scmp.ne.s32.totalorder %s115, %s131
    %p133 = scmp.eq.s32.totalorder %s18, 0
    %p134 = por %p132, %p133
    %s135 = ssub.s32 %s12, %s19
    %p136 = scmp.eq.s32.totalorder %s135, 0
    %s138 = sadd.s32 %s137, 1
    %s139 = scalar_select %p136, %s137, %s138
    %p142 = pneg %p136
    %p143 = scmp.eq.s32.totalorder %s12, 1
    %p144 = por %p142, %p143
    %p145 = scmp.ne.s32.totalorder %s137, %s140
    %p146 = scmp.eq.s32.totalorder %s12, 0
    %p147 = por %p145, %p146
    %p148 = scmp.ne.s32.totalorder %s137, %s140
    %p149 = scmp.eq.s32.totalorder %s17, 1
    %p150 = por %p148, %p149
    %p151 = scmp.ne.s32.totalorder %s140, %s141
    %p152 = scmp.eq.s32.totalorder %s17, 0
    %p153 = por %p151, %p152
    %p154 = scmp.ne.s32.totalorder %s140, %s141
    %p155 = scmp.eq.s32.totalorder %s18, 1
    %p156 = por %p154, %p155
    %p158 = scmp.ne.s32.totalorder %s141, %s157
    %p159 = scmp.eq.s32.totalorder %s18, 0
    %p160 = por %p158, %p159
    %p161 = scmp.le.s32.totalorder 1, %s12
    %p162 = scmp.lt.s32.totalorder %s12, 3
    %p163 = pnand %p161, %p162
    %p164 = pneg %p163
    // Predicated region
    $region9: #{bottleneck_forward.5} parent=5 // pred_check
      _
    $region10: #{bottleneck_forward.5} parent=5 // pred_check_branch
      %166 = sbr.rel (%p163) target = $region12
    $region11: #{bottleneck_forward.5} parent=5 // pred_region
      %s167 = ssub.s32 %s12, 1
      // Predicated region
      $region13: #{bottleneck_forward.5} parent=11 // pred_check
        %p168 = pneg %p59
      $region14: #{bottleneck_forward.5} parent=11 // pred_check_branch
        %170 = sbr.rel (%p168) target = $region16
      $region15: #{bottleneck_forward.5} parent=11 // pred_region
        _
      $region16: #{bottleneck_forward.5} parent=11 // pred_fallthru
        _
      // Predicated region
      $region17: #{bottleneck_forward.5} parent=11 // pred_check
        %p171 = pneg %p80
      $region18: #{bottleneck_forward.5} parent=11 // pred_check_branch
        %173 = sbr.rel (%p171) target = $region20
      $region19: #{bottleneck_forward.5} parent=11 // pred_region
        _
      $region20: #{bottleneck_forward.5} parent=11 // pred_fallthru
        _
      // Predicated region
      $region21: #{bottleneck_forward.5} parent=11 // pred_check
        %p174 = pneg %p101
      $region22: #{bottleneck_forward.5} parent=11 // pred_check_branch
        %176 = sbr.rel (%p174) target = $region24
      $region23: #{bottleneck_forward.5} parent=11 // pred_region
        _
      $region24: #{bottleneck_forward.5} parent=11 // pred_fallthru
        _
    $region12: #{bottleneck_forward.5} parent=5 // pred_fallthru
      _
    %p177 = scmp.lt.s32.totalorder %s12, 2
    // Predicated region
    $region25: #{bottleneck_forward.5} parent=5 // pred_check
      %p178 = pneg %p177
    $region26: #{bottleneck_forward.5} parent=5 // pred_check_branch
      %180 = sbr.rel (%p178) target = $region28
    $region27: #{bottleneck_forward.5} parent=5 // pred_region
      // Predicated region
      $region29: #{bottleneck_forward.5} parent=27 // pred_check
        %p181 = pneg %p32
      $region30: #{bottleneck_forward.5} parent=27 // pred_check_branch
        %183 = sbr.rel (%p181) target = $region32
      $region31: #{bottleneck_forward.5} parent=27 // pred_region
        %p184 = scmp.lt.s32.totalorder %s12, 1
        %s185 = scalar_select %p184, %s12, 1
        %s186 = smul.addr %s185, 32
        %s187 = smul.addr %s186, 4
        %s188 = scalar_lea.vmem %s0, %s187
      $region32: #{bottleneck_forward.5} parent=27 // pred_fallthru
        _
    $region28: #{bottleneck_forward.5} parent=5 // pred_fallthru
      _
    %p189 = scmp.le.s32.totalorder 1, %s12
    %p190 = scmp.lt.s32.totalorder %s12, 3
    %p191 = pnand %p189, %p190
    %p192 = pneg %p191
    // Predicated region
    $region33: #{bottleneck_forward.5} parent=5 // pred_check
      _
    $region34: #{bottleneck_forward.5} parent=5 // pred_check_branch
      %194 = sbr.rel (%p191) target = $region36
    $region35: #{bottleneck_forward.5} parent=5 // pred_region
      %s195 = ssub.s32 %s12, 1
      %p196 = scmp.lt.s32.totalorder %s17, 1
      %s197 = scalar_select %p196, %s17, 1
      %s198 = smul.addr %s197, 32
      %s199 = smul.addr %s198, 4
      %s200 = scalar_lea.vmem %s0, %s199
      %p201 = pneg %p38
      %p202 = pneg %p35
      %p203 = pneg %p59
      %p204 = pneg %p56
      %p205 = pneg %p80
      %p206 = pneg %p77
      %p207 = pneg %p101
      %p208 = pneg %p98
      %p209 = pneg %p127
      %p210 = pneg %p124
      %p211 = scmp.lt.s32.totalorder %s17, 1
      %s212 = scalar_select %p211, %s17, 1
      %s213 = smul.addr %s212, 32
      %s214 = smul.addr %s213, 4
      %s215 = scalar_lea.vmem %s4, %s214
      %p216 = pneg %p153
      %p217 = pneg %p150
      %p218 = scmp.lt.s32.totalorder %s17, 1
      %s219 = scalar_select %p218, %s17, 1
      %s220 = smul.addr %s219, 8
      %s221 = scalar_lea.vmem %s5, %s220
      %p222 = scmp.lt.s32.totalorder %s17, 1
      %s223 = scalar_select %p222, %s17, 1
      %s224 = smul.addr %s223, 32
      %s225 = smul.addr %s224, 4
      %s226 = scalar_lea.vmem %s0, %s225
      %p227 = scmp.lt.s32.totalorder %s17, 1
      %s228 = scalar_select %p227, %s17, 1
      %s229 = smul.addr %s228, 32
      %s230 = smul.addr %s229, 4
      %s231 = scalar_lea.vmem %s4, %s230
      %p232 = scmp.lt.s32.totalorder %s17, 1
      %s233 = scalar_select %p232, %s17, 1
      %s234 = smul.addr %s233, 8
      %s235 = scalar_lea.vmem %s5, %s234
      %v237 = vld [vmem:[%s226] sm:$0xf]
      %v238 = vld [vmem:[%s226 + $0x4] sm:$0xf]
      %v239 = vld [vmem:[%s226 + $0x8] sm:$0xf]
      %v240 = vld [vmem:[%s226 + $0xc] sm:$0xf]
      %v241 = vld [vmem:[%s226 + $0x10] sm:$0xf]
      %v242 = vld [vmem:[%s226 + $0x14] sm:$0xf]
      %v243 = vld [vmem:[%s226 + $0x18] sm:$0xf]
      %v244 = vld [vmem:[%s226 + $0x1c] sm:$0xf]
      %v245 = vld [vmem:[%s226 + $0x20] sm:$0xf]
      %v246 = vld [vmem:[%s226 + $0x24] sm:$0xf]
      %v247 = vld [vmem:[%s226 + $0x28] sm:$0xf]
      %v248 = vld [vmem:[%s226 + $0x2c] sm:$0xf]
      %v249 = vld [vmem:[%s226 + $0x30] sm:$0xf]
      %v250 = vld [vmem:[%s226 + $0x34] sm:$0xf]
      %v251 = vld [vmem:[%s226 + $0x38] sm:$0xf]
      %v252 = vld [vmem:[%s226 + $0x3c] sm:$0xf]
      %v253 = vld [vmem:[%s226 + $0x40] sm:$0xf]
      %v254 = vld [vmem:[%s226 + $0x44] sm:$0xf]
      %v255 = vld [vmem:[%s226 + $0x48] sm:$0xf]
      %v256 = vld [vmem:[%s226 + $0x4c] sm:$0xf]
      %v257 = vld [vmem:[%s226 + $0x50] sm:$0xf]
      %v258 = vld [vmem:[%s226 + $0x54] sm:$0xf]
      %v259 = vld [vmem:[%s226 + $0x58] sm:$0xf]
      %v260 = vld [vmem:[%s226 + $0x5c] sm:$0xf]
      %v261 = vld [vmem:[%s226 + $0x60] sm:$0xf]
      %v262 = vld [vmem:[%s226 + $0x64] sm:$0xf]
      %v263 = vld [vmem:[%s226 + $0x68] sm:$0xf]
      %v264 = vld [vmem:[%s226 + $0x6c] sm:$0xf]
      %v265 = vld [vmem:[%s226 + $0x70] sm:$0xf]
      %v266 = vld [vmem:[%s226 + $0x74] sm:$0xf]
      %v267 = vld [vmem:[%s226 + $0x78] sm:$0xf]
      %v268 = vld [vmem:[%s226 + $0x7c] sm:$0xf]
      %v269 = vunpack.c.l.bf16 %v237
      %v270 = vunpack.c.l.bf16 %v238
      %v271 = vunpack.c.l.bf16 %v239
      %v272 = vunpack.c.l.bf16 %v240
      %v273 = vunpack.c.l.bf16 %v241
      %v274 = vunpack.c.l.bf16 %v242
      %v275 = vunpack.c.l.bf16 %v243
      %v276 = vunpack.c.l.bf16 %v244
      %v277 = vunpack.c.l.bf16 %v245
      %v278 = vunpack.c.l.bf16 %v246
      %v279 = vunpack.c.l.bf16 %v247
      %v280 = vunpack.c.l.bf16 %v248
      %v281 = vunpack.c.l.bf16 %v249
      %v282 = vunpack.c.l.bf16 %v250
      %v283 = vunpack.c.l.bf16 %v251
      %v284 = vunpack.c.l.bf16 %v252
      %v285 = vunpack.c.l.bf16 %v253
      %v286 = vunpack.c.l.bf16 %v254
      %v287 = vunpack.c.l.bf16 %v255
      %v288 = vunpack.c.l.bf16 %v256
      %v289 = vunpack.c.l.bf16 %v257
      %v290 = vunpack.c.l.bf16 %v258
      %v291 = vunpack.c.l.bf16 %v259
      %v292 = vunpack.c.l.bf16 %v260
      %v293 = vunpack.c.l.bf16 %v261
      %v294 = vunpack.c.l.bf16 %v262
      %v295 = vunpack.c.l.bf16 %v263
      %v296 = vunpack.c.l.bf16 %v264
      %v297 = vunpack.c.l.bf16 %v265
      %v298 = vunpack.c.l.bf16 %v266
      %v299 = vunpack.c.l.bf16 %v267
      %v300 = vunpack.c.l.bf16 %v268
      %v301 = vld [vmem:[%s1] sm:$0x1]
      %v302 = vld [vmem:[%s2] sm:$0x1]
      %v304 = vperm.slane %v301, 0
      %v306 = vmul.f32 %v269, %v304
      %v307 = vmul.f32 %v270, %v304
      %v308 = vmul.f32 %v271, %v304
      %v309 = vmul.f32 %v272, %v304
      %v310 = vmul.f32 %v273, %v304
      %v311 = vmul.f32 %v274, %v304
      %v312 = vmul.f32 %v275, %v304
      %v313 = vmul.f32 %v276, %v304
      %v314 = vmul.f32 %v277, %v304
      %v315 = vmul.f32 %v278, %v304
      %v316 = vmul.f32 %v279, %v304
      %v317 = vmul.f32 %v280, %v304
      %v318 = vmul.f32 %v281, %v304
      %v319 = vmul.f32 %v282, %v304
      %v320 = vmul.f32 %v283, %v304
      %v321 = vmul.f32 %v284, %v304
      %v322 = vmul.f32 %v285, %v304
      %v323 = vmul.f32 %v286, %v304
      %v324 = vmul.f32 %v287, %v304
      %v325 = vmul.f32 %v288, %v304
      %v326 = vmul.f32 %v289, %v304
      %v327 = vmul.f32 %v290, %v304
      %v328 = vmul.f32 %v291, %v304
      %v329 = vmul.f32 %v292, %v304
      %v330 = vmul.f32 %v293, %v304
      %v331 = vmul.f32 %v294, %v304
      %v332 = vmul.f32 %v295, %v304
      %v333 = vmul.f32 %v296, %v304
      %v334 = vmul.f32 %v297, %v304
      %v335 = vmul.f32 %v298, %v304
      %v336 = vmul.f32 %v299, %v304
      %v337 = vmul.f32 %v300, %v304
      %v339 = vperm.slane %v302, 0
      %v341 = vadd.f32 %v306, %v339
      %v342 = vadd.f32 %v307, %v339
      %v343 = vadd.f32 %v308, %v339
      %v344 = vadd.f32 %v309, %v339
      %v345 = vadd.f32 %v310, %v339
      %v346 = vadd.f32 %v311, %v339
      %v347 = vadd.f32 %v312, %v339
      %v348 = vadd.f32 %v313, %v339
      %v349 = vadd.f32 %v314, %v339
      %v350 = vadd.f32 %v315, %v339
      %v351 = vadd.f32 %v316, %v339
      %v352 = vadd.f32 %v317, %v339
      %v353 = vadd.f32 %v318, %v339
      %v354 = vadd.f32 %v319, %v339
      %v355 = vadd.f32 %v320, %v339
      %v356 = vadd.f32 %v321, %v339
      %v357 = vadd.f32 %v322, %v339
      %v358 = vadd.f32 %v323, %v339
      %v359 = vadd.f32 %v324, %v339
      %v360 = vadd.f32 %v325, %v339
      %v361 = vadd.f32 %v326, %v339
      %v362 = vadd.f32 %v327, %v339
      %v363 = vadd.f32 %v328, %v339
      %v364 = vadd.f32 %v329, %v339
      %v365 = vadd.f32 %v330, %v339
      %v366 = vadd.f32 %v331, %v339
      %v367 = vadd.f32 %v332, %v339
      %v368 = vadd.f32 %v333, %v339
      %v369 = vadd.f32 %v334, %v339
      %v370 = vadd.f32 %v335, %v339
      %v371 = vadd.f32 %v336, %v339
      %v372 = vadd.f32 %v337, %v339
      %v373 = vmax.f32 %v341, 0.0
      %v374 = vmax.f32 %v342, 0.0
      %v375 = vmax.f32 %v343, 0.0
      %v376 = vmax.f32 %v344, 0.0
      %v377 = vmax.f32 %v345, 0.0
      %v378 = vmax.f32 %v346, 0.0
      %v379 = vmax.f32 %v347, 0.0
      %v380 = vmax.f32 %v348, 0.0
      %v381 = vmax.f32 %v349, 0.0
      %v382 = vmax.f32 %v350, 0.0
      %v383 = vmax.f32 %v351, 0.0
      %v384 = vmax.f32 %v352, 0.0
      %v385 = vmax.f32 %v353, 0.0
      %v386 = vmax.f32 %v354, 0.0
      %v387 = vmax.f32 %v355, 0.0
      %v388 = vmax.f32 %v356, 0.0
      %v389 = vmax.f32 %v357, 0.0
      %v390 = vmax.f32 %v358, 0.0
      %v391 = vmax.f32 %v359, 0.0
      %v392 = vmax.f32 %v360, 0.0
      %v393 = vmax.f32 %v361, 0.0
      %v394 = vmax.f32 %v362, 0.0
      %v395 = vmax.f32 %v363, 0.0
      %v396 = vmax.f32 %v364, 0.0
      %v397 = vmax.f32 %v365, 0.0
      %v398 = vmax.f32 %v366, 0.0
      %v399 = vmax.f32 %v367, 0.0
      %v400 = vmax.f32 %v368, 0.0
      %v401 = vmax.f32 %v369, 0.0
      %v402 = vmax.f32 %v370, 0.0
      %v403 = vmax.f32 %v371, 0.0
      %v404 = vmax.f32 %v372, 0.0
      %v405 = vpack.c.bf16 %v373, %v373
      %v406 = vpack.c.bf16 %v374, %v374
      %v407 = vpack.c.bf16 %v375, %v375
      %v408 = vpack.c.bf16 %v376, %v376
      %v409 = vpack.c.bf16 %v377, %v377
      %v410 = vpack.c.bf16 %v378, %v378
      %v411 = vpack.c.bf16 %v379, %v379
      %v412 = vpack.c.bf16 %v380, %v380
      %v413 = vpack.c.bf16 %v381, %v381
      %v414 = vpack.c.bf16 %v382, %v382
      %v415 = vpack.c.bf16 %v383, %v383
      %v416 = vpack.c.bf16 %v384, %v384
      %v417 = vpack.c.bf16 %v385, %v385
      %v418 = vpack.c.bf16 %v386, %v386
      %v419 = vpack.c.bf16 %v387, %v387
      %v420 = vpack.c.bf16 %v388, %v388
      %v421 = vpack.c.bf16 %v389, %v389
      %v422 = vpack.c.bf16 %v390, %v390
      %v423 = vpack.c.bf16 %v391, %v391
      %v424 = vpack.c.bf16 %v392, %v392
      %v425 = vpack.c.bf16 %v393, %v393
      %v426 = vpack.c.bf16 %v394, %v394
      %v427 = vpack.c.bf16 %v395, %v395
      %v428 = vpack.c.bf16 %v396, %v396
      %v429 = vpack.c.bf16 %v397, %v397
      %v430 = vpack.c.bf16 %v398, %v398
      %v431 = vpack.c.bf16 %v399, %v399
      %v432 = vpack.c.bf16 %v400, %v400
      %v433 = vpack.c.bf16 %v401, %v401
      %v434 = vpack.c.bf16 %v402, %v402
      %v435 = vpack.c.bf16 %v403, %v403
      %v436 = vpack.c.bf16 %v404, %v404
      %v469 = vunpack.c.l.b16 %v405
      %v470 = vunpack.c.l.b16 %v406
      %v471 = vunpack.c.l.b16 %v407
      %v472 = vunpack.c.l.b16 %v408
      %v473 = vunpack.c.l.b16 %v409
      %v474 = vunpack.c.l.b16 %v410
      %v475 = vunpack.c.l.b16 %v411
      %v476 = vunpack.c.l.b16 %v412
      %v477 = vunpack.c.l.b16 %v413
      %v478 = vunpack.c.l.b16 %v414
      %v479 = vunpack.c.l.b16 %v415
      %v480 = vunpack.c.l.b16 %v416
      %v481 = vunpack.c.l.b16 %v417
      %v482 = vunpack.c.l.b16 %v418
      %v483 = vunpack.c.l.b16 %v419
      %v484 = vunpack.c.l.b16 %v420
      %v485 = vunpack.c.l.b16 %v421
      %v486 = vunpack.c.l.b16 %v422
      %v487 = vunpack.c.l.b16 %v423
      %v488 = vunpack.c.l.b16 %v424
      %v489 = vunpack.c.l.b16 %v425
      %v490 = vunpack.c.l.b16 %v426
      %v491 = vunpack.c.l.b16 %v427
      %v492 = vunpack.c.l.b16 %v428
      %v493 = vunpack.c.l.b16 %v429
      %v494 = vunpack.c.l.b16 %v430
      %v495 = vunpack.c.l.b16 %v431
      %v496 = vunpack.c.l.b16 %v432
      %v497 = vunpack.c.l.b16 %v433
      %v498 = vunpack.c.l.b16 %v434
      %v499 = vunpack.c.l.b16 %v435
      %v500 = vunpack.c.l.b16 %v436
      %v501 = vpack.c.b16 %v470, %v469
      %v502 = vpack.c.b16 %v472, %v471
      %v503 = vpack.c.b16 %v474, %v473
      %v504 = vpack.c.b16 %v476, %v475
      %v505 = vpack.c.b16 %v478, %v477
      %v506 = vpack.c.b16 %v480, %v479
      %v507 = vpack.c.b16 %v482, %v481
      %v508 = vpack.c.b16 %v484, %v483
      %v509 = vpack.c.b16 %v486, %v485
      %v510 = vpack.c.b16 %v488, %v487
      %v511 = vpack.c.b16 %v490, %v489
      %v512 = vpack.c.b16 %v492, %v491
      %v513 = vpack.c.b16 %v494, %v493
      %v514 = vpack.c.b16 %v496, %v495
      %v515 = vpack.c.b16 %v498, %v497
      %v516 = vpack.c.b16 %v500, %v499
      %v518 = vshrl.u32 %v501, 16
      %v520 = vrot.slane %v518, 7
      %v521 = vshll.u32 %v501, 16
      %v523 = vor.u32 %v520, %v521
      %v525 = vshrl.u32 %v502, 16
      %v527 = vrot.slane %v525, 7
      %v528 = vshll.u32 %v502, 16
      %v530 = vor.u32 %v527, %v528
      %v532 = vshrl.u32 %v503, 16
      %v534 = vrot.slane %v532, 7
      %v535 = vshll.u32 %v503, 16
      %v537 = vor.u32 %v534, %v535
      %v539 = vshrl.u32 %v504, 16
      %v541 = vrot.slane %v539, 7
      %v542 = vshll.u32 %v504, 16
      %v544 = vor.u32 %v541, %v542
      %v546 = vshrl.u32 %v505, 16
      %v548 = vrot.slane %v546, 7
      %v549 = vshll.u32 %v505, 16
      %v551 = vor.u32 %v548, %v549
      %v553 = vshrl.u32 %v506, 16
      %v555 = vrot.slane %v553, 7
      %v556 = vshll.u32 %v506, 16
      %v558 = vor.u32 %v555, %v556
      %v560 = vshrl.u32 %v507, 16
      %v562 = vrot.slane %v560, 7
      %v563 = vshll.u32 %v507, 16
      %v565 = vor.u32 %v562, %v563
      %v567 = vshrl.u32 %v508, 16
      %v569 = vrot.slane %v567, 7
      %v570 = vshll.u32 %v508, 16
      %v572 = vor.u32 %v569, %v570
      %v574 = vshrl.u32 %v509, 16
      %v576 = vrot.slane %v574, 7
      %v577 = vshll.u32 %v509, 16
      %v579 = vor.u32 %v576, %v577
      %v581 = vshrl.u32 %v510, 16
      %v583 = vrot.slane %v581, 7
      %v584 = vshll.u32 %v510, 16
      %v586 = vor.u32 %v583, %v584
      %v588 = vshrl.u32 %v511, 16
      %v590 = vrot.slane %v588, 7
      %v591 = vshll.u32 %v511, 16
      %v593 = vor.u32 %v590, %v591
      %v595 = vshrl.u32 %v512, 16
      %v597 = vrot.slane %v595, 7
      %v598 = vshll.u32 %v512, 16
      %v600 = vor.u32 %v597, %v598
      %v602 = vshrl.u32 %v513, 16
      %v604 = vrot.slane %v602, 7
      %v605 = vshll.u32 %v513, 16
      %v607 = vor.u32 %v604, %v605
      %v609 = vshrl.u32 %v514, 16
      %v611 = vrot.slane %v609, 7
      %v612 = vshll.u32 %v514, 16
      %v614 = vor.u32 %v611, %v612
      %v616 = vshrl.u32 %v515, 16
      %v618 = vrot.slane %v616, 7
      %v619 = vshll.u32 %v515, 16
      %v621 = vor.u32 %v618, %v619
      %v623 = vshrl.u32 %v516, 16
      %v625 = vrot.slane %v623, 7
      %v626 = vshll.u32 %v516, 16
      %v628 = vor.u32 %v625, %v626
      %vm661 = vcmask 1040384
      %vm662 = vsmask.f32 256
      %vm663 = vmand %vm661, %vm662
      %v664 = vsel %vm663, 0, %v523
      %v665 = vsel %vm663, 0, %v530
      %v666 = vsel %vm663, 0, %v537
      %v667 = vsel %vm663, 0, %v544
      %v668 = vsel %vm663, 0, %v551
      %v669 = vsel %vm663, 0, %v558
      %v670 = vsel %vm663, 0, %v565
      %v671 = vsel %vm663, 0, %v572
      %v672 = vsel %vm663, 0, %v579
      %v673 = vsel %vm663, 0, %v586
      %v674 = vsel %vm663, 0, %v593
      %v675 = vsel %vm663, 0, %v600
      %v676 = vsel %vm663, 0, %v607
      %v677 = vsel %vm663, 0, %v614
      %v678 = vsel %vm663, 0, %v621
      %v679 = vsel %vm663, 0, %v628
      %v680 = vsel %vm663, %v520, 0
      %v681 = vsel %vm663, %v527, 0
      %v682 = vsel %vm663, %v534, 0
      %v683 = vsel %vm663, %v541, 0
      %v684 = vsel %vm663, %v548, 0
      %v685 = vsel %vm663, %v555, 0
      %v686 = vsel %vm663, %v562, 0
      %v687 = vsel %vm663, %v569, 0
      %v688 = vsel %vm663, %v576, 0
      %v689 = vsel %vm663, %v583, 0
      %v690 = vsel %vm663, %v590, 0
      %v691 = vsel %vm663, %v597, 0
      %v692 = vsel %vm663, %v604, 0
      %v693 = vsel %vm663, %v611, 0
      %v694 = vsel %vm663, %v618, 0
      %v695 = vsel %vm663, %v625, 0
      %v696 = vld [vmem:[%s3] sm:$0xf]
      %v697 = vld [vmem:[%s3 + $0x4] sm:$0xf]
      %v698 = vld [vmem:[%s3 + $0x8] sm:$0xf]
      %v699 = vld [vmem:[%s3 + $0xc] sm:$0xf]
      %v700 = vld [vmem:[%s3 + $0x10] sm:$0xf]
      %v701 = vld [vmem:[%s3 + $0x14] sm:$0xf]
      %v702 = vld [vmem:[%s3 + $0x18] sm:$0xf]
      %v703 = vld [vmem:[%s3 + $0x1c] sm:$0xf]
      %v704 = vld [vmem:[%s3 + $0x20] sm:$0xf]
      %v705 = vld [vmem:[%s3 + $0x24] sm:$0xf]
      %v706 = vld [vmem:[%s3 + $0x28] sm:$0xf]
      %v707 = vld [vmem:[%s3 + $0x2c] sm:$0xf]
      %v708 = vld [vmem:[%s3 + $0x30] sm:$0xf]
      %v709 = vld [vmem:[%s3 + $0x34] sm:$0xf]
      %v710 = vld [vmem:[%s3 + $0x38] sm:$0xf]
      %v711 = vld [vmem:[%s3 + $0x3c] sm:$0xf]
      %vm712 = vsmask.f32 7424
      %v714 = vshrl.u32 0, 16
      %v716 = vshll.u32 0, 16
      %v718 = vrot.slane %v716, 1
      %v719 = vor.u32 %v714, %v718
      %v720 = vsel %vm712, %v719, %v718
      %v722 = vshrl.u32 %v664, 16
      %v724 = vshll.u32 %v664, 16
      %v726 = vrot.slane %v724, 1
      %v727 = vor.u32 %v722, %v726
      %v729 = vshll.u32 %v680, 16
      %v731 = vrot.slane %v729, 1
      %v732 = vsel %vm712, %v727, %v731
      %v734 = vshrl.u32 %v665, 16
      %v736 = vshll.u32 %v665, 16
      %v738 = vrot.slane %v736, 1
      %v739 = vor.u32 %v734, %v738
      %v741 = vshll.u32 %v681, 16
      %v743 = vrot.slane %v741, 1
      %v744 = vsel %vm712, %v739, %v743
      %v746 = vshrl.u32 %v666, 16
      %v748 = vshll.u32 %v666, 16
      %v750 = vrot.slane %v748, 1
      %v751 = vor.u32 %v746, %v750
      %v753 = vshll.u32 %v682, 16
      %v755 = vrot.slane %v753, 1
      %v756 = vsel %vm712, %v751, %v755
      %v758 = vshrl.u32 %v667, 16
      %v760 = vshll.u32 %v667, 16
      %v762 = vrot.slane %v760, 1
      %v763 = vor.u32 %v758, %v762
      %v765 = vshll.u32 %v683, 16
      %v767 = vrot.slane %v765, 1
      %v768 = vsel %vm712, %v763, %v767
      %v770 = vshrl.u32 %v668, 16
      %v772 = vshll.u32 %v668, 16
      %v774 = vrot.slane %v772, 1
      %v775 = vor.u32 %v770, %v774
      %v777 = vshll.u32 %v684, 16
      %v779 = vrot.slane %v777, 1
      %v780 = vsel %vm712, %v775, %v779
      %v782 = vshrl.u32 %v669, 16
      %v784 = vshll.u32 %v669, 16
      %v786 = vrot.slane %v784, 1
      %v787 = vor.u32 %v782, %v786
      %v789 = vshll.u32 %v685, 16
      %v791 = vrot.slane %v789, 1
      %v792 = vsel %vm712, %v787, %v791
      %v794 = vshrl.u32 %v670, 16
      %v796 = vshll.u32 %v670, 16
      %v798 = vrot.slane %v796, 1
      %v799 = vor.u32 %v794, %v798
      %v801 = vshll.u32 %v686, 16
      %v803 = vrot.slane %v801, 1
      %v804 = vsel %vm712, %v799, %v803
      %v806 = vshrl.u32 %v671, 16
      %v808 = vshll.u32 %v671, 16
      %v810 = vrot.slane %v808, 1
      %v811 = vor.u32 %v806, %v810
      %v813 = vshll.u32 %v687, 16
      %v815 = vrot.slane %v813, 1
      %v816 = vsel %vm712, %v811, %v815
      %v818 = vshrl.u32 %v672, 16
      %v820 = vshll.u32 %v672, 16
      %v822 = vrot.slane %v820, 1
      %v823 = vor.u32 %v818, %v822
      %v825 = vshll.u32 %v688, 16
      %v827 = vrot.slane %v825, 1
      %v828 = vsel %vm712, %v823, %v827
      %v830 = vshrl.u32 %v673, 16
      %v832 = vshll.u32 %v673, 16
      %v834 = vrot.slane %v832, 1
      %v835 = vor.u32 %v830, %v834
      %v837 = vshll.u32 %v689, 16
      %v839 = vrot.slane %v837, 1
      %v840 = vsel %vm712, %v835, %v839
      %v842 = vshrl.u32 %v674, 16
      %v844 = vshll.u32 %v674, 16
      %v846 = vrot.slane %v844, 1
      %v847 = vor.u32 %v842, %v846
      %v849 = vshll.u32 %v690, 16
      %v851 = vrot.slane %v849, 1
      %v852 = vsel %vm712, %v847, %v851
      %v854 = vshrl.u32 %v675, 16
      %v856 = vshll.u32 %v675, 16
      %v858 = vrot.slane %v856, 1
      %v859 = vor.u32 %v854, %v858
      %v861 = vshll.u32 %v691, 16
      %v863 = vrot.slane %v861, 1
      %v864 = vsel %vm712, %v859, %v863
      %v866 = vshrl.u32 %v676, 16
      %v868 = vshll.u32 %v676, 16
      %v870 = vrot.slane %v868, 1
      %v871 = vor.u32 %v866, %v870
      %v873 = vshll.u32 %v692, 16
      %v875 = vrot.slane %v873, 1
      %v876 = vsel %vm712, %v871, %v875
      %v878 = vshrl.u32 %v677, 16
      %v880 = vshll.u32 %v677, 16
      %v882 = vrot.slane %v880, 1
      %v883 = vor.u32 %v878, %v882
      %v885 = vshll.u32 %v693, 16
      %v887 = vrot.slane %v885, 1
      %v888 = vsel %vm712, %v883, %v887
      %v890 = vshrl.u32 %v678, 16
      %v892 = vshll.u32 %v678, 16
      %v894 = vrot.slane %v892, 1
      %v895 = vor.u32 %v890, %v894
      %v897 = vshll.u32 %v694, 16
      %v899 = vrot.slane %v897, 1
      %v900 = vsel %vm712, %v895, %v899
      %s917 = scalar_lea.vmem %s3, 64
      %v918 = vld [vmem:[%s917] sm:$0xf]
      %v919 = vld [vmem:[%s917 + $0x4] sm:$0xf]
      %v920 = vld [vmem:[%s917 + $0x8] sm:$0xf]
      %v921 = vld [vmem:[%s917 + $0xc] sm:$0xf]
      %v922 = vld [vmem:[%s917 + $0x10] sm:$0xf]
      %v923 = vld [vmem:[%s917 + $0x14] sm:$0xf]
      %v924 = vld [vmem:[%s917 + $0x18] sm:$0xf]
      %v925 = vld [vmem:[%s917 + $0x1c] sm:$0xf]
      %v926 = vld [vmem:[%s917 + $0x20] sm:$0xf]
      %v927 = vld [vmem:[%s917 + $0x24] sm:$0xf]
      %v928 = vld [vmem:[%s917 + $0x28] sm:$0xf]
      %v929 = vld [vmem:[%s917 + $0x2c] sm:$0xf]
      %v930 = vld [vmem:[%s917 + $0x30] sm:$0xf]
      %v931 = vld [vmem:[%s917 + $0x34] sm:$0xf]
      %v932 = vld [vmem:[%s917 + $0x38] sm:$0xf]
      %v933 = vld [vmem:[%s917 + $0x3c] sm:$0xf]
      %v950 = vunpack.c.l.b16 %v918
      %v951 = vunpack.c.l.b16 %v919
      %v952 = vunpack.c.l.b16 %v920
      %v953 = vunpack.c.l.b16 %v921
      %v954 = vunpack.c.l.b16 %v922
      %v955 = vunpack.c.l.b16 %v923
      %v956 = vunpack.c.l.b16 %v924
      %v957 = vunpack.c.l.b16 %v925
      %v958 = vunpack.c.l.b16 %v926
      %v959 = vunpack.c.l.b16 %v927
      %v960 = vunpack.c.l.b16 %v928
      %v961 = vunpack.c.l.b16 %v929
      %v962 = vunpack.c.l.b16 %v930
      %v963 = vunpack.c.l.b16 %v931
      %v964 = vunpack.c.l.b16 %v932
      %v965 = vunpack.c.l.b16 %v933
      %v966 = vpack.c.b16 %v951, %v950
      %v967 = vpack.c.b16 %v953, %v952
      %v968 = vpack.c.b16 %v955, %v954
      %v969 = vpack.c.b16 %v957, %v956
      %v970 = vpack.c.b16 %v959, %v958
      %v971 = vpack.c.b16 %v961, %v960
      %v972 = vpack.c.b16 %v963, %v962
      %v973 = vpack.c.b16 %v965, %v964
      %982 = vmatpush.bf16.msra.mxu0 %v973
      %983 = vmatpush.bf16.msra.mxu0 %v972
      %984 = vmatpush.bf16.msra.mxu0 %v971
      %985 = vmatpush.bf16.msra.mxu0 %v970
      %986 = vmatpush.bf16.msra.mxu0 %v969
      %987 = vmatpush.bf16.msra.mxu0 %v968
      %988 = vmatpush.bf16.msra.mxu0 %v967
      %989 = vmatpush.bf16.msra.mxu0 %v966
      %990 = vmatmul.bf16.gmra.mxu0 %v720
      %v991 = vpop.f32.mrf.mxu0
      %v992 = vadd.f32 0.0, %v991
      %v993 = vpop.f32.mrf.mxu0
      %v994 = vadd.f32 0.0, %v993
      %995 = vmatmul.bf16.gmra.mxu0 %v732
      %v996 = vpop.f32.mrf.mxu0
      %v997 = vadd.f32 0.0, %v996
      %v998 = vpop.f32.mrf.mxu0
      %v999 = vadd.f32 0.0, %v998
      %1000 = vmatmul.bf16.gmra.mxu0 %v744
      %v1001 = vpop.f32.mrf.mxu0
      %v1002 = vadd.f32 0.0, %v1001
      %v1003 = vpop.f32.mrf.mxu0
      %v1004 = vadd.f32 0.0, %v1003
      %1005 = vmatmul.bf16.gmra.mxu0 %v756
      %v1006 = vpop.f32.mrf.mxu0
      %v1007 = vadd.f32 0.0, %v1006
      %v1008 = vpop.f32.mrf.mxu0
      %v1009 = vadd.f32 0.0, %v1008
      %1010 = vmatmul.bf16.gmra.mxu0 %v768
      %v1011 = vpop.f32.mrf.mxu0
      %v1012 = vadd.f32 0.0, %v1011
      %v1013 = vpop.f32.mrf.mxu0
      %v1014 = vadd.f32 0.0, %v1013
      %1015 = vmatmul.bf16.gmra.mxu0 %v780
      %v1016 = vpop.f32.mrf.mxu0
      %v1017 = vadd.f32 0.0, %v1016
      %v1018 = vpop.f32.mrf.mxu0
      %v1019 = vadd.f32 0.0, %v1018
      %1020 = vmatmul.bf16.gmra.mxu0 %v792
      %v1021 = vpop.f32.mrf.mxu0
      %v1022 = vadd.f32 0.0, %v1021
      %v1023 = vpop.f32.mrf.mxu0
      %v1024 = vadd.f32 0.0, %v1023
      %1025 = vmatmul.bf16.gmra.mxu0 %v804
      %v1026 = vpop.f32.mrf.mxu0
      %v1027 = vadd.f32 0.0, %v1026
      %v1028 = vpop.f32.mrf.mxu0
      %v1029 = vadd.f32 0.0, %v1028
      %1030 = vmatmul.bf16.gmra.mxu0 %v816
      %v1031 = vpop.f32.mrf.mxu0
      %v1032 = vadd.f32 0.0, %v1031
      %v1033 = vpop.f32.mrf.mxu0
      %v1034 = vadd.f32 0.0, %v1033
      %1035 = vmatmul.bf16.gmra.mxu0 %v828
      %v1036 = vpop.f32.mrf.mxu0
      %v1037 = vadd.f32 0.0, %v1036
      %v1038 = vpop.f32.mrf.mxu0
      %v1039 = vadd.f32 0.0, %v1038
      %1040 = vmatmul.bf16.gmra.mxu0 %v840
      %v1041 = vpop.f32.mrf.mxu0
      %v1042 = vadd.f32 0.0, %v1041
      %v1043 = vpop.f32.mrf.mxu0
      %v1044 = vadd.f32 0.0, %v1043
      %1045 = vmatmul.bf16.gmra.mxu0 %v852
      %v1046 = vpop.f32.mrf.mxu0
      %v1047 = vadd.f32 0.0, %v1046
      %v1048 = vpop.f32.mrf.mxu0
      %v1049 = vadd.f32 0.0, %v1048
      %1050 = vmatmul.bf16.gmra.mxu0 %v864
      %v1051 = vpop.f32.mrf.mxu0
      %v1052 = vadd.f32 0.0, %v1051
      %v1053 = vpop.f32.mrf.mxu0
      %v1054 = vadd.f32 0.0, %v1053
      %1055 = vmatmul.bf16.gmra.mxu0 %v876
      %v1056 = vpop.f32.mrf.mxu0
      %v1057 = vadd.f32 0.0, %v1056
      %v1058 = vpop.f32.mrf.mxu0
      %v1059 = vadd.f32 0.0, %v1058
      %1060 = vmatmul.bf16.gmra.mxu0 %v888
      %v1061 = vpop.f32.mrf.mxu0
      %v1062 = vadd.f32 0.0, %v1061
      %v1063 = vpop.f32.mrf.mxu0
      %v1064 = vadd.f32 0.0, %v1063
      %1065 = vmatmul.bf16.gmra.mxu0 %v900
      %v1066 = vpop.f32.mrf.mxu0
      %v1067 = vadd.f32 0.0, %v1066
      %v1068 = vpop.f32.mrf.mxu0
      %v1069 = vadd.f32 0.0, %v1068
      %1070 = vdwg.mxu0
      %v1087 = vunpack.c.l.b16 %v696
      %v1088 = vunpack.c.l.b16 %v697
      %v1089 = vunpack.c.l.b16 %v698
      %v1090 = vunpack.c.l.b16 %v699
      %v1091 = vunpack.c.l.b16 %v700
      %v1092 = vunpack.c.l.b16 %v701
      %v1093 = vunpack.c.l.b16 %v702
      %v1094 = vunpack.c.l.b16 %v703
      %v1095 = vunpack.c.l.b16 %v704
      %v1096 = vunpack.c.l.b16 %v705
      %v1097 = vunpack.c.l.b16 %v706
      %v1098 = vunpack.c.l.b16 %v707
      %v1099 = vunpack.c.l.b16 %v708
      %v1100 = vunpack.c.l.b16 %v709
      %v1101 = vunpack.c.l.b16 %v710
      %v1102 = vunpack.c.l.b16 %v711
      %v1103 = vpack.c.b16 %v1088, %v1087
      %v1104 = vpack.c.b16 %v1090, %v1089
      %v1105 = vpack.c.b16 %v1092, %v1091
      %v1106 = vpack.c.b16 %v1094, %v1093
      %v1107 = vpack.c.b16 %v1096, %v1095
      %v1108 = vpack.c.b16 %v1098, %v1097
      %v1109 = vpack.c.b16 %v1100, %v1099
      %v1110 = vpack.c.b16 %v1102, %v1101
      %1119 = vmatpush.bf16.msra.mxu0 %v1110
      %1120 = vmatpush.bf16.msra.mxu0 %v1109
      %1121 = vmatpush.bf16.msra.mxu0 %v1108
      %1122 = vmatpush.bf16.msra.mxu0 %v1107
      %1123 = vmatpush.bf16.msra.mxu0 %v1106
      %1124 = vmatpush.bf16.msra.mxu0 %v1105
      %1125 = vmatpush.bf16.msra.mxu0 %v1104
      %1126 = vmatpush.bf16.msra.mxu0 %v1103
      %1127 = vmatmul.bf16.gmra.mxu0 0
      %v1128 = vpop.f32.mrf.mxu0
      %v1129 = vadd.f32 %v992, %v1128
      %v1130 = vpop.f32.mrf.mxu0
      %v1131 = vadd.f32 %v994, %v1130
      %1132 = vmatmul.bf16.gmra.mxu0 %v664
      %v1133 = vpop.f32.mrf.mxu0
      %v1134 = vadd.f32 %v997, %v1133
      %v1135 = vpop.f32.mrf.mxu0
      %v1136 = vadd.f32 %v999, %v1135
      %1137 = vmatmul.bf16.gmra.mxu0 %v665
      %v1138 = vpop.f32.mrf.mxu0
      %v1139 = vadd.f32 %v1002, %v1138
      %v1140 = vpop.f32.mrf.mxu0
      %v1141 = vadd.f32 %v1004, %v1140
      %1142 = vmatmul.bf16.gmra.mxu0 %v666
      %v1143 = vpop.f32.mrf.mxu0
      %v1144 = vadd.f32 %v1007, %v1143
      %v1145 = vpop.f32.mrf.mxu0
      %v1146 = vadd.f32 %v1009, %v1145
      %1147 = vmatmul.bf16.gmra.mxu0 %v667
      %v1148 = vpop.f32.mrf.mxu0
      %v1149 = vadd.f32 %v1012, %v1148
      %v1150 = vpop.f32.mrf.mxu0
      %v1151 = vadd.f32 %v1014, %v1150
      %1152 = vmatmul.bf16.gmra.mxu0 %v668
      %v1153 = vpop.f32.mrf.mxu0
      %v1154 = vadd.f32 %v1017, %v1153
      %v1155 = vpop.f32.mrf.mxu0
      %v1156 = vadd.f32 %v1019, %v1155
      %1157 = vmatmul.bf16.gmra.mxu0 %v669
      %v1158 = vpop.f32.mrf.mxu0
      %v1159 = vadd.f32 %v1022, %v1158
      %v1160 = vpop.f32.mrf.mxu0
      %v1161 = vadd.f32 %v1024, %v1160
      %1162 = vmatmul.bf16.gmra.mxu0 %v670
      %v1163 = vpop.f32.mrf.mxu0
      %v1164 = vadd.f32 %v1027, %v1163
      %v1165 = vpop.f32.mrf.mxu0
      %v1166 = vadd.f32 %v1029, %v1165
      %1167 = vmatmul.bf16.gmra.mxu0 %v671
      %v1168 = vpop.f32.mrf.mxu0
      %v1169 = vadd.f32 %v1032, %v1168
      %v1170 = vpop.f32.mrf.mxu0
      %v1171 = vadd.f32 %v1034, %v1170
      %1172 = vmatmul.bf16.gmra.mxu0 %v672
      %v1173 = vpop.f32.mrf.mxu0
      %v1174 = vadd.f32 %v1037, %v1173
      %v1175 = vpop.f32.mrf.mxu0
      %v1176 = vadd.f32 %v1039, %v1175
      %1177 = vmatmul.bf16.gmra.mxu0 %v673
      %v1178 = vpop.f32.mrf.mxu0
      %v1179 = vadd.f32 %v1042, %v1178
      %v1180 = vpop.f32.mrf.mxu0
      %v1181 = vadd.f32 %v1044, %v1180
      %1182 = vmatmul.bf16.gmra.mxu0 %v674
      %v1183 = vpop.f32.mrf.mxu0
      %v1184 = vadd.f32 %v1047, %v1183
      %v1185 = vpop.f32.mrf.mxu0
      %v1186 = vadd.f32 %v1049, %v1185
      %1187 = vmatmul.bf16.gmra.mxu0 %v675
      %v1188 = vpop.f32.mrf.mxu0
      %v1189 = vadd.f32 %v1052, %v1188
      %v1190 = vpop.f32.mrf.mxu0
      %v1191 = vadd.f32 %v1054, %v1190
      %1192 = vmatmul.bf16.gmra.mxu0 %v676
      %v1193 = vpop.f32.mrf.mxu0
      %v1194 = vadd.f32 %v1057, %v1193
      %v1195 = vpop.f32.mrf.mxu0
      %v1196 = vadd.f32 %v1059, %v1195
      %1197 = vmatmul.bf16.gmra.mxu0 %v677
      %v1198 = vpop.f32.mrf.mxu0
      %v1199 = vadd.f32 %v1062, %v1198
      %v1200 = vpop.f32.mrf.mxu0
      %v1201 = vadd.f32 %v1064, %v1200
      %1202 = vmatmul.bf16.gmra.mxu0 %v678
      %v1203 = vpop.f32.mrf.mxu0
      %v1204 = vadd.f32 %v1067, %v1203
      %v1205 = vpop.f32.mrf.mxu0
      %v1206 = vadd.f32 %v1069, %v1205
      %1207 = vdwg.mxu0
      %vm1239 = vcmask 1046528
      %v1240 = vrot.slane 0, 1
      %v1241 = vsel %vm1239, %v1240, %v1240
      %v1242 = vrot.slane %v664, 1
      %v1243 = vrot.slane %v680, 1
      %v1244 = vsel %vm1239, %v1242, %v1243
      %v1245 = vrot.slane %v665, 1
      %v1246 = vrot.slane %v681, 1
      %v1247 = vsel %vm1239, %v1245, %v1246
      %v1248 = vrot.slane %v666, 1
      %v1249 = vrot.slane %v682, 1
      %v1250 = vsel %vm1239, %v1248, %v1249
      %v1251 = vrot.slane %v667, 1
      %v1252 = vrot.slane %v683, 1
      %v1253 = vsel %vm1239, %v1251, %v1252
      %v1254 = vrot.slane %v668, 1
      %v1255 = vrot.slane %v684, 1
      %v1256 = vsel %vm1239, %v1254, %v1255
      %v1257 = vrot.slane %v669, 1
      %v1258 = vrot.slane %v685, 1
      %v1259 = vsel %vm1239, %v1257, %v1258
      %v1260 = vrot.slane %v670, 1
      %v1261 = vrot.slane %v686, 1
      %v1262 = vsel %vm1239, %v1260, %v1261
      %v1263 = vrot.slane %v671, 1
      %v1264 = vrot.slane %v687, 1
      %v1265 = vsel %vm1239, %v1263, %v1264
      %v1266 = vrot.slane %v672, 1
      %v1267 = vrot.slane %v688, 1
      %v1268 = vsel %vm1239, %v1266, %v1267
      %v1269 = vrot.slane %v673, 1
      %v1270 = vrot.slane %v689, 1
      %v1271 = vsel %vm1239, %v1269, %v1270
      %v1272 = vrot.slane %v674, 1
      %v1273 = vrot.slane %v690, 1
      %v1274 = vsel %vm1239, %v1272, %v1273
      %v1275 = vrot.slane %v675, 1
      %v1276 = vrot.slane %v691, 1
      %v1277 = vsel %vm1239, %v1275, %v1276
      %v1278 = vrot.slane %v676, 1
      %v1279 = vrot.slane %v692, 1
      %v1280 = vsel %vm1239, %v1278, %v1279
      %v1281 = vrot.slane %v677, 1
      %v1282 = vrot.slane %v693, 1
      %v1283 = vsel %vm1239, %v1281, %v1282
      %v1284 = vrot.slane %v678, 1
      %v1285 = vrot.slane %v694, 1
      %v1286 = vsel %vm1239, %v1284, %v1285
      %s1303 = scalar_lea.vmem %s3, 128
      %v1304 = vld [vmem:[%s1303] sm:$0xf]
      %v1305 = vld [vmem:[%s1303 + $0x4] sm:$0xf]
      %v1306 = vld [vmem:[%s1303 + $0x8] sm:$0xf]
      %v1307 = vld [vmem:[%s1303 + $0xc] sm:$0xf]
      %v1308 = vld [vmem:[%s1303 + $0x10] sm:$0xf]
      %v1309 = vld [vmem:[%s1303 + $0x14] sm:$0xf]
      %v1310 = vld [vmem:[%s1303 + $0x18] sm:$0xf]
      %v1311 = vld [vmem:[%s1303 + $0x1c] sm:$0xf]
      %v1312 = vld [vmem:[%s1303 + $0x20] sm:$0xf]
      %v1313 = vld [vmem:[%s1303 + $0x24] sm:$0xf]
      %v1314 = vld [vmem:[%s1303 + $0x28] sm:$0xf]
      %v1315 = vld [vmem:[%s1303 + $0x2c] sm:$0xf]
      %v1316 = vld [vmem:[%s1303 + $0x30] sm:$0xf]
      %v1317 = vld [vmem:[%s1303 + $0x34] sm:$0xf]
      %v1318 = vld [vmem:[%s1303 + $0x38] sm:$0xf]
      %v1319 = vld [vmem:[%s1303 + $0x3c] sm:$0xf]
      %v1336 = vunpack.c.l.b16 %v1304
      %v1337 = vunpack.c.l.b16 %v1305
      %v1338 = vunpack.c.l.b16 %v1306
      %v1339 = vunpack.c.l.b16 %v1307
      %v1340 = vunpack.c.l.b16 %v1308
      %v1341 = vunpack.c.l.b16 %v1309
      %v1342 = vunpack.c.l.b16 %v1310
      %v1343 = vunpack.c.l.b16 %v1311
      %v1344 = vunpack.c.l.b16 %v1312
      %v1345 = vunpack.c.l.b16 %v1313
      %v1346 = vunpack.c.l.b16 %v1314
      %v1347 = vunpack.c.l.b16 %v1315
      %v1348 = vunpack.c.l.b16 %v1316
      %v1349 = vunpack.c.l.b16 %v1317
      %v1350 = vunpack.c.l.b16 %v1318
      %v1351 = vunpack.c.l.b16 %v1319
      %v1352 = vpack.c.b16 %v1337, %v1336
      %v1353 = vpack.c.b16 %v1339, %v1338
      %v1354 = vpack.c.b16 %v1341, %v1340
      %v1355 = vpack.c.b16 %v1343, %v1342
      %v1356 = vpack.c.b16 %v1345, %v1344
      %v1357 = vpack.c.b16 %v1347, %v1346
      %v1358 = vpack.c.b16 %v1349, %v1348
      %v1359 = vpack.c.b16 %v1351, %v1350
      %1368 = vmatpush.bf16.msra.mxu0 %v1359
      %1369 = vmatpush.bf16.msra.mxu0 %v1358
      %1370 = vmatpush.bf16.msra.mxu0 %v1357
      %1371 = vmatpush.bf16.msra.mxu0 %v1356
      %1372 = vmatpush.bf16.msra.mxu0 %v1355
      %1373 = vmatpush.bf16.msra.mxu0 %v1354
      %1374 = vmatpush.bf16.msra.mxu0 %v1353
      %1375 = vmatpush.bf16.msra.mxu0 %v1352
      %1376 = vmatmul.bf16.gmra.mxu0 %v1241
      %v1377 = vpop.f32.mrf.mxu0
      %v1378 = vadd.f32 0.0, %v1377
      %v1379 = vpop.f32.mrf.mxu0
      %v1380 = vadd.f32 0.0, %v1379
      %1381 = vmatmul.bf16.gmra.mxu0 %v1244
      %v1382 = vpop.f32.mrf.mxu0
      %v1383 = vadd.f32 0.0, %v1382
      %v1384 = vpop.f32.mrf.mxu0
      %v1385 = vadd.f32 0.0, %v1384
      %1386 = vmatmul.bf16.gmra.mxu0 %v1247
      %v1387 = vpop.f32.mrf.mxu0
      %v1388 = vadd.f32 0.0, %v1387
      %v1389 = vpop.f32.mrf.mxu0
      %v1390 = vadd.f32 0.0, %v1389
      %1391 = vmatmul.bf16.gmra.mxu0 %v1250
      %v1392 = vpop.f32.mrf.mxu0
      %v1393 = vadd.f32 0.0, %v1392
      %v1394 = vpop.f32.mrf.mxu0
      %v1395 = vadd.f32 0.0, %v1394
      %1396 = vmatmul.bf16.gmra.mxu0 %v1253
      %v1397 = vpop.f32.mrf.mxu0
      %v1398 = vadd.f32 0.0, %v1397
      %v1399 = vpop.f32.mrf.mxu0
      %v1400 = vadd.f32 0.0, %v1399
      %1401 = vmatmul.bf16.gmra.mxu0 %v1256
      %v1402 = vpop.f32.mrf.mxu0
      %v1403 = vadd.f32 0.0, %v1402
      %v1404 = vpop.f32.mrf.mxu0
      %v1405 = vadd.f32 0.0, %v1404
      %1406 = vmatmul.bf16.gmra.mxu0 %v1259
      %v1407 = vpop.f32.mrf.mxu0
      %v1408 = vadd.f32 0.0, %v1407
      %v1409 = vpop.f32.mrf.mxu0
      %v1410 = vadd.f32 0.0, %v1409
      %1411 = vmatmul.bf16.gmra.mxu0 %v1262
      %v1412 = vpop.f32.mrf.mxu0
      %v1413 = vadd.f32 0.0, %v1412
      %v1414 = vpop.f32.mrf.mxu0
      %v1415 = vadd.f32 0.0, %v1414
      %1416 = vmatmul.bf16.gmra.mxu0 %v1265
      %v1417 = vpop.f32.mrf.mxu0
      %v1418 = vadd.f32 0.0, %v1417
      %v1419 = vpop.f32.mrf.mxu0
      %v1420 = vadd.f32 0.0, %v1419
      %1421 = vmatmul.bf16.gmra.mxu0 %v1268
      %v1422 = vpop.f32.mrf.mxu0
      %v1423 = vadd.f32 0.0, %v1422
      %v1424 = vpop.f32.mrf.mxu0
      %v1425 = vadd.f32 0.0, %v1424
      %1426 = vmatmul.bf16.gmra.mxu0 %v1271
      %v1427 = vpop.f32.mrf.mxu0
      %v1428 = vadd.f32 0.0, %v1427
      %v1429 = vpop.f32.mrf.mxu0
      %v1430 = vadd.f32 0.0, %v1429
      %1431 = vmatmul.bf16.gmra.mxu0 %v1274
      %v1432 = vpop.f32.mrf.mxu0
      %v1433 = vadd.f32 0.0, %v1432
      %v1434 = vpop.f32.mrf.mxu0
      %v1435 = vadd.f32 0.0, %v1434
      %1436 = vmatmul.bf16.gmra.mxu0 %v1277
      %v1437 = vpop.f32.mrf.mxu0
      %v1438 = vadd.f32 0.0, %v1437
      %v1439 = vpop.f32.mrf.mxu0
      %v1440 = vadd.f32 0.0, %v1439
      %1441 = vmatmul.bf16.gmra.mxu0 %v1280
      %v1442 = vpop.f32.mrf.mxu0
      %v1443 = vadd.f32 0.0, %v1442
      %v1444 = vpop.f32.mrf.mxu0
      %v1445 = vadd.f32 0.0, %v1444
      %1446 = vmatmul.bf16.gmra.mxu0 %v1283
      %v1447 = vpop.f32.mrf.mxu0
      %v1448 = vadd.f32 0.0, %v1447
      %v1449 = vpop.f32.mrf.mxu0
      %v1450 = vadd.f32 0.0, %v1449
      %1451 = vmatmul.bf16.gmra.mxu0 %v1286
      %v1452 = vpop.f32.mrf.mxu0
      %v1453 = vadd.f32 0.0, %v1452
      %v1454 = vpop.f32.mrf.mxu0
      %v1455 = vadd.f32 0.0, %v1454
      %1456 = vdwg.mxu0
      %v1457 = vadd.f32 %v1129, %v1378
      %v1458 = vadd.f32 %v1131, %v1380
      %v1459 = vadd.f32 %v1134, %v1383
      %v1460 = vadd.f32 %v1136, %v1385
      %v1461 = vadd.f32 %v1139, %v1388
      %v1462 = vadd.f32 %v1141, %v1390
      %v1463 = vadd.f32 %v1144, %v1393
      %v1464 = vadd.f32 %v1146, %v1395
      %v1465 = vadd.f32 %v1149, %v1398
      %v1466 = vadd.f32 %v1151, %v1400
      %v1467 = vadd.f32 %v1154, %v1403
      %v1468 = vadd.f32 %v1156, %v1405
      %v1469 = vadd.f32 %v1159, %v1408
      %v1470 = vadd.f32 %v1161, %v1410
      %v1471 = vadd.f32 %v1164, %v1413
      %v1472 = vadd.f32 %v1166, %v1415
      %v1473 = vadd.f32 %v1169, %v1418
      %v1474 = vadd.f32 %v1171, %v1420
      %v1475 = vadd.f32 %v1174, %v1423
      %v1476 = vadd.f32 %v1176, %v1425
      %v1477 = vadd.f32 %v1179, %v1428
      %v1478 = vadd.f32 %v1181, %v1430
      %v1479 = vadd.f32 %v1184, %v1433
      %v1480 = vadd.f32 %v1186, %v1435
      %v1481 = vadd.f32 %v1189, %v1438
      %v1482 = vadd.f32 %v1191, %v1440
      %v1483 = vadd.f32 %v1194, %v1443
      %v1484 = vadd.f32 %v1196, %v1445
      %v1485 = vadd.f32 %v1199, %v1448
      %v1486 = vadd.f32 %v1201, %v1450
      %v1487 = vadd.f32 %v1204, %v1453
      %v1488 = vadd.f32 %v1206, %v1455
      %s1489 = scalar_lea.vmem %s3, 192
      %v1490 = vld [vmem:[%s1489] sm:$0xf]
      %v1491 = vld [vmem:[%s1489 + $0x4] sm:$0xf]
      %v1492 = vld [vmem:[%s1489 + $0x8] sm:$0xf]
      %v1493 = vld [vmem:[%s1489 + $0xc] sm:$0xf]
      %v1494 = vld [vmem:[%s1489 + $0x10] sm:$0xf]
      %v1495 = vld [vmem:[%s1489 + $0x14] sm:$0xf]
      %v1496 = vld [vmem:[%s1489 + $0x18] sm:$0xf]
      %v1497 = vld [vmem:[%s1489 + $0x1c] sm:$0xf]
      %v1498 = vld [vmem:[%s1489 + $0x20] sm:$0xf]
      %v1499 = vld [vmem:[%s1489 + $0x24] sm:$0xf]
      %v1500 = vld [vmem:[%s1489 + $0x28] sm:$0xf]
      %v1501 = vld [vmem:[%s1489 + $0x2c] sm:$0xf]
      %v1502 = vld [vmem:[%s1489 + $0x30] sm:$0xf]
      %v1503 = vld [vmem:[%s1489 + $0x34] sm:$0xf]
      %v1504 = vld [vmem:[%s1489 + $0x38] sm:$0xf]
      %v1505 = vld [vmem:[%s1489 + $0x3c] sm:$0xf]
      %v1522 = vunpack.c.l.b16 %v1490
      %v1523 = vunpack.c.l.b16 %v1491
      %v1524 = vunpack.c.l.b16 %v1492
      %v1525 = vunpack.c.l.b16 %v1493
      %v1526 = vunpack.c.l.b16 %v1494
      %v1527 = vunpack.c.l.b16 %v1495
      %v1528 = vunpack.c.l.b16 %v1496
      %v1529 = vunpack.c.l.b16 %v1497
      %v1530 = vunpack.c.l.b16 %v1498
      %v1531 = vunpack.c.l.b16 %v1499
      %v1532 = vunpack.c.l.b16 %v1500
      %v1533 = vunpack.c.l.b16 %v1501
      %v1534 = vunpack.c.l.b16 %v1502
      %v1535 = vunpack.c.l.b16 %v1503
      %v1536 = vunpack.c.l.b16 %v1504
      %v1537 = vunpack.c.l.b16 %v1505
      %v1538 = vpack.c.b16 %v1523, %v1522
      %v1539 = vpack.c.b16 %v1525, %v1524
      %v1540 = vpack.c.b16 %v1527, %v1526
      %v1541 = vpack.c.b16 %v1529, %v1528
      %v1542 = vpack.c.b16 %v1531, %v1530
      %v1543 = vpack.c.b16 %v1533, %v1532
      %v1544 = vpack.c.b16 %v1535, %v1534
      %v1545 = vpack.c.b16 %v1537, %v1536
      %1554 = vmatpush.bf16.msra.mxu0 %v1545
      %1555 = vmatpush.bf16.msra.mxu0 %v1544
      %1556 = vmatpush.bf16.msra.mxu0 %v1543
      %1557 = vmatpush.bf16.msra.mxu0 %v1542
      %1558 = vmatpush.bf16.msra.mxu0 %v1541
      %1559 = vmatpush.bf16.msra.mxu0 %v1540
      %1560 = vmatpush.bf16.msra.mxu0 %v1539
      %1561 = vmatpush.bf16.msra.mxu0 %v1538
      %1562 = vmatmul.bf16.gmra.mxu0 %v664
      %v1563 = vpop.f32.mrf.mxu0
      %v1564 = vadd.f32 0.0, %v1563
      %v1565 = vpop.f32.mrf.mxu0
      %v1566 = vadd.f32 0.0, %v1565
      %1567 = vmatmul.bf16.gmra.mxu0 %v665
      %v1568 = vpop.f32.mrf.mxu0
      %v1569 = vadd.f32 0.0, %v1568
      %v1570 = vpop.f32.mrf.mxu0
      %v1571 = vadd.f32 0.0, %v1570
      %1572 = vmatmul.bf16.gmra.mxu0 %v666
      %v1573 = vpop.f32.mrf.mxu0
      %v1574 = vadd.f32 0.0, %v1573
      %v1575 = vpop.f32.mrf.mxu0
      %v1576 = vadd.f32 0.0, %v1575
      %1577 = vmatmul.bf16.gmra.mxu0 %v667
      %v1578 = vpop.f32.mrf.mxu0
      %v1579 = vadd.f32 0.0, %v1578
      %v1580 = vpop.f32.mrf.mxu0
      %v1581 = vadd.f32 0.0, %v1580
      %1582 = vmatmul.bf16.gmra.mxu0 %v668
      %v1583 = vpop.f32.mrf.mxu0
      %v1584 = vadd.f32 0.0, %v1583
      %v1585 = vpop.f32.mrf.mxu0
      %v1586 = vadd.f32 0.0, %v1585
      %1587 = vmatmul.bf16.gmra.mxu0 %v669
      %v1588 = vpop.f32.mrf.mxu0
      %v1589 = vadd.f32 0.0, %v1588
      %v1590 = vpop.f32.mrf.mxu0
      %v1591 = vadd.f32 0.0, %v1590
      %1592 = vmatmul.bf16.gmra.mxu0 %v670
      %v1593 = vpop.f32.mrf.mxu0
      %v1594 = vadd.f32 0.0, %v1593
      %v1595 = vpop.f32.mrf.mxu0
      %v1596 = vadd.f32 0.0, %v1595
      %1597 = vmatmul.bf16.gmra.mxu0 %v671
      %v1598 = vpop.f32.mrf.mxu0
      %v1599 = vadd.f32 0.0, %v1598
      %v1600 = vpop.f32.mrf.mxu0
      %v1601 = vadd.f32 0.0, %v1600
      %1602 = vmatmul.bf16.gmra.mxu0 %v672
      %v1603 = vpop.f32.mrf.mxu0
      %v1604 = vadd.f32 0.0, %v1603
      %v1605 = vpop.f32.mrf.mxu0
      %v1606 = vadd.f32 0.0, %v1605
      %1607 = vmatmul.bf16.gmra.mxu0 %v673
      %v1608 = vpop.f32.mrf.mxu0
      %v1609 = vadd.f32 0.0, %v1608
      %v1610 = vpop.f32.mrf.mxu0
      %v1611 = vadd.f32 0.0, %v1610
      %1612 = vmatmul.bf16.gmra.mxu0 %v674
      %v1613 = vpop.f32.mrf.mxu0
      %v1614 = vadd.f32 0.0, %v1613
      %v1615 = vpop.f32.mrf.mxu0
      %v1616 = vadd.f32 0.0, %v1615
      %1617 = vmatmul.bf16.gmra.mxu0 %v675
      %v1618 = vpop.f32.mrf.mxu0
      %v1619 = vadd.f32 0.0, %v1618
      %v1620 = vpop.f32.mrf.mxu0
      %v1621 = vadd.f32 0.0, %v1620
      %1622 = vmatmul.bf16.gmra.mxu0 %v676
      %v1623 = vpop.f32.mrf.mxu0
      %v1624 = vadd.f32 0.0, %v1623
      %v1625 = vpop.f32.mrf.mxu0
      %v1626 = vadd.f32 0.0, %v1625
      %1627 = vmatmul.bf16.gmra.mxu0 %v677
      %v1628 = vpop.f32.mrf.mxu0
      %v1629 = vadd.f32 0.0, %v1628
      %v1630 = vpop.f32.mrf.mxu0
      %v1631 = vadd.f32 0.0, %v1630
      %1632 = vmatmul.bf16.gmra.mxu0 %v678
      %v1633 = vpop.f32.mrf.mxu0
      %v1634 = vadd.f32 0.0, %v1633
      %v1635 = vpop.f32.mrf.mxu0
      %v1636 = vadd.f32 0.0, %v1635
      %1637 = vmatmul.bf16.gmra.mxu0 %v679
      %v1638 = vpop.f32.mrf.mxu0
      %v1639 = vadd.f32 0.0, %v1638
      %v1640 = vpop.f32.mrf.mxu0
      %v1641 = vadd.f32 0.0, %v1640
      %1642 = vdwg.mxu0
      %v1643 = vadd.f32 %v1457, %v1564
      %v1644 = vadd.f32 %v1458, %v1566
      %v1645 = vadd.f32 %v1459, %v1569
      %v1646 = vadd.f32 %v1460, %v1571
      %v1647 = vadd.f32 %v1461, %v1574
      %v1648 = vadd.f32 %v1462, %v1576
      %v1649 = vadd.f32 %v1463, %v1579
      %v1650 = vadd.f32 %v1464, %v1581
      %v1651 = vadd.f32 %v1465, %v1584
      %v1652 = vadd.f32 %v1466, %v1586
      %v1653 = vadd.f32 %v1467, %v1589
      %v1654 = vadd.f32 %v1468, %v1591
      %v1655 = vadd.f32 %v1469, %v1594
      %v1656 = vadd.f32 %v1470, %v1596
      %v1657 = vadd.f32 %v1471, %v1599
      %v1658 = vadd.f32 %v1472, %v1601
      %v1659 = vadd.f32 %v1473, %v1604
      %v1660 = vadd.f32 %v1474, %v1606
      %v1661 = vadd.f32 %v1475, %v1609
      %v1662 = vadd.f32 %v1476, %v1611
      %v1663 = vadd.f32 %v1477, %v1614
      %v1664 = vadd.f32 %v1478, %v1616
      %v1665 = vadd.f32 %v1479, %v1619
      %v1666 = vadd.f32 %v1480, %v1621
      %v1667 = vadd.f32 %v1481, %v1624
      %v1668 = vadd.f32 %v1482, %v1626
      %v1669 = vadd.f32 %v1483, %v1629
      %v1670 = vadd.f32 %v1484, %v1631
      %v1671 = vadd.f32 %v1485, %v1634
      %v1672 = vadd.f32 %v1486, %v1636
      %v1673 = vadd.f32 %v1487, %v1639
      %v1674 = vadd.f32 %v1488, %v1641
      %v1676 = vshrl.u32 %v679, 16
      %v1678 = vshll.u32 %v679, 16
      %v1680 = vrot.slane %v1678, 1
      %v1681 = vor.u32 %v1676, %v1680
      %v1683 = vshll.u32 %v695, 16
      %v1685 = vrot.slane %v1683, 1
      %v1686 = vsel %vm712, %v1681, %v1685
      %s1688 = scalar_lea.vmem %s3, 256
      %v1689 = vld [vmem:[%s1688] sm:$0xf]
      %v1690 = vld [vmem:[%s1688 + $0x4] sm:$0xf]
      %v1691 = vld [vmem:[%s1688 + $0x8] sm:$0xf]
      %v1692 = vld [vmem:[%s1688 + $0xc] sm:$0xf]
      %v1693 = vld [vmem:[%s1688 + $0x10] sm:$0xf]
      %v1694 = vld [vmem:[%s1688 + $0x14] sm:$0xf]
      %v1695 = vld [vmem:[%s1688 + $0x18] sm:$0xf]
      %v1696 = vld [vmem:[%s1688 + $0x1c] sm:$0xf]
      %v1697 = vld [vmem:[%s1688 + $0x20] sm:$0xf]
      %v1698 = vld [vmem:[%s1688 + $0x24] sm:$0xf]
      %v1699 = vld [vmem:[%s1688 + $0x28] sm:$0xf]
      %v1700 = vld [vmem:[%s1688 + $0x2c] sm:$0xf]
      %v1701 = vld [vmem:[%s1688 + $0x30] sm:$0xf]
      %v1702 = vld [vmem:[%s1688 + $0x34] sm:$0xf]
      %v1703 = vld [vmem:[%s1688 + $0x38] sm:$0xf]
      %v1704 = vld [vmem:[%s1688 + $0x3c] sm:$0xf]
      %v1721 = vunpack.c.l.b16 %v1689
      %v1722 = vunpack.c.l.b16 %v1690
      %v1723 = vunpack.c.l.b16 %v1691
      %v1724 = vunpack.c.l.b16 %v1692
      %v1725 = vunpack.c.l.b16 %v1693
      %v1726 = vunpack.c.l.b16 %v1694
      %v1727 = vunpack.c.l.b16 %v1695
      %v1728 = vunpack.c.l.b16 %v1696
      %v1729 = vunpack.c.l.b16 %v1697
      %v1730 = vunpack.c.l.b16 %v1698
      %v1731 = vunpack.c.l.b16 %v1699
      %v1732 = vunpack.c.l.b16 %v1700
      %v1733 = vunpack.c.l.b16 %v1701
      %v1734 = vunpack.c.l.b16 %v1702
      %v1735 = vunpack.c.l.b16 %v1703
      %v1736 = vunpack.c.l.b16 %v1704
      %v1737 = vpack.c.b16 %v1722, %v1721
      %v1738 = vpack.c.b16 %v1724, %v1723
      %v1739 = vpack.c.b16 %v1726, %v1725
      %v1740 = vpack.c.b16 %v1728, %v1727
      %v1741 = vpack.c.b16 %v1730, %v1729
      %v1742 = vpack.c.b16 %v1732, %v1731
      %v1743 = vpack.c.b16 %v1734, %v1733
      %v1744 = vpack.c.b16 %v1736, %v1735
      %1753 = vmatpush.bf16.msra.mxu0 %v1744
      %1754 = vmatpush.bf16.msra.mxu0 %v1743
      %1755 = vmatpush.bf16.msra.mxu0 %v1742
      %1756 = vmatpush.bf16.msra.mxu0 %v1741
      %1757 = vmatpush.bf16.msra.mxu0 %v1740
      %1758 = vmatpush.bf16.msra.mxu0 %v1739
      %1759 = vmatpush.bf16.msra.mxu0 %v1738
      %1760 = vmatpush.bf16.msra.mxu0 %v1737
      %1761 = vmatmul.bf16.gmra.mxu0 %v732
      %v1762 = vpop.f32.mrf.mxu0
      %v1763 = vadd.f32 0.0, %v1762
      %v1764 = vpop.f32.mrf.mxu0
      %v1765 = vadd.f32 0.0, %v1764
      %1766 = vmatmul.bf16.gmra.mxu0 %v744
      %v1767 = vpop.f32.mrf.mxu0
      %v1768 = vadd.f32 0.0, %v1767
      %v1769 = vpop.f32.mrf.mxu0
      %v1770 = vadd.f32 0.0, %v1769
      %1771 = vmatmul.bf16.gmra.mxu0 %v756
      %v1772 = vpop.f32.mrf.mxu0
      %v1773 = vadd.f32 0.0, %v1772
      %v1774 = vpop.f32.mrf.mxu0
      %v1775 = vadd.f32 0.0, %v1774
      %1776 = vmatmul.bf16.gmra.mxu0 %v768
      %v1777 = vpop.f32.mrf.mxu0
      %v1778 = vadd.f32 0.0, %v1777
      %v1779 = vpop.f32.mrf.mxu0
      %v1780 = vadd.f32 0.0, %v1779
      %1781 = vmatmul.bf16.gmra.mxu0 %v780
      %v1782 = vpop.f32.mrf.mxu0
      %v1783 = vadd.f32 0.0, %v1782
      %v1784 = vpop.f32.mrf.mxu0
      %v1785 = vadd.f32 0.0, %v1784
      %1786 = vmatmul.bf16.gmra.mxu0 %v792
      %v1787 = vpop.f32.mrf.mxu0
      %v1788 = vadd.f32 0.0, %v1787
      %v1789 = vpop.f32.mrf.mxu0
      %v1790 = vadd.f32 0.0, %v1789
      %1791 = vmatmul.bf16.gmra.mxu0 %v804
      %v1792 = vpop.f32.mrf.mxu0
      %v1793 = vadd.f32 0.0, %v1792
      %v1794 = vpop.f32.mrf.mxu0
      %v1795 = vadd.f32 0.0, %v1794
      %1796 = vmatmul.bf16.gmra.mxu0 %v816
      %v1797 = vpop.f32.mrf.mxu0
      %v1798 = vadd.f32 0.0, %v1797
      %v1799 = vpop.f32.mrf.mxu0
      %v1800 = vadd.f32 0.0, %v1799
      %1801 = vmatmul.bf16.gmra.mxu0 %v828
      %v1802 = vpop.f32.mrf.mxu0
      %v1803 = vadd.f32 0.0, %v1802
      %v1804 = vpop.f32.mrf.mxu0
      %v1805 = vadd.f32 0.0, %v1804
      %1806 = vmatmul.bf16.gmra.mxu0 %v840
      %v1807 = vpop.f32.mrf.mxu0
      %v1808 = vadd.f32 0.0, %v1807
      %v1809 = vpop.f32.mrf.mxu0
      %v1810 = vadd.f32 0.0, %v1809
      %1811 = vmatmul.bf16.gmra.mxu0 %v852
      %v1812 = vpop.f32.mrf.mxu0
      %v1813 = vadd.f32 0.0, %v1812
      %v1814 = vpop.f32.mrf.mxu0
      %v1815 = vadd.f32 0.0, %v1814
      %1816 = vmatmul.bf16.gmra.mxu0 %v864
      %v1817 = vpop.f32.mrf.mxu0
      %v1818 = vadd.f32 0.0, %v1817
      %v1819 = vpop.f32.mrf.mxu0
      %v1820 = vadd.f32 0.0, %v1819
      %1821 = vmatmul.bf16.gmra.mxu0 %v876
      %v1822 = vpop.f32.mrf.mxu0
      %v1823 = vadd.f32 0.0, %v1822
      %v1824 = vpop.f32.mrf.mxu0
      %v1825 = vadd.f32 0.0, %v1824
      %1826 = vmatmul.bf16.gmra.mxu0 %v888
      %v1827 = vpop.f32.mrf.mxu0
      %v1828 = vadd.f32 0.0, %v1827
      %v1829 = vpop.f32.mrf.mxu0
      %v1830 = vadd.f32 0.0, %v1829
      %1831 = vmatmul.bf16.gmra.mxu0 %v900
      %v1832 = vpop.f32.mrf.mxu0
      %v1833 = vadd.f32 0.0, %v1832
      %v1834 = vpop.f32.mrf.mxu0
      %v1835 = vadd.f32 0.0, %v1834
      %1836 = vmatmul.bf16.gmra.mxu0 %v1686
      %v1837 = vpop.f32.mrf.mxu0
      %v1838 = vadd.f32 0.0, %v1837
      %v1839 = vpop.f32.mrf.mxu0
      %v1840 = vadd.f32 0.0, %v1839
      %1841 = vdwg.mxu0
      %v1842 = vadd.f32 %v1643, %v1763
      %v1843 = vadd.f32 %v1644, %v1765
      %v1844 = vadd.f32 %v1645, %v1768
      %v1845 = vadd.f32 %v1646, %v1770
      %v1846 = vadd.f32 %v1647, %v1773
      %v1847 = vadd.f32 %v1648, %v1775
      %v1848 = vadd.f32 %v1649, %v1778
      %v1849 = vadd.f32 %v1650, %v1780
      %v1850 = vadd.f32 %v1651, %v1783
      %v1851 = vadd.f32 %v1652, %v1785
      %v1852 = vadd.f32 %v1653, %v1788
      %v1853 = vadd.f32 %v1654, %v1790
      %v1854 = vadd.f32 %v1655, %v1793
      %v1855 = vadd.f32 %v1656, %v1795
      %v1856 = vadd.f32 %v1657, %v1798
      %v1857 = vadd.f32 %v1658, %v1800
      %v1858 = vadd.f32 %v1659, %v1803
      %v1859 = vadd.f32 %v1660, %v1805
      %v1860 = vadd.f32 %v1661, %v1808
      %v1861 = vadd.f32 %v1662, %v1810
      %v1862 = vadd.f32 %v1663, %v1813
      %v1863 = vadd.f32 %v1664, %v1815
      %v1864 = vadd.f32 %v1665, %v1818
      %v1865 = vadd.f32 %v1666, %v1820
      %v1866 = vadd.f32 %v1667, %v1823
      %v1867 = vadd.f32 %v1668, %v1825
      %v1868 = vadd.f32 %v1669, %v1828
      %v1869 = vadd.f32 %v1670, %v1830
      %v1870 = vadd.f32 %v1671, %v1833
      %v1871 = vadd.f32 %v1672, %v1835
      %v1872 = vadd.f32 %v1673, %v1838
      %v1873 = vadd.f32 %v1674, %v1840
      %v1876 = vrot.slane %v679, 1
      %v1877 = vrot.slane %v695, 1
      %v1878 = vsel %vm1239, %v1876, %v1877
      %s1880 = scalar_lea.vmem %s3, 320
      %v1881 = vld [vmem:[%s1880] sm:$0xf]
      %v1882 = vld [vmem:[%s1880 + $0x4] sm:$0xf]
      %v1883 = vld [vmem:[%s1880 + $0x8] sm:$0xf]
      %v1884 = vld [vmem:[%s1880 + $0xc] sm:$0xf]
      %v1885 = vld [vmem:[%s1880 + $0x10] sm:$0xf]
      %v1886 = vld [vmem:[%s1880 + $0x14] sm:$0xf]
      %v1887 = vld [vmem:[%s1880 + $0x18] sm:$0xf]
      %v1888 = vld [vmem:[%s1880 + $0x1c] sm:$0xf]
      %v1889 = vld [vmem:[%s1880 + $0x20] sm:$0xf]
      %v1890 = vld [vmem:[%s1880 + $0x24] sm:$0xf]
      %v1891 = vld [vmem:[%s1880 + $0x28] sm:$0xf]
      %v1892 = vld [vmem:[%s1880 + $0x2c] sm:$0xf]
      %v1893 = vld [vmem:[%s1880 + $0x30] sm:$0xf]
      %v1894 = vld [vmem:[%s1880 + $0x34] sm:$0xf]
      %v1895 = vld [vmem:[%s1880 + $0x38] sm:$0xf]
      %v1896 = vld [vmem:[%s1880 + $0x3c] sm:$0xf]
      %v1913 = vunpack.c.l.b16 %v1881
      %v1914 = vunpack.c.l.b16 %v1882
      %v1915 = vunpack.c.l.b16 %v1883
      %v1916 = vunpack.c.l.b16 %v1884
      %v1917 = vunpack.c.l.b16 %v1885
      %v1918 = vunpack.c.l.b16 %v1886
      %v1919 = vunpack.c.l.b16 %v1887
      %v1920 = vunpack.c.l.b16 %v1888
      %v1921 = vunpack.c.l.b16 %v1889
      %v1922 = vunpack.c.l.b16 %v1890
      %v1923 = vunpack.c.l.b16 %v1891
      %v1924 = vunpack.c.l.b16 %v1892
      %v1925 = vunpack.c.l.b16 %v1893
      %v1926 = vunpack.c.l.b16 %v1894
      %v1927 = vunpack.c.l.b16 %v1895
      %v1928 = vunpack.c.l.b16 %v1896
      %v1929 = vpack.c.b16 %v1914, %v1913
      %v1930 = vpack.c.b16 %v1916, %v1915
      %v1931 = vpack.c.b16 %v1918, %v1917
      %v1932 = vpack.c.b16 %v1920, %v1919
      %v1933 = vpack.c.b16 %v1922, %v1921
      %v1934 = vpack.c.b16 %v1924, %v1923
      %v1935 = vpack.c.b16 %v1926, %v1925
      %v1936 = vpack.c.b16 %v1928, %v1927
      %1945 = vmatpush.bf16.msra.mxu0 %v1936
      %1946 = vmatpush.bf16.msra.mxu0 %v1935
      %1947 = vmatpush.bf16.msra.mxu0 %v1934
      %1948 = vmatpush.bf16.msra.mxu0 %v1933
      %1949 = vmatpush.bf16.msra.mxu0 %v1932
      %1950 = vmatpush.bf16.msra.mxu0 %v1931
      %1951 = vmatpush.bf16.msra.mxu0 %v1930
      %1952 = vmatpush.bf16.msra.mxu0 %v1929
      %1953 = vmatmul.bf16.gmra.mxu0 %v1244
      %v1954 = vpop.f32.mrf.mxu0
      %v1955 = vadd.f32 0.0, %v1954
      %v1956 = vpop.f32.mrf.mxu0
      %v1957 = vadd.f32 0.0, %v1956
      %1958 = vmatmul.bf16.gmra.mxu0 %v1247
      %v1959 = vpop.f32.mrf.mxu0
      %v1960 = vadd.f32 0.0, %v1959
      %v1961 = vpop.f32.mrf.mxu0
      %v1962 = vadd.f32 0.0, %v1961
      %1963 = vmatmul.bf16.gmra.mxu0 %v1250
      %v1964 = vpop.f32.mrf.mxu0
      %v1965 = vadd.f32 0.0, %v1964
      %v1966 = vpop.f32.mrf.mxu0
      %v1967 = vadd.f32 0.0, %v1966
      %1968 = vmatmul.bf16.gmra.mxu0 %v1253
      %v1969 = vpop.f32.mrf.mxu0
      %v1970 = vadd.f32 0.0, %v1969
      %v1971 = vpop.f32.mrf.mxu0
      %v1972 = vadd.f32 0.0, %v1971
      %1973 = vmatmul.bf16.gmra.mxu0 %v1256
      %v1974 = vpop.f32.mrf.mxu0
      %v1975 = vadd.f32 0.0, %v1974
      %v1976 = vpop.f32.mrf.mxu0
      %v1977 = vadd.f32 0.0, %v1976
      %1978 = vmatmul.bf16.gmra.mxu0 %v1259
      %v1979 = vpop.f32.mrf.mxu0
      %v1980 = vadd.f32 0.0, %v1979
      %v1981 = vpop.f32.mrf.mxu0
      %v1982 = vadd.f32 0.0, %v1981
      %1983 = vmatmul.bf16.gmra.mxu0 %v1262
      %v1984 = vpop.f32.mrf.mxu0
      %v1985 = vadd.f32 0.0, %v1984
      %v1986 = vpop.f32.mrf.mxu0
      %v1987 = vadd.f32 0.0, %v1986
      %1988 = vmatmul.bf16.gmra.mxu0 %v1265
      %v1989 = vpop.f32.mrf.mxu0
      %v1990 = vadd.f32 0.0, %v1989
      %v1991 = vpop.f32.mrf.mxu0
      %v1992 = vadd.f32 0.0, %v1991
      %1993 = vmatmul.bf16.gmra.mxu0 %v1268
      %v1994 = vpop.f32.mrf.mxu0
      %v1995 = vadd.f32 0.0, %v1994
      %v1996 = vpop.f32.mrf.mxu0
      %v1997 = vadd.f32 0.0, %v1996
      %1998 = vmatmul.bf16.gmra.mxu0 %v1271
      %v1999 = vpop.f32.mrf.mxu0
      %v2000 = vadd.f32 0.0, %v1999
      %v2001 = vpop.f32.mrf.mxu0
      %v2002 = vadd.f32 0.0, %v2001
      %2003 = vmatmul.bf16.gmra.mxu0 %v1274
      %v2004 = vpop.f32.mrf.mxu0
      %v2005 = vadd.f32 0.0, %v2004
      %v2006 = vpop.f32.mrf.mxu0
      %v2007 = vadd.f32 0.0, %v2006
      %2008 = vmatmul.bf16.gmra.mxu0 %v1277
      %v2009 = vpop.f32.mrf.mxu0
      %v2010 = vadd.f32 0.0, %v2009
      %v2011 = vpop.f32.mrf.mxu0
      %v2012 = vadd.f32 0.0, %v2011
      %2013 = vmatmul.bf16.gmra.mxu0 %v1280
      %v2014 = vpop.f32.mrf.mxu0
      %v2015 = vadd.f32 0.0, %v2014
      %v2016 = vpop.f32.mrf.mxu0
      %v2017 = vadd.f32 0.0, %v2016
      %2018 = vmatmul.bf16.gmra.mxu0 %v1283
      %v2019 = vpop.f32.mrf.mxu0
      %v2020 = vadd.f32 0.0, %v2019
      %v2021 = vpop.f32.mrf.mxu0
      %v2022 = vadd.f32 0.0, %v2021
      %2023 = vmatmul.bf16.gmra.mxu0 %v1286
      %v2024 = vpop.f32.mrf.mxu0
      %v2025 = vadd.f32 0.0, %v2024
      %v2026 = vpop.f32.mrf.mxu0
      %v2027 = vadd.f32 0.0, %v2026
      %2028 = vmatmul.bf16.gmra.mxu0 %v1878
      %v2029 = vpop.f32.mrf.mxu0
      %v2030 = vadd.f32 0.0, %v2029
      %v2031 = vpop.f32.mrf.mxu0
      %v2032 = vadd.f32 0.0, %v2031
      %2033 = vdwg.mxu0
      %v2034 = vadd.f32 %v1842, %v1955
      %v2035 = vadd.f32 %v1843, %v1957
      %v2036 = vadd.f32 %v1844, %v1960
      %v2037 = vadd.f32 %v1845, %v1962
      %v2038 = vadd.f32 %v1846, %v1965
      %v2039 = vadd.f32 %v1847, %v1967
      %v2040 = vadd.f32 %v1848, %v1970
      %v2041 = vadd.f32 %v1849, %v1972
      %v2042 = vadd.f32 %v1850, %v1975
      %v2043 = vadd.f32 %v1851, %v1977
      %v2044 = vadd.f32 %v1852, %v1980
      %v2045 = vadd.f32 %v1853, %v1982
      %v2046 = vadd.f32 %v1854, %v1985
      %v2047 = vadd.f32 %v1855, %v1987
      %v2048 = vadd.f32 %v1856, %v1990
      %v2049 = vadd.f32 %v1857, %v1992
      %v2050 = vadd.f32 %v1858, %v1995
      %v2051 = vadd.f32 %v1859, %v1997
      %v2052 = vadd.f32 %v1860, %v2000
      %v2053 = vadd.f32 %v1861, %v2002
      %v2054 = vadd.f32 %v1862, %v2005
      %v2055 = vadd.f32 %v1863, %v2007
      %v2056 = vadd.f32 %v1864, %v2010
      %v2057 = vadd.f32 %v1865, %v2012
      %v2058 = vadd.f32 %v1866, %v2015
      %v2059 = vadd.f32 %v1867, %v2017
      %v2060 = vadd.f32 %v1868, %v2020
      %v2061 = vadd.f32 %v1869, %v2022
      %v2062 = vadd.f32 %v1870, %v2025
      %v2063 = vadd.f32 %v1871, %v2027
      %v2064 = vadd.f32 %v1872, %v2030
      %v2065 = vadd.f32 %v1873, %v2032
      %s2066 = scalar_lea.vmem %s3, 384
      %v2067 = vld [vmem:[%s2066] sm:$0xf]
      %v2068 = vld [vmem:[%s2066 + $0x4] sm:$0xf]
      %v2069 = vld [vmem:[%s2066 + $0x8] sm:$0xf]
      %v2070 = vld [vmem:[%s2066 + $0xc] sm:$0xf]
      %v2071 = vld [vmem:[%s2066 + $0x10] sm:$0xf]
      %v2072 = vld [vmem:[%s2066 + $0x14] sm:$0xf]
      %v2073 = vld [vmem:[%s2066 + $0x18] sm:$0xf]
      %v2074 = vld [vmem:[%s2066 + $0x1c] sm:$0xf]
      %v2075 = vld [vmem:[%s2066 + $0x20] sm:$0xf]
      %v2076 = vld [vmem:[%s2066 + $0x24] sm:$0xf]
      %v2077 = vld [vmem:[%s2066 + $0x28] sm:$0xf]
      %v2078 = vld [vmem:[%s2066 + $0x2c] sm:$0xf]
      %v2079 = vld [vmem:[%s2066 + $0x30] sm:$0xf]
      %v2080 = vld [vmem:[%s2066 + $0x34] sm:$0xf]
      %v2081 = vld [vmem:[%s2066 + $0x38] sm:$0xf]
      %v2082 = vld [vmem:[%s2066 + $0x3c] sm:$0xf]
      %v2099 = vunpack.c.l.b16 %v2067
      %v2100 = vunpack.c.l.b16 %v2068
      %v2101 = vunpack.c.l.b16 %v2069
      %v2102 = vunpack.c.l.b16 %v2070
      %v2103 = vunpack.c.l.b16 %v2071
      %v2104 = vunpack.c.l.b16 %v2072
      %v2105 = vunpack.c.l.b16 %v2073
      %v2106 = vunpack.c.l.b16 %v2074
      %v2107 = vunpack.c.l.b16 %v2075
      %v2108 = vunpack.c.l.b16 %v2076
      %v2109 = vunpack.c.l.b16 %v2077
      %v2110 = vunpack.c.l.b16 %v2078
      %v2111 = vunpack.c.l.b16 %v2079
      %v2112 = vunpack.c.l.b16 %v2080
      %v2113 = vunpack.c.l.b16 %v2081
      %v2114 = vunpack.c.l.b16 %v2082
      %v2115 = vpack.c.b16 %v2100, %v2099
      %v2116 = vpack.c.b16 %v2102, %v2101
      %v2117 = vpack.c.b16 %v2104, %v2103
      %v2118 = vpack.c.b16 %v2106, %v2105
      %v2119 = vpack.c.b16 %v2108, %v2107
      %v2120 = vpack.c.b16 %v2110, %v2109
      %v2121 = vpack.c.b16 %v2112, %v2111
      %v2122 = vpack.c.b16 %v2114, %v2113
      %2131 = vmatpush.bf16.msra.mxu0 %v2122
      %2132 = vmatpush.bf16.msra.mxu0 %v2121
      %2133 = vmatpush.bf16.msra.mxu0 %v2120
      %2134 = vmatpush.bf16.msra.mxu0 %v2119
      %2135 = vmatpush.bf16.msra.mxu0 %v2118
      %2136 = vmatpush.bf16.msra.mxu0 %v2117
      %2137 = vmatpush.bf16.msra.mxu0 %v2116
      %2138 = vmatpush.bf16.msra.mxu0 %v2115
      %2139 = vmatmul.bf16.gmra.mxu0 %v665
      %v2140 = vpop.f32.mrf.mxu0
      %v2141 = vadd.f32 0.0, %v2140
      %v2142 = vpop.f32.mrf.mxu0
      %v2143 = vadd.f32 0.0, %v2142
      %2144 = vmatmul.bf16.gmra.mxu0 %v666
      %v2145 = vpop.f32.mrf.mxu0
      %v2146 = vadd.f32 0.0, %v2145
      %v2147 = vpop.f32.mrf.mxu0
      %v2148 = vadd.f32 0.0, %v2147
      %2149 = vmatmul.bf16.gmra.mxu0 %v667
      %v2150 = vpop.f32.mrf.mxu0
      %v2151 = vadd.f32 0.0, %v2150
      %v2152 = vpop.f32.mrf.mxu0
      %v2153 = vadd.f32 0.0, %v2152
      %2154 = vmatmul.bf16.gmra.mxu0 %v668
      %v2155 = vpop.f32.mrf.mxu0
      %v2156 = vadd.f32 0.0, %v2155
      %v2157 = vpop.f32.mrf.mxu0
      %v2158 = vadd.f32 0.0, %v2157
      %2159 = vmatmul.bf16.gmra.mxu0 %v669
      %v2160 = vpop.f32.mrf.mxu0
      %v2161 = vadd.f32 0.0, %v2160
      %v2162 = vpop.f32.mrf.mxu0
      %v2163 = vadd.f32 0.0, %v2162
      %2164 = vmatmul.bf16.gmra.mxu0 %v670
      %v2165 = vpop.f32.mrf.mxu0
      %v2166 = vadd.f32 0.0, %v2165
      %v2167 = vpop.f32.mrf.mxu0
      %v2168 = vadd.f32 0.0, %v2167
      %2169 = vmatmul.bf16.gmra.mxu0 %v671
      %v2170 = vpop.f32.mrf.mxu0
      %v2171 = vadd.f32 0.0, %v2170
      %v2172 = vpop.f32.mrf.mxu0
      %v2173 = vadd.f32 0.0, %v2172
      %2174 = vmatmul.bf16.gmra.mxu0 %v672
      %v2175 = vpop.f32.mrf.mxu0
      %v2176 = vadd.f32 0.0, %v2175
      %v2177 = vpop.f32.mrf.mxu0
      %v2178 = vadd.f32 0.0, %v2177
      %2179 = vmatmul.bf16.gmra.mxu0 %v673
      %v2180 = vpop.f32.mrf.mxu0
      %v2181 = vadd.f32 0.0, %v2180
      %v2182 = vpop.f32.mrf.mxu0
      %v2183 = vadd.f32 0.0, %v2182
      %2184 = vmatmul.bf16.gmra.mxu0 %v674
      %v2185 = vpop.f32.mrf.mxu0
      %v2186 = vadd.f32 0.0, %v2185
      %v2187 = vpop.f32.mrf.mxu0
      %v2188 = vadd.f32 0.0, %v2187
      %2189 = vmatmul.bf16.gmra.mxu0 %v675
      %v2190 = vpop.f32.mrf.mxu0
      %v2191 = vadd.f32 0.0, %v2190
      %v2192 = vpop.f32.mrf.mxu0
      %v2193 = vadd.f32 0.0, %v2192
      %2194 = vmatmul.bf16.gmra.mxu0 %v676
      %v2195 = vpop.f32.mrf.mxu0
      %v2196 = vadd.f32 0.0, %v2195
      %v2197 = vpop.f32.mrf.mxu0
      %v2198 = vadd.f32 0.0, %v2197
      %2199 = vmatmul.bf16.gmra.mxu0 %v677
      %v2200 = vpop.f32.mrf.mxu0
      %v2201 = vadd.f32 0.0, %v2200
      %v2202 = vpop.f32.mrf.mxu0
      %v2203 = vadd.f32 0.0, %v2202
      %2204 = vmatmul.bf16.gmra.mxu0 %v678
      %v2205 = vpop.f32.mrf.mxu0
      %v2206 = vadd.f32 0.0, %v2205
      %v2207 = vpop.f32.mrf.mxu0
      %v2208 = vadd.f32 0.0, %v2207
      %2209 = vmatmul.bf16.gmra.mxu0 %v679
      %v2210 = vpop.f32.mrf.mxu0
      %v2211 = vadd.f32 0.0, %v2210
      %v2212 = vpop.f32.mrf.mxu0
      %v2213 = vadd.f32 0.0, %v2212
      %2214 = vmatmul.bf16.gmra.mxu0 0
      %v2215 = vpop.f32.mrf.mxu0
      %v2216 = vadd.f32 0.0, %v2215
      %v2217 = vpop.f32.mrf.mxu0
      %v2218 = vadd.f32 0.0, %v2217
      %2219 = vdwg.mxu0
      %v2220 = vadd.f32 %v2034, %v2141
      %v2221 = vadd.f32 %v2035, %v2143
      %v2222 = vadd.f32 %v2036, %v2146
      %v2223 = vadd.f32 %v2037, %v2148
      %v2224 = vadd.f32 %v2038, %v2151
      %v2225 = vadd.f32 %v2039, %v2153
      %v2226 = vadd.f32 %v2040, %v2156
      %v2227 = vadd.f32 %v2041, %v2158
      %v2228 = vadd.f32 %v2042, %v2161
      %v2229 = vadd.f32 %v2043, %v2163
      %v2230 = vadd.f32 %v2044, %v2166
      %v2231 = vadd.f32 %v2045, %v2168
      %v2232 = vadd.f32 %v2046, %v2171
      %v2233 = vadd.f32 %v2047, %v2173
      %v2234 = vadd.f32 %v2048, %v2176
      %v2235 = vadd.f32 %v2049, %v2178
      %v2236 = vadd.f32 %v2050, %v2181
      %v2237 = vadd.f32 %v2051, %v2183
      %v2238 = vadd.f32 %v2052, %v2186
      %v2239 = vadd.f32 %v2053, %v2188
      %v2240 = vadd.f32 %v2054, %v2191
      %v2241 = vadd.f32 %v2055, %v2193
      %v2242 = vadd.f32 %v2056, %v2196
      %v2243 = vadd.f32 %v2057, %v2198
      %v2244 = vadd.f32 %v2058, %v2201
      %v2245 = vadd.f32 %v2059, %v2203
      %v2246 = vadd.f32 %v2060, %v2206
      %v2247 = vadd.f32 %v2061, %v2208
      %v2248 = vadd.f32 %v2062, %v2211
      %v2249 = vadd.f32 %v2063, %v2213
      %v2250 = vadd.f32 %v2064, %v2216
      %v2251 = vadd.f32 %v2065, %v2218
      %s2252 = scalar_lea.vmem %s3, 448
      %v2253 = vld [vmem:[%s2252] sm:$0xf]
      %v2254 = vld [vmem:[%s2252 + $0x4] sm:$0xf]
      %v2255 = vld [vmem:[%s2252 + $0x8] sm:$0xf]
      %v2256 = vld [vmem:[%s2252 + $0xc] sm:$0xf]
      %v2257 = vld [vmem:[%s2252 + $0x10] sm:$0xf]
      %v2258 = vld [vmem:[%s2252 + $0x14] sm:$0xf]
      %v2259 = vld [vmem:[%s2252 + $0x18] sm:$0xf]
      %v2260 = vld [vmem:[%s2252 + $0x1c] sm:$0xf]
      %v2261 = vld [vmem:[%s2252 + $0x20] sm:$0xf]
      %v2262 = vld [vmem:[%s2252 + $0x24] sm:$0xf]
      %v2263 = vld [vmem:[%s2252 + $0x28] sm:$0xf]
      %v2264 = vld [vmem:[%s2252 + $0x2c] sm:$0xf]
      %v2265 = vld [vmem:[%s2252 + $0x30] sm:$0xf]
      %v2266 = vld [vmem:[%s2252 + $0x34] sm:$0xf]
      %v2267 = vld [vmem:[%s2252 + $0x38] sm:$0xf]
      %v2268 = vld [vmem:[%s2252 + $0x3c] sm:$0xf]
      %v2285 = vunpack.c.l.b16 %v2253
      %v2286 = vunpack.c.l.b16 %v2254
      %v2287 = vunpack.c.l.b16 %v2255
      %v2288 = vunpack.c.l.b16 %v2256
      %v2289 = vunpack.c.l.b16 %v2257
      %v2290 = vunpack.c.l.b16 %v2258
      %v2291 = vunpack.c.l.b16 %v2259
      %v2292 = vunpack.c.l.b16 %v2260
      %v2293 = vunpack.c.l.b16 %v2261
      %v2294 = vunpack.c.l.b16 %v2262
      %v2295 = vunpack.c.l.b16 %v2263
      %v2296 = vunpack.c.l.b16 %v2264
      %v2297 = vunpack.c.l.b16 %v2265
      %v2298 = vunpack.c.l.b16 %v2266
      %v2299 = vunpack.c.l.b16 %v2267
      %v2300 = vunpack.c.l.b16 %v2268
      %v2301 = vpack.c.b16 %v2286, %v2285
      %v2302 = vpack.c.b16 %v2288, %v2287
      %v2303 = vpack.c.b16 %v2290, %v2289
      %v2304 = vpack.c.b16 %v2292, %v2291
      %v2305 = vpack.c.b16 %v2294, %v2293
      %v2306 = vpack.c.b16 %v2296, %v2295
      %v2307 = vpack.c.b16 %v2298, %v2297
      %v2308 = vpack.c.b16 %v2300, %v2299
      %2317 = vmatpush.bf16.msra.mxu0 %v2308
      %2318 = vmatpush.bf16.msra.mxu0 %v2307
      %2319 = vmatpush.bf16.msra.mxu0 %v2306
      %2320 = vmatpush.bf16.msra.mxu0 %v2305
      %2321 = vmatpush.bf16.msra.mxu0 %v2304
      %2322 = vmatpush.bf16.msra.mxu0 %v2303
      %2323 = vmatpush.bf16.msra.mxu0 %v2302
      %2324 = vmatpush.bf16.msra.mxu0 %v2301
      %2325 = vmatmul.bf16.gmra.mxu0 %v744
      %v2326 = vpop.f32.mrf.mxu0
      %v2327 = vadd.f32 0.0, %v2326
      %v2328 = vpop.f32.mrf.mxu0
      %v2329 = vadd.f32 0.0, %v2328
      %2330 = vmatmul.bf16.gmra.mxu0 %v756
      %v2331 = vpop.f32.mrf.mxu0
      %v2332 = vadd.f32 0.0, %v2331
      %v2333 = vpop.f32.mrf.mxu0
      %v2334 = vadd.f32 0.0, %v2333
      %2335 = vmatmul.bf16.gmra.mxu0 %v768
      %v2336 = vpop.f32.mrf.mxu0
      %v2337 = vadd.f32 0.0, %v2336
      %v2338 = vpop.f32.mrf.mxu0
      %v2339 = vadd.f32 0.0, %v2338
      %2340 = vmatmul.bf16.gmra.mxu0 %v780
      %v2341 = vpop.f32.mrf.mxu0
      %v2342 = vadd.f32 0.0, %v2341
      %v2343 = vpop.f32.mrf.mxu0
      %v2344 = vadd.f32 0.0, %v2343
      %2345 = vmatmul.bf16.gmra.mxu0 %v792
      %v2346 = vpop.f32.mrf.mxu0
      %v2347 = vadd.f32 0.0, %v2346
      %v2348 = vpop.f32.mrf.mxu0
      %v2349 = vadd.f32 0.0, %v2348
      %2350 = vmatmul.bf16.gmra.mxu0 %v804
      %v2351 = vpop.f32.mrf.mxu0
      %v2352 = vadd.f32 0.0, %v2351
      %v2353 = vpop.f32.mrf.mxu0
      %v2354 = vadd.f32 0.0, %v2353
      %2355 = vmatmul.bf16.gmra.mxu0 %v816
      %v2356 = vpop.f32.mrf.mxu0
      %v2357 = vadd.f32 0.0, %v2356
      %v2358 = vpop.f32.mrf.mxu0
      %v2359 = vadd.f32 0.0, %v2358
      %2360 = vmatmul.bf16.gmra.mxu0 %v828
      %v2361 = vpop.f32.mrf.mxu0
      %v2362 = vadd.f32 0.0, %v2361
      %v2363 = vpop.f32.mrf.mxu0
      %v2364 = vadd.f32 0.0, %v2363
      %2365 = vmatmul.bf16.gmra.mxu0 %v840
      %v2366 = vpop.f32.mrf.mxu0
      %v2367 = vadd.f32 0.0, %v2366
      %v2368 = vpop.f32.mrf.mxu0
      %v2369 = vadd.f32 0.0, %v2368
      %2370 = vmatmul.bf16.gmra.mxu0 %v852
      %v2371 = vpop.f32.mrf.mxu0
      %v2372 = vadd.f32 0.0, %v2371
      %v2373 = vpop.f32.mrf.mxu0
      %v2374 = vadd.f32 0.0, %v2373
      %2375 = vmatmul.bf16.gmra.mxu0 %v864
      %v2376 = vpop.f32.mrf.mxu0
      %v2377 = vadd.f32 0.0, %v2376
      %v2378 = vpop.f32.mrf.mxu0
      %v2379 = vadd.f32 0.0, %v2378
      %2380 = vmatmul.bf16.gmra.mxu0 %v876
      %v2381 = vpop.f32.mrf.mxu0
      %v2382 = vadd.f32 0.0, %v2381
      %v2383 = vpop.f32.mrf.mxu0
      %v2384 = vadd.f32 0.0, %v2383
      %2385 = vmatmul.bf16.gmra.mxu0 %v888
      %v2386 = vpop.f32.mrf.mxu0
      %v2387 = vadd.f32 0.0, %v2386
      %v2388 = vpop.f32.mrf.mxu0
      %v2389 = vadd.f32 0.0, %v2388
      %2390 = vmatmul.bf16.gmra.mxu0 %v900
      %v2391 = vpop.f32.mrf.mxu0
      %v2392 = vadd.f32 0.0, %v2391
      %v2393 = vpop.f32.mrf.mxu0
      %v2394 = vadd.f32 0.0, %v2393
      %2395 = vmatmul.bf16.gmra.mxu0 %v1686
      %v2396 = vpop.f32.mrf.mxu0
      %v2397 = vadd.f32 0.0, %v2396
      %v2398 = vpop.f32.mrf.mxu0
      %v2399 = vadd.f32 0.0, %v2398
      %2400 = vmatmul.bf16.gmra.mxu0 %v720
      %v2401 = vpop.f32.mrf.mxu0
      %v2402 = vadd.f32 0.0, %v2401
      %v2403 = vpop.f32.mrf.mxu0
      %v2404 = vadd.f32 0.0, %v2403
      %2405 = vdwg.mxu0
      %v2406 = vadd.f32 %v2220, %v2327
      %v2407 = vadd.f32 %v2221, %v2329
      %v2408 = vadd.f32 %v2222, %v2332
      %v2409 = vadd.f32 %v2223, %v2334
      %v2410 = vadd.f32 %v2224, %v2337
      %v2411 = vadd.f32 %v2225, %v2339
      %v2412 = vadd.f32 %v2226, %v2342
      %v2413 = vadd.f32 %v2227, %v2344
      %v2414 = vadd.f32 %v2228, %v2347
      %v2415 = vadd.f32 %v2229, %v2349
      %v2416 = vadd.f32 %v2230, %v2352
      %v2417 = vadd.f32 %v2231, %v2354
      %v2418 = vadd.f32 %v2232, %v2357
      %v2419 = vadd.f32 %v2233, %v2359
      %v2420 = vadd.f32 %v2234, %v2362
      %v2421 = vadd.f32 %v2235, %v2364
      %v2422 = vadd.f32 %v2236, %v2367
      %v2423 = vadd.f32 %v2237, %v2369
      %v2424 = vadd.f32 %v2238, %v2372
      %v2425 = vadd.f32 %v2239, %v2374
      %v2426 = vadd.f32 %v2240, %v2377
      %v2427 = vadd.f32 %v2241, %v2379
      %v2428 = vadd.f32 %v2242, %v2382
      %v2429 = vadd.f32 %v2243, %v2384
      %v2430 = vadd.f32 %v2244, %v2387
      %v2431 = vadd.f32 %v2245, %v2389
      %v2432 = vadd.f32 %v2246, %v2392
      %v2433 = vadd.f32 %v2247, %v2394
      %v2434 = vadd.f32 %v2248, %v2397
      %v2435 = vadd.f32 %v2249, %v2399
      %v2436 = vadd.f32 %v2250, %v2402
      %v2437 = vadd.f32 %v2251, %v2404
      %s2438 = scalar_lea.vmem %s3, 512
      %v2439 = vld [vmem:[%s2438] sm:$0xf]
      %v2440 = vld [vmem:[%s2438 + $0x4] sm:$0xf]
      %v2441 = vld [vmem:[%s2438 + $0x8] sm:$0xf]
      %v2442 = vld [vmem:[%s2438 + $0xc] sm:$0xf]
      %v2443 = vld [vmem:[%s2438 + $0x10] sm:$0xf]
      %v2444 = vld [vmem:[%s2438 + $0x14] sm:$0xf]
      %v2445 = vld [vmem:[%s2438 + $0x18] sm:$0xf]
      %v2446 = vld [vmem:[%s2438 + $0x1c] sm:$0xf]
      %v2447 = vld [vmem:[%s2438 + $0x20] sm:$0xf]
      %v2448 = vld [vmem:[%s2438 + $0x24] sm:$0xf]
      %v2449 = vld [vmem:[%s2438 + $0x28] sm:$0xf]
      %v2450 = vld [vmem:[%s2438 + $0x2c] sm:$0xf]
      %v2451 = vld [vmem:[%s2438 + $0x30] sm:$0xf]
      %v2452 = vld [vmem:[%s2438 + $0x34] sm:$0xf]
      %v2453 = vld [vmem:[%s2438 + $0x38] sm:$0xf]
      %v2454 = vld [vmem:[%s2438 + $0x3c] sm:$0xf]
      %v2471 = vunpack.c.l.b16 %v2439
      %v2472 = vunpack.c.l.b16 %v2440
      %v2473 = vunpack.c.l.b16 %v2441
      %v2474 = vunpack.c.l.b16 %v2442
      %v2475 = vunpack.c.l.b16 %v2443
      %v2476 = vunpack.c.l.b16 %v2444
      %v2477 = vunpack.c.l.b16 %v2445
      %v2478 = vunpack.c.l.b16 %v2446
      %v2479 = vunpack.c.l.b16 %v2447
      %v2480 = vunpack.c.l.b16 %v2448
      %v2481 = vunpack.c.l.b16 %v2449
      %v2482 = vunpack.c.l.b16 %v2450
      %v2483 = vunpack.c.l.b16 %v2451
      %v2484 = vunpack.c.l.b16 %v2452
      %v2485 = vunpack.c.l.b16 %v2453
      %v2486 = vunpack.c.l.b16 %v2454
      %v2487 = vpack.c.b16 %v2472, %v2471
      %v2488 = vpack.c.b16 %v2474, %v2473
      %v2489 = vpack.c.b16 %v2476, %v2475
      %v2490 = vpack.c.b16 %v2478, %v2477
      %v2491 = vpack.c.b16 %v2480, %v2479
      %v2492 = vpack.c.b16 %v2482, %v2481
      %v2493 = vpack.c.b16 %v2484, %v2483
      %v2494 = vpack.c.b16 %v2486, %v2485
      %2503 = vmatpush.bf16.msra.mxu0 %v2494
      %2504 = vmatpush.bf16.msra.mxu0 %v2493
      %2505 = vmatpush.bf16.msra.mxu0 %v2492
      %2506 = vmatpush.bf16.msra.mxu0 %v2491
      %2507 = vmatpush.bf16.msra.mxu0 %v2490
      %2508 = vmatpush.bf16.msra.mxu0 %v2489
      %2509 = vmatpush.bf16.msra.mxu0 %v2488
      %2510 = vmatpush.bf16.msra.mxu0 %v2487
      %2511 = vmatmul.bf16.gmra.mxu0 %v1247
      %v2512 = vpop.f32.mrf.mxu0
      %v2513 = vadd.f32 0.0, %v2512
      %v2514 = vpop.f32.mrf.mxu0
      %v2515 = vadd.f32 0.0, %v2514
      %2516 = vmatmul.bf16.gmra.mxu0 %v1250
      %v2517 = vpop.f32.mrf.mxu0
      %v2518 = vadd.f32 0.0, %v2517
      %v2519 = vpop.f32.mrf.mxu0
      %v2520 = vadd.f32 0.0, %v2519
      %2521 = vmatmul.bf16.gmra.mxu0 %v1253
      %v2522 = vpop.f32.mrf.mxu0
      %v2523 = vadd.f32 0.0, %v2522
      %v2524 = vpop.f32.mrf.mxu0
      %v2525 = vadd.f32 0.0, %v2524
      %2526 = vmatmul.bf16.gmra.mxu0 %v1256
      %v2527 = vpop.f32.mrf.mxu0
      %v2528 = vadd.f32 0.0, %v2527
      %v2529 = vpop.f32.mrf.mxu0
      %v2530 = vadd.f32 0.0, %v2529
      %2531 = vmatmul.bf16.gmra.mxu0 %v1259
      %v2532 = vpop.f32.mrf.mxu0
      %v2533 = vadd.f32 0.0, %v2532
      %v2534 = vpop.f32.mrf.mxu0
      %v2535 = vadd.f32 0.0, %v2534
      %2536 = vmatmul.bf16.gmra.mxu0 %v1262
      %v2537 = vpop.f32.mrf.mxu0
      %v2538 = vadd.f32 0.0, %v2537
      %v2539 = vpop.f32.mrf.mxu0
      %v2540 = vadd.f32 0.0, %v2539
      %2541 = vmatmul.bf16.gmra.mxu0 %v1265
      %v2542 = vpop.f32.mrf.mxu0
      %v2543 = vadd.f32 0.0, %v2542
      %v2544 = vpop.f32.mrf.mxu0
      %v2545 = vadd.f32 0.0, %v2544
      %2546 = vmatmul.bf16.gmra.mxu0 %v1268
      %v2547 = vpop.f32.mrf.mxu0
      %v2548 = vadd.f32 0.0, %v2547
      %v2549 = vpop.f32.mrf.mxu0
      %v2550 = vadd.f32 0.0, %v2549
      %2551 = vmatmul.bf16.gmra.mxu0 %v1271
      %v2552 = vpop.f32.mrf.mxu0
      %v2553 = vadd.f32 0.0, %v2552
      %v2554 = vpop.f32.mrf.mxu0
      %v2555 = vadd.f32 0.0, %v2554
      %2556 = vmatmul.bf16.gmra.mxu0 %v1274
      %v2557 = vpop.f32.mrf.mxu0
      %v2558 = vadd.f32 0.0, %v2557
      %v2559 = vpop.f32.mrf.mxu0
      %v2560 = vadd.f32 0.0, %v2559
      %2561 = vmatmul.bf16.gmra.mxu0 %v1277
      %v2562 = vpop.f32.mrf.mxu0
      %v2563 = vadd.f32 0.0, %v2562
      %v2564 = vpop.f32.mrf.mxu0
      %v2565 = vadd.f32 0.0, %v2564
      %2566 = vmatmul.bf16.gmra.mxu0 %v1280
      %v2567 = vpop.f32.mrf.mxu0
      %v2568 = vadd.f32 0.0, %v2567
      %v2569 = vpop.f32.mrf.mxu0
      %v2570 = vadd.f32 0.0, %v2569
      %2571 = vmatmul.bf16.gmra.mxu0 %v1283
      %v2572 = vpop.f32.mrf.mxu0
      %v2573 = vadd.f32 0.0, %v2572
      %v2574 = vpop.f32.mrf.mxu0
      %v2575 = vadd.f32 0.0, %v2574
      %2576 = vmatmul.bf16.gmra.mxu0 %v1286
      %v2577 = vpop.f32.mrf.mxu0
      %v2578 = vadd.f32 0.0, %v2577
      %v2579 = vpop.f32.mrf.mxu0
      %v2580 = vadd.f32 0.0, %v2579
      %2581 = vmatmul.bf16.gmra.mxu0 %v1878
      %v2582 = vpop.f32.mrf.mxu0
      %v2583 = vadd.f32 0.0, %v2582
      %v2584 = vpop.f32.mrf.mxu0
      %v2585 = vadd.f32 0.0, %v2584
      %2586 = vmatmul.bf16.gmra.mxu0 %v1241
      %v2587 = vpop.f32.mrf.mxu0
      %v2588 = vadd.f32 0.0, %v2587
      %v2589 = vpop.f32.mrf.mxu0
      %v2590 = vadd.f32 0.0, %v2589
      %2591 = vdwg.mxu0
      %v2592 = vadd.f32 %v2406, %v2513
      %v2593 = vadd.f32 %v2407, %v2515
      %v2594 = vadd.f32 %v2408, %v2518
      %v2595 = vadd.f32 %v2409, %v2520
      %v2596 = vadd.f32 %v2410, %v2523
      %v2597 = vadd.f32 %v2411, %v2525
      %v2598 = vadd.f32 %v2412, %v2528
      %v2599 = vadd.f32 %v2413, %v2530
      %v2600 = vadd.f32 %v2414, %v2533
      %v2601 = vadd.f32 %v2415, %v2535
      %v2602 = vadd.f32 %v2416, %v2538
      %v2603 = vadd.f32 %v2417, %v2540
      %v2604 = vadd.f32 %v2418, %v2543
      %v2605 = vadd.f32 %v2419, %v2545
      %v2606 = vadd.f32 %v2420, %v2548
      %v2607 = vadd.f32 %v2421, %v2550
      %v2608 = vadd.f32 %v2422, %v2553
      %v2609 = vadd.f32 %v2423, %v2555
      %v2610 = vadd.f32 %v2424, %v2558
      %v2611 = vadd.f32 %v2425, %v2560
      %v2612 = vadd.f32 %v2426, %v2563
      %v2613 = vadd.f32 %v2427, %v2565
      %v2614 = vadd.f32 %v2428, %v2568
      %v2615 = vadd.f32 %v2429, %v2570
      %v2616 = vadd.f32 %v2430, %v2573
      %v2617 = vadd.f32 %v2431, %v2575
      %v2618 = vadd.f32 %v2432, %v2578
      %v2619 = vadd.f32 %v2433, %v2580
      %v2620 = vadd.f32 %v2434, %v2583
      %v2621 = vadd.f32 %v2435, %v2585
      %v2622 = vadd.f32 %v2436, %v2588
      %v2623 = vadd.f32 %v2437, %v2590
      %v2624 = vpack.c.bf16 %v2592, %v2592
      %v2625 = vpack.c.bf16 %v2593, %v2593
      %v2626 = vpack.c.bf16 %v2594, %v2594
      %v2627 = vpack.c.bf16 %v2595, %v2595
      %v2628 = vpack.c.bf16 %v2596, %v2596
      %v2629 = vpack.c.bf16 %v2597, %v2597
      %v2630 = vpack.c.bf16 %v2598, %v2598
      %v2631 = vpack.c.bf16 %v2599, %v2599
      %v2632 = vpack.c.bf16 %v2600, %v2600
      %v2633 = vpack.c.bf16 %v2601, %v2601
      %v2634 = vpack.c.bf16 %v2602, %v2602
      %v2635 = vpack.c.bf16 %v2603, %v2603
      %v2636 = vpack.c.bf16 %v2604, %v2604
      %v2637 = vpack.c.bf16 %v2605, %v2605
      %v2638 = vpack.c.bf16 %v2606, %v2606
      %v2639 = vpack.c.bf16 %v2607, %v2607
      %v2640 = vpack.c.bf16 %v2608, %v2608
      %v2641 = vpack.c.bf16 %v2609, %v2609
      %v2642 = vpack.c.bf16 %v2610, %v2610
      %v2643 = vpack.c.bf16 %v2611, %v2611
      %v2644 = vpack.c.bf16 %v2612, %v2612
      %v2645 = vpack.c.bf16 %v2613, %v2613
      %v2646 = vpack.c.bf16 %v2614, %v2614
      %v2647 = vpack.c.bf16 %v2615, %v2615
      %v2648 = vpack.c.bf16 %v2616, %v2616
      %v2649 = vpack.c.bf16 %v2617, %v2617
      %v2650 = vpack.c.bf16 %v2618, %v2618
      %v2651 = vpack.c.bf16 %v2619, %v2619
      %v2652 = vpack.c.bf16 %v2620, %v2620
      %v2653 = vpack.c.bf16 %v2621, %v2621
      %v2654 = vpack.c.bf16 %v2622, %v2622
      %v2655 = vpack.c.bf16 %v2623, %v2623
      %2656 = vst [vmem:[%s231] sm:$0xf] %v2624
      %2657 = vst [vmem:[%s231 + $0x4] sm:$0xf] %v2625
      %2658 = vst [vmem:[%s231 + $0x8] sm:$0xf] %v2626
      %2659 = vst [vmem:[%s231 + $0xc] sm:$0xf] %v2627
      %2660 = vst [vmem:[%s231 + $0x10] sm:$0xf] %v2628
      %2661 = vst [vmem:[%s231 + $0x14] sm:$0xf] %v2629
      %2662 = vst [vmem:[%s231 + $0x18] sm:$0xf] %v2630
      %2663 = vst [vmem:[%s231 + $0x1c] sm:$0xf] %v2631
      %2664 = vst [vmem:[%s231 + $0x20] sm:$0xf] %v2632
      %2665 = vst [vmem:[%s231 + $0x24] sm:$0xf] %v2633
      %2666 = vst [vmem:[%s231 + $0x28] sm:$0xf] %v2634
      %2667 = vst [vmem:[%s231 + $0x2c] sm:$0xf] %v2635
      %2668 = vst [vmem:[%s231 + $0x30] sm:$0xf] %v2636
      %2669 = vst [vmem:[%s231 + $0x34] sm:$0xf] %v2637
      %2670 = vst [vmem:[%s231 + $0x38] sm:$0xf] %v2638
      %2671 = vst [vmem:[%s231 + $0x3c] sm:$0xf] %v2639
      %2672 = vst [vmem:[%s231 + $0x40] sm:$0xf] %v2640
      %2673 = vst [vmem:[%s231 + $0x44] sm:$0xf] %v2641
      %2674 = vst [vmem:[%s231 + $0x48] sm:$0xf] %v2642
      %2675 = vst [vmem:[%s231 + $0x4c] sm:$0xf] %v2643
      %2676 = vst [vmem:[%s231 + $0x50] sm:$0xf] %v2644
      %2677 = vst [vmem:[%s231 + $0x54] sm:$0xf] %v2645
      %2678 = vst [vmem:[%s231 + $0x58] sm:$0xf] %v2646
      %2679 = vst [vmem:[%s231 + $0x5c] sm:$0xf] %v2647
      %2680 = vst [vmem:[%s231 + $0x60] sm:$0xf] %v2648
      %2681 = vst [vmem:[%s231 + $0x64] sm:$0xf] %v2649
      %2682 = vst [vmem:[%s231 + $0x68] sm:$0xf] %v2650
      %2683 = vst [vmem:[%s231 + $0x6c] sm:$0xf] %v2651
      %2684 = vst [vmem:[%s231 + $0x70] sm:$0xf] %v2652
      %2685 = vst [vmem:[%s231 + $0x74] sm:$0xf] %v2653
      %2686 = vst [vmem:[%s231 + $0x78] sm:$0xf] %v2654
      %2687 = vst [vmem:[%s231 + $0x7c] sm:$0xf] %v2655
      %v2688 = vadd.f32 %v2592, %v2593
      %v2689 = vadd.f32 %v2688, %v2594
      %v2690 = vadd.f32 %v2689, %v2595
      %v2691 = vadd.f32 %v2690, %v2596
      %v2692 = vadd.f32 %v2691, %v2597
      %v2693 = vadd.f32 %v2692, %v2598
      %v2694 = vadd.f32 %v2693, %v2599
      %v2695 = vadd.f32 %v2694, %v2600
      %v2696 = vadd.f32 %v2695, %v2601
      %v2697 = vadd.f32 %v2696, %v2602
      %v2698 = vadd.f32 %v2697, %v2603
      %v2699 = vadd.f32 %v2698, %v2604
      %v2700 = vadd.f32 %v2699, %v2605
      %v2701 = vadd.f32 %v2700, %v2606
      %v2702 = vadd.f32 %v2701, %v2607
      %v2703 = vadd.f32 %v2702, %v2608
      %v2704 = vadd.f32 %v2703, %v2609
      %v2705 = vadd.f32 %v2704, %v2610
      %v2706 = vadd.f32 %v2705, %v2611
      %v2707 = vadd.f32 %v2706, %v2612
      %v2708 = vadd.f32 %v2707, %v2613
      %v2709 = vadd.f32 %v2708, %v2614
      %v2710 = vadd.f32 %v2709, %v2615
      %v2711 = vadd.f32 %v2710, %v2616
      %v2712 = vadd.f32 %v2711, %v2617
      %v2713 = vadd.f32 %v2712, %v2618
      %v2714 = vadd.f32 %v2713, %v2619
      %v2715 = vadd.f32 %v2714, %v2620
      %v2716 = vadd.f32 %v2715, %v2621
      %v2717 = vadd.f32 %v2716, %v2622
      %v2718 = vadd.f32 %v2717, %v2623
      %v2719 = vrot.slane %v2718, 4
      %v2720 = vadd.f32 %v2718, %v2719
      %v2721 = vrot.slane %v2720, 2
      %v2722 = vadd.f32 %v2720, %v2721
      %v2723 = vrot.slane %v2722, 1
      %v2724 = vadd.f32 %v2722, %v2723
      %v2725 = vmul.f32 %v2592, %v2592
      %v2726 = vmul.f32 %v2593, %v2593
      %v2727 = vmul.f32 %v2594, %v2594
      %v2728 = vmul.f32 %v2595, %v2595
      %v2729 = vmul.f32 %v2596, %v2596
      %v2730 = vmul.f32 %v2597, %v2597
      %v2731 = vmul.f32 %v2598, %v2598
      %v2732 = vmul.f32 %v2599, %v2599
      %v2733 = vmul.f32 %v2600, %v2600
      %v2734 = vmul.f32 %v2601, %v2601
      %v2735 = vmul.f32 %v2602, %v2602
      %v2736 = vmul.f32 %v2603, %v2603
      %v2737 = vmul.f32 %v2604, %v2604
      %v2738 = vmul.f32 %v2605, %v2605
      %v2739 = vmul.f32 %v2606, %v2606
      %v2740 = vmul.f32 %v2607, %v2607
      %v2741 = vmul.f32 %v2608, %v2608
      %v2742 = vmul.f32 %v2609, %v2609
      %v2743 = vmul.f32 %v2610, %v2610
      %v2744 = vmul.f32 %v2611, %v2611
      %v2745 = vmul.f32 %v2612, %v2612
      %v2746 = vmul.f32 %v2613, %v2613
      %v2747 = vmul.f32 %v2614, %v2614
      %v2748 = vmul.f32 %v2615, %v2615
      %v2749 = vmul.f32 %v2616, %v2616
      %v2750 = vmul.f32 %v2617, %v2617
      %v2751 = vmul.f32 %v2618, %v2618
      %v2752 = vmul.f32 %v2619, %v2619
      %v2753 = vmul.f32 %v2620, %v2620
      %v2754 = vmul.f32 %v2621, %v2621
      %v2755 = vmul.f32 %v2622, %v2622
      %v2756 = vmul.f32 %v2623, %v2623
      %v2757 = vadd.f32 %v2725, %v2726
      %v2758 = vadd.f32 %v2757, %v2727
      %v2759 = vadd.f32 %v2758, %v2728
      %v2760 = vadd.f32 %v2759, %v2729
      %v2761 = vadd.f32 %v2760, %v2730
      %v2762 = vadd.f32 %v2761, %v2731
      %v2763 = vadd.f32 %v2762, %v2732
      %v2764 = vadd.f32 %v2763, %v2733
      %v2765 = vadd.f32 %v2764, %v2734
      %v2766 = vadd.f32 %v2765, %v2735
      %v2767 = vadd.f32 %v2766, %v2736
      %v2768 = vadd.f32 %v2767, %v2737
      %v2769 = vadd.f32 %v2768, %v2738
      %v2770 = vadd.f32 %v2769, %v2739
      %v2771 = vadd.f32 %v2770, %v2740
      %v2772 = vadd.f32 %v2771, %v2741
      %v2773 = vadd.f32 %v2772, %v2742
      %v2774 = vadd.f32 %v2773, %v2743
      %v2775 = vadd.f32 %v2774, %v2744
      %v2776 = vadd.f32 %v2775, %v2745
      %v2777 = vadd.f32 %v2776, %v2746
      %v2778 = vadd.f32 %v2777, %v2747
      %v2779 = vadd.f32 %v2778, %v2748
      %v2780 = vadd.f32 %v2779, %v2749
      %v2781 = vadd.f32 %v2780, %v2750
      %v2782 = vadd.f32 %v2781, %v2751
      %v2783 = vadd.f32 %v2782, %v2752
      %v2784 = vadd.f32 %v2783, %v2753
      %v2785 = vadd.f32 %v2784, %v2754
      %v2786 = vadd.f32 %v2785, %v2755
      %v2787 = vadd.f32 %v2786, %v2756
      %v2788 = vrot.slane %v2787, 4
      %v2789 = vadd.f32 %v2787, %v2788
      %v2790 = vrot.slane %v2789, 2
      %v2791 = vadd.f32 %v2789, %v2790
      %v2792 = vrot.slane %v2791, 1
      %v2793 = vadd.f32 %v2791, %v2792
      %vm2794 = vcmask 1040384
      %v2795 = vsel %vm2794, %v2724, %v2793
      %vm2796 = vcmask 1041408
      %v2797 = vsel %vm2796, %v2795, 0.0
      %2798 = vst [vmem:[%s235] sm:$0xff] %v2797
      %p2799 = scmp.lt.s32.totalorder %s17, 1
      %s2800 = scalar_select %p2799, %s17, 1
      %s2801 = smul.addr %s2800, 32
      %s2802 = smul.addr %s2801, 4
      %s2803 = scalar_lea.vmem %s4, %s2802
      %p2804 = scmp.lt.s32.totalorder %s17, 1
      %s2805 = scalar_select %p2804, %s17, 1
      %s2806 = smul.addr %s2805, 8
      %s2807 = scalar_lea.vmem %s5, %s2806
      // Predicated region
      $region37: #{bottleneck_forward.5} parent=35 // pred_check
        %p2808 = pneg %p124
      $region38: #{bottleneck_forward.5} parent=35 // pred_check_branch
        %2810 = sbr.rel (%p2808) target = $region40
      $region39: #{bottleneck_forward.5} parent=35 // pred_region
        _
      $region40: #{bottleneck_forward.5} parent=35 // pred_fallthru
        _
      // Predicated region
      $region41: #{bottleneck_forward.5} parent=35 // pred_check
        %p2811 = pneg %p150
      $region42: #{bottleneck_forward.5} parent=35 // pred_check_branch
        %2813 = sbr.rel (%p2811) target = $region44
      $region43: #{bottleneck_forward.5} parent=35 // pred_region
        _
      $region44: #{bottleneck_forward.5} parent=35 // pred_fallthru
        _
    $region36: #{bottleneck_forward.5} parent=5 // pred_fallthru
      _
    %p2814 = scmp.le.s32.totalorder 2, %s12
    // Predicated region
    $region45: #{bottleneck_forward.5} parent=5 // pred_check
      %p2815 = pneg %p2814
    $region46: #{bottleneck_forward.5} parent=5 // pred_check_branch
      %2817 = sbr.rel (%p2815) target = $region48
    $region47: #{bottleneck_forward.5} parent=5 // pred_region
      %s2818 = ssub.s32 %s12, 2
      // Predicated region
      $region49: #{bottleneck_forward.5} parent=47 // pred_check
        %p2819 = pneg %p130
      $region50: #{bottleneck_forward.5} parent=47 // pred_check_branch
        %2821 = sbr.rel (%p2819) target = $region52
      $region51: #{bottleneck_forward.5} parent=47 // pred_region
        %p2822 = scmp.lt.s32.totalorder %s18, 1
        %s2823 = scalar_select %p2822, %s18, 1
        %s2824 = smul.addr %s2823, 32
        %s2825 = smul.addr %s2824, 4
        %s2826 = scalar_lea.vmem %s4, %s2825
      $region52: #{bottleneck_forward.5} parent=47 // pred_fallthru
        _
      // Predicated region
      $region53: #{bottleneck_forward.5} parent=47 // pred_check
        %p2827 = pneg %p156
      $region54: #{bottleneck_forward.5} parent=47 // pred_check_branch
        %2829 = sbr.rel (%p2827) target = $region56
      $region55: #{bottleneck_forward.5} parent=47 // pred_region
        %p2830 = scmp.lt.s32.totalorder %s18, 1
        %s2831 = scalar_select %p2830, %s18, 1
        %s2832 = smul.addr %s2831, 8
        %s2833 = scalar_lea.vmem %s5, %s2832
      $region56: #{bottleneck_forward.5} parent=47 // pred_fallthru
        _
    $region48: #{bottleneck_forward.5} parent=5 // pred_fallthru
      _
  $region6: #{bottleneck_forward.5} parent=0 // loop_footer
    %s16 = sadd.s32 1, %s12
  $region7: #{bottleneck_forward.5} parent=0 // loop_footer_branch
    %11 = sbr.rel target = $region3
  $region8: #{bottleneck_forward.5} parent=0 // loop_exit
    _

</llo_original>
